<compile_context>
chip_gen: v7x
topology: tpu7x:2x2x1
jax: 0.10.0
libtpu: 0.0.40
codegen_flags: <defaults>
</compile_context>

<pallas_src>
import jax
import jax.numpy as jnp
import numpy as np
from jax.experimental import pallas as pl
from jax.experimental.pallas import tpu as pltpu  # noqa: F401  (no pltpu-specific ops needed)

# ---- model hyper-parameters (small, consistent with the module ctor) --------
LAYERS = 2
RNN_TYPE = "LSTM"
NUM_STEPS = 8          # T
HIDDEN = 32            # H
EMBED = 32             # E
VOCAB = 64             # V
BATCH = 8              # B
DROPOUT_P = 0.1        # unused at inference (identity)


# ------------------------------ fused LM kernel -------------------------------
def make_lm_kernel(layers, T, B, H, V, V_pad):
    """Build the fused kernel for a fixed layer count / static shapes."""

    def kernel(*refs):
        # ---- unpack refs ------------------------------------------------------
        ids_ref, ep_ref, h0_ref, c0_ref, b0_ref, whh0_ref = refs[:6]
        lay_refs = refs[6:6 + 3 * (layers - 1)]                 # (wih, whh, b) per layer>0
        fcw_ref, fcb_ref = refs[6 + 3 * (layers - 1):8 + 3 * (layers - 1)]
        logits_ref, hT_ref, cT_ref = refs[8 + 3 * (layers - 1):]

        # ---- embedding gather fused with layer-0 input projection --------------
        # ep_ref = embedding @ W_ih0 (g-columns pre-scaled), so one MXU pass gives
        # xp0 = emb[ids] @ W_ih0 + b0 for all T*B rows, lane-dense (4H = 128 wide).
        # NOTE: ids assumed in [0, V); out-of-range ids yield a zero row (one-hot gather).
        ids = ids_ref[...]                                           # (T*B, 1) int32
        col = jax.lax.broadcasted_iota(jnp.int32, (T * B, V), 1)    # (T*B, V)
        onehot = (col == ids).astype(jnp.float32)
        xp0 = (jnp.dot(onehot, ep_ref[...],
                       preferred_element_type=jnp.float32)
               + b0_ref[...])                                        # (T*B, 4H)
        # TODO(synk): dropout on the embedding (training mode) skipped; identity here.

        # ---- hoist weight / bias loads out of the unrolled recurrence ----------
        whh = [whh0_ref[...]]
        wih = [None]
        bias = [None]                      # layer-0 bias already folded into xp0
        for l in range(1, layers):
            wih_ref, whh_ref, b_ref = lay_refs[3 * (l - 1):3 * (l - 1) + 3]
            wih.append(wih_ref[...])
            whh.append(whh_ref[...])
            bias.append(jnp.broadcast_to(b_ref[...], (B, 4 * H)))   # hoisted broadcast

        h = [h0_ref[l] for l in range(layers)]                       # each (B, H)
        c = [c0_ref[l] for l in range(layers)]

        def lstm_cell(gates, c_prev):
            # g-gate preactivation columns were pre-scaled by 2 at param-prep time,
            # so tanh(g) == 2*sigmoid(gates_g) - 1: a single EUP pass over the vreg.
            sg = jax.nn.sigmoid(gates)                               # (B, 4H) one vreg
            i = sg[:, 0 * H:1 * H]
            f = sg[:, 1 * H:2 * H]
            g = 2.0 * sg[:, 2 * H:3 * H] - 1.0
            o = sg[:, 3 * H:4 * H]
            c_new = f * c_prev + i * g
            h_new = o * jnp.tanh(c_new)
            return h_new, c_new

        # ---- statically unrolled recurrence ------------------------------------
        # Layer l>0's input projection is per-step, so its step-t work depends only on
        # layer l-1's h_t: the layer chains are independent dataflow and can overlap.
        outs = []
        for t in range(T):
            gates0 = xp0[t * B:(t + 1) * B, :] + jnp.dot(
                h[0], whh[0], preferred_element_type=jnp.float32)    # (B, 4H)
            h[0], c[0] = lstm_cell(gates0, c[0])
            x_t = h[0]
            for l in range(1, layers):
                gates_l = (jnp.dot(x_t, wih[l], preferred_element_type=jnp.float32)
                           + jnp.dot(h[l], whh[l], preferred_element_type=jnp.float32)
                           + bias[l])
                h[l], c[l] = lstm_cell(gates_l, c[l])
                x_t = h[l]
            outs.append(x_t)
            # TODO(synk): inter-layer dropout (training mode) skipped; identity here.

        # ---- final FC over all T*B rows; lane-dense (V zero-padded to V_pad) ----
        top = jnp.concatenate(outs, axis=0)                          # (T*B, H), registers
        logits_ref[...] = (jnp.dot(top, fcw_ref[...],
                                   preferred_element_type=jnp.float32)
                           + fcb_ref[...]).astype(logits_ref.dtype)

        # ---- final states written exactly once ----------------------------------
        for l in range(layers):
            hT_ref[l] = h[l].astype(hT_ref.dtype)
            cT_ref[l] = c[l].astype(cT_ref.dtype)

    return kernel


# --------------------------- kernel-side param prep ---------------------------
def prepare_kernel_params(params):
    """Free wrapper-side transforms: scale g-gate columns by 2 (tanh->sigmoid fold),
    fuse embedding with layer-0 input projection, pad FC to a lane-dense width."""
    H, V = HIDDEN, VOCAB
    V_pad = ((max(V, 128) + 127) // 128) * 128

    def scale_g(w):
        return w.at[..., 2 * H:3 * H].multiply(2.0)

    kp = {
        "emb_proj": params["embedding"] @ scale_g(params["w_ih"][0]),   # (V, 4H)
        "w_ih": [scale_g(w) for w in params["w_ih"]],                   # [0] unused in-kernel
        "w_hh": [scale_g(w) for w in params["w_hh"]],
        "b": [scale_g(b) for b in params["b"]],
        "fc_w": jnp.pad(params["fc_w"], ((0, 0), (0, V_pad - V))),
        "fc_b": jnp.pad(params["fc_b"], ((0, 0), (0, V_pad - V))),
    }
    return kp, V_pad


def lm_forward(params, input_ids, hidden):
    """input_ids: (T, B) int32 token ids; hidden: (h0, c0) each (L, B, H)."""
    T, B = input_ids.shape
    H, V, L = HIDDEN, VOCAB, LAYERS
    kp, V_pad = prepare_kernel_params(params)
    h0, c0 = hidden
    ids2d = input_ids.reshape(T * B, 1)                    # lane-broadcastable ids

    full2 = lambda: (0, 0)
    full3 = lambda: (0, 0, 0)

    in_specs = [
        pl.BlockSpec((T * B, 1), full2),                   # ids
        pl.BlockSpec((V, 4 * H), full2),                   # fused embedding@W_ih0
        pl.BlockSpec((L, B, H), full3),                    # h0
        pl.BlockSpec((L, B, H), full3),                    # c0
        pl.BlockSpec((1, 4 * H), full2),                   # b0 (g-scaled)
        pl.BlockSpec((H, 4 * H), full2),                   # W_hh0 (g-scaled)
    ]
    args = [ids2d, kp["emb_proj"], h0, c0, kp["b"][0], kp["w_hh"][0]]
    for l in range(1, L):
        in_specs += [pl.BlockSpec((H, 4 * H), full2),
                     pl.BlockSpec((H, 4 * H), full2),
                     pl.BlockSpec((1, 4 * H), full2)]
        args += [kp["w_ih"][l], kp["w_hh"][l], kp["b"][l]]
    in_specs += [pl.BlockSpec((H, V_pad), full2),
                 pl.BlockSpec((1, V_pad), full2)]
    args += [kp["fc_w"], kp["fc_b"]]

    logits_pad, hT, cT = pl.pallas_call(
        make_lm_kernel(L, T, B, H, V, V_pad),
        out_shape=(jax.ShapeDtypeStruct((T * B, V_pad), jnp.float32),
                   jax.ShapeDtypeStruct((L, B, H), jnp.float32),
                   jax.ShapeDtypeStruct((L, B, H), jnp.float32)),
        in_specs=in_specs,
        out_specs=(pl.BlockSpec((T * B, V_pad), full2),
                   pl.BlockSpec((L, B, H), full3),
                   pl.BlockSpec((L, B, H), full3)),
    )(*args)

    output = logits_pad[:, :V].reshape(T, B, V)
    return output, (hT, cT)


# --------------------------- parameter construction --------------------------
def init_params(key):
    ks = jax.random.split(key, 4 + 3 * LAYERS)
    init_range = 0.1
    params = {}
    # embedding.weight ~ U(-0.1, 0.1), shape (V, E)
    params["embedding"] = jax.random.uniform(
        ks[0], (VOCAB, EMBED), jnp.float32, -init_range, init_range)
    # fc: weight U(-0.1, 0.1), bias 0 ; stored transposed as (H, V)
    params["fc_w"] = jax.random.uniform(
        ks[1], (HIDDEN, VOCAB), jnp.float32, -init_range, init_range)
    params["fc_b"] = jnp.zeros((1, VOCAB), jnp.float32)
    # LSTM weights: PyTorch default init U(-1/sqrt(H), 1/sqrt(H))
    k = 1.0 / np.sqrt(HIDDEN)
    w_ih, w_hh, bias = [], [], []
    for l in range(LAYERS):
        in_dim = EMBED if l == 0 else HIDDEN
        w_ih.append(jax.random.uniform(
            ks[2 + 3 * l], (in_dim, 4 * HIDDEN), jnp.float32, -k, k))
        w_hh.append(jax.random.uniform(
            ks[3 + 3 * l], (HIDDEN, 4 * HIDDEN), jnp.float32, -k, k))
        # combined bias = b_ih + b_hh
        bias.append(jax.random.uniform(
            ks[4 + 3 * l], (1, 4 * HIDDEN), jnp.float32, -k, k)
            + jax.random.uniform(
                jax.random.fold_in(ks[4 + 3 * l], 7),
                (1, 4 * HIDDEN), jnp.float32, -k, k))
    params["w_ih"], params["w_hh"], params["b"] = w_ih, w_hh, bias
    return params


# ----------------------------- pure-JAX reference ----------------------------
def lstm_layer_ref(x, h0, c0, w_ih, w_hh, b):
    def step(carry, xt):
        h, c = carry
        gates = xt @ w_ih + h @ w_hh + b[0]
        i, f, g, o = jnp.split(gates, 4, axis=-1)
        i = jax.nn.sigmoid(i)
        f = jax.nn.sigmoid(f)
        g = jnp.tanh(g)
        o = jax.nn.sigmoid(o)
        c = f * c + i * g
        h = o * jnp.tanh(c)
        return (h, c), h
    (hT, cT), out = jax.lax.scan(step, (h0, c0), x)
    return out, hT, cT


def lm_forward_ref(params, input_ids, hidden):
    emb = jnp.take(params["embedding"], input_ids, axis=0)
    h0, c0 = hidden
    x = emb
    h_finals, c_finals = [], []
    for l in range(LAYERS):
        x, hT, cT = lstm_layer_ref(x, h0[l], c0[l],
                                   params["w_ih"][l], params["w_hh"][l],
                                   params["b"][l])
        h_finals.append(hT)
        c_finals.append(cT)
    logits = x.reshape(-1, HIDDEN) @ params["fc_w"] + params["fc_b"][0]
    return (logits.reshape(NUM_STEPS, BATCH, VOCAB),
            (jnp.stack(h_finals, axis=0), jnp.stack(c_finals, axis=0)))


# ----------------------------------- main -------------------------------------
if __name__ == "__main__":
    key = jax.random.PRNGKey(0)
    k_param, k_ids, k_h, k_c = jax.random.split(key, 4)

    params = init_params(k_param)
    input_ids = jax.random.randint(k_ids, (NUM_STEPS, BATCH), 0, VOCAB,
                                   dtype=jnp.int32)
    # init_hidden() in the module returns zeros; use small random states to
    # exercise the h0/c0 load path as well.
    h0 = 0.1 * jax.random.normal(k_h, (LAYERS, BATCH, HIDDEN), jnp.float32)
    c0 = 0.1 * jax.random.normal(k_c, (LAYERS, BATCH, HIDDEN), jnp.float32)

    output, (hT, cT) = lm_forward(params, input_ids, (h0, c0))
    output = jax.block_until_ready(output)
    hT = jax.block_until_ready(hT)
    cT = jax.block_until_ready(cT)

    assert output.shape == (NUM_STEPS, BATCH, VOCAB)
    assert hT.shape == (LAYERS, BATCH, HIDDEN)
    assert cT.shape == (LAYERS, BATCH, HIDDEN)

    ref_out, (ref_hT, ref_cT) = jax.block_until_ready(
        lm_forward_ref(params, input_ids, (h0, c0)))
    np.testing.assert_allclose(np.asarray(output), np.asarray(ref_out),
                               rtol=2e-3, atol=2e-3)
    np.testing.assert_allclose(np.asarray(hT), np.asarray(ref_hT),
                               rtol=2e-3, atol=2e-3)
    np.testing.assert_allclose(np.asarray(cT), np.asarray(ref_cT),
                               rtol=2e-3, atol=2e-3)

    print("KERNEL_OK")
</pallas_src>

<mosaic_0001>
module attributes {stable_mosaic.version = 11 : i64} {
  func.func @kernel(%arg0: memref<64x1xi32, #tpu.memory_space<vmem>>, %arg1: memref<64x128xf32, #tpu.memory_space<vmem>>, %arg2: memref<2x8x32xf32, #tpu.memory_space<vmem>>, %arg3: memref<2x8x32xf32, #tpu.memory_space<vmem>>, %arg4: memref<1x128xf32, #tpu.memory_space<vmem>>, %arg5: memref<32x128xf32, #tpu.memory_space<vmem>>, %arg6: memref<32x128xf32, #tpu.memory_space<vmem>>, %arg7: memref<32x128xf32, #tpu.memory_space<vmem>>, %arg8: memref<1x128xf32, #tpu.memory_space<vmem>>, %arg9: memref<32x128xf32, #tpu.memory_space<vmem>>, %arg10: memref<1x128xf32, #tpu.memory_space<vmem>>, %arg11: memref<64x128xf32, #tpu.memory_space<vmem>>, %arg12: memref<2x8x32xf32, #tpu.memory_space<vmem>>, %arg13: memref<2x8x32xf32, #tpu.memory_space<vmem>>) attributes {dimension_semantics = [], scalar_prefetch = 0 : i64, scratch_operands = 0 : i64, tpu.core_type = #tpu.core_type<tc>} {
    %c0 = arith.constant 0 : index
    %c0_0 = arith.constant 0 : index
    %0 = vector.load %arg0[%c0, %c0_0] : memref<64x1xi32, #tpu.memory_space<vmem>>, vector<64x1xi32>
    %1 = tpu.iota {dimensions = array<i32: 1>} : vector<64x64xi32>
    %2 = vector.broadcast %0 : vector<64x1xi32> to vector<64x64xi32>
    %3 = arith.cmpi eq, %1, %2 : vector<64x64xi32>
    %4 = arith.extui %3 : vector<64x64xi1> to vector<64x64xi32>
    %5 = arith.sitofp %4 : vector<64x64xi32> to vector<64x64xf32>
    %c0_1 = arith.constant 0 : index
    %c0_2 = arith.constant 0 : index
    %6 = vector.load %arg1[%c0_1, %c0_2] : memref<64x128xf32, #tpu.memory_space<vmem>>, vector<64x128xf32>
    %cst = arith.constant dense<0.000000e+00> : vector<64x128xf32>
    %7 = tpu.matmul %5, %6, %cst {dimension_numbers = #tpu.dot_dimension_numbers<[1], [0], [0], [1], [0, 0, 1, 1], [], []>} : vector<64x64xf32>, vector<64x128xf32>, vector<64x128xf32> -> vector<64x128xf32>
    %c0_3 = arith.constant 0 : index
    %c0_4 = arith.constant 0 : index
    %8 = vector.load %arg4[%c0_3, %c0_4] : memref<1x128xf32, #tpu.memory_space<vmem>>, vector<1x128xf32>
    %9 = vector.broadcast %8 : vector<1x128xf32> to vector<64x128xf32>
    %10 = arith.addf %7, %9 : vector<64x128xf32>
    %c0_5 = arith.constant 0 : index
    %c0_6 = arith.constant 0 : index
    %11 = vector.load %arg5[%c0_5, %c0_6] : memref<32x128xf32, #tpu.memory_space<vmem>>, vector<32x128xf32>
    %c0_7 = arith.constant 0 : index
    %c0_8 = arith.constant 0 : index
    %12 = vector.load %arg6[%c0_7, %c0_8] : memref<32x128xf32, #tpu.memory_space<vmem>>, vector<32x128xf32>
    %c0_9 = arith.constant 0 : index
    %c0_10 = arith.constant 0 : index
    %13 = vector.load %arg7[%c0_9, %c0_10] : memref<32x128xf32, #tpu.memory_space<vmem>>, vector<32x128xf32>
    %c0_11 = arith.constant 0 : index
    %c0_12 = arith.constant 0 : index
    %14 = vector.load %arg8[%c0_11, %c0_12] : memref<1x128xf32, #tpu.memory_space<vmem>>, vector<1x128xf32>
    %15 = vector.shape_cast %14 : vector<1x128xf32> to vector<1x128xf32>
    %16 = vector.broadcast %15 : vector<1x128xf32> to vector<8x128xf32>
    %c0_13 = arith.constant 0 : index
    %c0_14 = arith.constant 0 : index
    %c0_15 = arith.constant 0 : index
    %17 = vector.load %arg2[%c0_13, %c0_14, %c0_15] : memref<2x8x32xf32, #tpu.memory_space<vmem>>, vector<1x8x32xf32>
    %18 = vector.shape_cast %17 : vector<1x8x32xf32> to vector<8x32xf32>
    %c1 = arith.constant 1 : index
    %c0_16 = arith.constant 0 : index
    %c0_17 = arith.constant 0 : index
    %19 = vector.load %arg2[%c1, %c0_16, %c0_17] : memref<2x8x32xf32, #tpu.memory_space<vmem>>, vector<1x8x32xf32>
    %20 = vector.shape_cast %19 : vector<1x8x32xf32> to vector<8x32xf32>
    %c0_18 = arith.constant 0 : index
    %c0_19 = arith.constant 0 : index
    %c0_20 = arith.constant 0 : index
    %21 = vector.load %arg3[%c0_18, %c0_19, %c0_20] : memref<2x8x32xf32, #tpu.memory_space<vmem>>, vector<1x8x32xf32>
    %22 = vector.shape_cast %21 : vector<1x8x32xf32> to vector<8x32xf32>
    %c1_21 = arith.constant 1 : index
    %c0_22 = arith.constant 0 : index
    %c0_23 = arith.constant 0 : index
    %23 = vector.load %arg3[%c1_21, %c0_22, %c0_23] : memref<2x8x32xf32, #tpu.memory_space<vmem>>, vector<1x8x32xf32>
    %24 = vector.shape_cast %23 : vector<1x8x32xf32> to vector<8x32xf32>
    %25 = vector.extract_strided_slice %10 {offsets = [0, 0], sizes = [8, 128], strides = [1, 1]} : vector<64x128xf32> to vector<8x128xf32>
    %cst_24 = arith.constant dense<0.000000e+00> : vector<8x128xf32>
    %26 = tpu.matmul %18, %11, %cst_24 {dimension_numbers = #tpu.dot_dimension_numbers<[1], [0], [0], [1], [0, 0, 1, 1], [], []>} : vector<8x32xf32>, vector<32x128xf32>, vector<8x128xf32> -> vector<8x128xf32>
    %27 = arith.addf %25, %26 : vector<8x128xf32>
    %28 = arith.negf %27 : vector<8x128xf32>
    %29 = math.exp %28 : vector<8x128xf32>
    %cst_25 = arith.constant 1.000000e+00 : f32
    %30 = vector.broadcast %cst_25 : f32 to vector<8x128xf32>
    %31 = arith.addf %30, %29 : vector<8x128xf32>
    %32 = arith.divf %30, %31 : vector<8x128xf32>
    %33 = vector.extract_strided_slice %32 {offsets = [0, 0], sizes = [8, 32], strides = [1, 1]} : vector<8x128xf32> to vector<8x32xf32>
    %34 = vector.extract_strided_slice %32 {offsets = [0, 32], sizes = [8, 32], strides = [1, 1]} : vector<8x128xf32> to vector<8x32xf32>
    %35 = vector.extract_strided_slice %32 {offsets = [0, 64], sizes = [8, 32], strides = [1, 1]} : vector<8x128xf32> to vector<8x32xf32>
    %cst_26 = arith.constant 2.000000e+00 : f32
    %36 = vector.broadcast %cst_26 : f32 to vector<8x32xf32>
    %37 = arith.mulf %36, %35 : vector<8x32xf32>
    %cst_27 = arith.constant 1.000000e+00 : f32
    %38 = vector.broadcast %cst_27 : f32 to vector<8x32xf32>
    %39 = arith.subf %37, %38 : vector<8x32xf32>
    %40 = vector.extract_strided_slice %32 {offsets = [0, 96], sizes = [8, 32], strides = [1, 1]} : vector<8x128xf32> to vector<8x32xf32>
    %41 = arith.mulf %34, %22 : vector<8x32xf32>
    %42 = arith.mulf %33, %39 : vector<8x32xf32>
    %43 = arith.addf %41, %42 : vector<8x32xf32>
    %44 = math.tanh %43 : vector<8x32xf32>
    %45 = arith.mulf %40, %44 : vector<8x32xf32>
    %cst_28 = arith.constant dense<0.000000e+00> : vector<8x128xf32>
    %46 = tpu.matmul %45, %12, %cst_28 {dimension_numbers = #tpu.dot_dimension_numbers<[1], [0], [0], [1], [0, 0, 1, 1], [], []>} : vector<8x32xf32>, vector<32x128xf32>, vector<8x128xf32> -> vector<8x128xf32>
    %cst_29 = arith.constant dense<0.000000e+00> : vector<8x128xf32>
    %47 = tpu.matmul %20, %13, %cst_29 {dimension_numbers = #tpu.dot_dimension_numbers<[1], [0], [0], [1], [0, 0, 1, 1], [], []>} : vector<8x32xf32>, vector<32x128xf32>, vector<8x128xf32> -> vector<8x128xf32>
    %48 = arith.addf %46, %47 : vector<8x128xf32>
    %49 = arith.addf %48, %16 : vector<8x128xf32>
    %50 = arith.negf %49 : vector<8x128xf32>
    %51 = math.exp %50 : vector<8x128xf32>
    %cst_30 = arith.constant 1.000000e+00 : f32
    %52 = vector.broadcast %cst_30 : f32 to vector<8x128xf32>
    %53 = arith.addf %52, %51 : vector<8x128xf32>
    %54 = arith.divf %52, %53 : vector<8x128xf32>
    %55 = vector.extract_strided_slice %54 {offsets = [0, 0], sizes = [8, 32], strides = [1, 1]} : vector<8x128xf32> to vector<8x32xf32>
    %56 = vector.extract_strided_slice %54 {offsets = [0, 32], sizes = [8, 32], strides = [1, 1]} : vector<8x128xf32> to vector<8x32xf32>
    %57 = vector.extract_strided_slice %54 {offsets = [0, 64], sizes = [8, 32], strides = [1, 1]} : vector<8x128xf32> to vector<8x32xf32>
    %cst_31 = arith.constant 2.000000e+00 : f32
    %58 = vector.broadcast %cst_31 : f32 to vector<8x32xf32>
    %59 = arith.mulf %58, %57 : vector<8x32xf32>
    %cst_32 = arith.constant 1.000000e+00 : f32
    %60 = vector.broadcast %cst_32 : f32 to vector<8x32xf32>
    %61 = arith.subf %59, %60 : vector<8x32xf32>
    %62 = vector.extract_strided_slice %54 {offsets = [0, 96], sizes = [8, 32], strides = [1, 1]} : vector<8x128xf32> to vector<8x32xf32>
    %63 = arith.mulf %56, %24 : vector<8x32xf32>
    %64 = arith.mulf %55, %61 : vector<8x32xf32>
    %65 = arith.addf %63, %64 : vector<8x32xf32>
    %66 = math.tanh %65 : vector<8x32xf32>
    %67 = arith.mulf %62, %66 : vector<8x32xf32>
    %68 = vector.extract_strided_slice %10 {offsets = [8, 0], sizes = [8, 128], strides = [1, 1]} : vector<64x128xf32> to vector<8x128xf32>
    %cst_33 = arith.constant dense<0.000000e+00> : vector<8x128xf32>
    %69 = tpu.matmul %45, %11, %cst_33 {dimension_numbers = #tpu.dot_dimension_numbers<[1], [0], [0], [1], [0, 0, 1, 1], [], []>} : vector<8x32xf32>, vector<32x128xf32>, vector<8x128xf32> -> vector<8x128xf32>
    %70 = arith.addf %68, %69 : vector<8x128xf32>
    %71 = arith.negf %70 : vector<8x128xf32>
    %72 = math.exp %71 : vector<8x128xf32>
    %cst_34 = arith.constant 1.000000e+00 : f32
    %73 = vector.broadcast %cst_34 : f32 to vector<8x128xf32>
    %74 = arith.addf %73, %72 : vector<8x128xf32>
    %75 = arith.divf %73, %74 : vector<8x128xf32>
    %76 = vector.extract_strided_slice %75 {offsets = [0, 0], sizes = [8, 32], strides = [1, 1]} : vector<8x128xf32> to vector<8x32xf32>
    %77 = vector.extract_strided_slice %75 {offsets = [0, 32], sizes = [8, 32], strides = [1, 1]} : vector<8x128xf32> to vector<8x32xf32>
    %78 = vector.extract_strided_slice %75 {offsets = [0, 64], sizes = [8, 32], strides = [1, 1]} : vector<8x128xf32> to vector<8x32xf32>
    %cst_35 = arith.constant 2.000000e+00 : f32
    %79 = vector.broadcast %cst_35 : f32 to vector<8x32xf32>
    %80 = arith.mulf %79, %78 : vector<8x32xf32>
    %cst_36 = arith.constant 1.000000e+00 : f32
    %81 = vector.broadcast %cst_36 : f32 to vector<8x32xf32>
    %82 = arith.subf %80, %81 : vector<8x32xf32>
    %83 = vector.extract_strided_slice %75 {offsets = [0, 96], sizes = [8, 32], strides = [1, 1]} : vector<8x128xf32> to vector<8x32xf32>
    %84 = arith.mulf %77, %43 : vector<8x32xf32>
    %85 = arith.mulf %76, %82 : vector<8x32xf32>
    %86 = arith.addf %84, %85 : vector<8x32xf32>
    %87 = math.tanh %86 : vector<8x32xf32>
    %88 = arith.mulf %83, %87 : vector<8x32xf32>
    %cst_37 = arith.constant dense<0.000000e+00> : vector<8x128xf32>
    %89 = tpu.matmul %88, %12, %cst_37 {dimension_numbers = #tpu.dot_dimension_numbers<[1], [0], [0], [1], [0, 0, 1, 1], [], []>} : vector<8x32xf32>, vector<32x128xf32>, vector<8x128xf32> -> vector<8x128xf32>
    %cst_38 = arith.constant dense<0.000000e+00> : vector<8x128xf32>
    %90 = tpu.matmul %67, %13, %cst_38 {dimension_numbers = #tpu.dot_dimension_numbers<[1], [0], [0], [1], [0, 0, 1, 1], [], []>} : vector<8x32xf32>, vector<32x128xf32>, vector<8x128xf32> -> vector<8x128xf32>
    %91 = arith.addf %89, %90 : vector<8x128xf32>
    %92 = arith.addf %91, %16 : vector<8x128xf32>
    %93 = arith.negf %92 : vector<8x128xf32>
    %94 = math.exp %93 : vector<8x128xf32>
    %cst_39 = arith.constant 1.000000e+00 : f32
    %95 = vector.broadcast %cst_39 : f32 to vector<8x128xf32>
    %96 = arith.addf %95, %94 : vector<8x128xf32>
    %97 = arith.divf %95, %96 : vector<8x128xf32>
    %98 = vector.extract_strided_slice %97 {offsets = [0, 0], sizes = [8, 32], strides = [1, 1]} : vector<8x128xf32> to vector<8x32xf32>
    %99 = vector.extract_strided_slice %97 {offsets = [0, 32], sizes = [8, 32], strides = [1, 1]} : vector<8x128xf32> to vector<8x32xf32>
    %100 = vector.extract_strided_slice %97 {offsets = [0, 64], sizes = [8, 32], strides = [1, 1]} : vector<8x128xf32> to vector<8x32xf32>
    %cst_40 = arith.constant 2.000000e+00 : f32
    %101 = vector.broadcast %cst_40 : f32 to vector<8x32xf32>
    %102 = arith.mulf %101, %100 : vector<8x32xf32>
    %cst_41 = arith.constant 1.000000e+00 : f32
    %103 = vector.broadcast %cst_41 : f32 to vector<8x32xf32>
    %104 = arith.subf %102, %103 : vector<8x32xf32>
    %105 = vector.extract_strided_slice %97 {offsets = [0, 96], sizes = [8, 32], strides = [1, 1]} : vector<8x128xf32> to vector<8x32xf32>
    %106 = arith.mulf %99, %65 : vector<8x32xf32>
    %107 = arith.mulf %98, %104 : vector<8x32xf32>
    %108 = arith.addf %106, %107 : vector<8x32xf32>
    %109 = math.tanh %108 : vector<8x32xf32>
    %110 = arith.mulf %105, %109 : vector<8x32xf32>
    %111 = vector.extract_strided_slice %10 {offsets = [16, 0], sizes = [8, 128], strides = [1, 1]} : vector<64x128xf32> to vector<8x128xf32>
    %cst_42 = arith.constant dense<0.000000e+00> : vector<8x128xf32>
    %112 = tpu.matmul %88, %11, %cst_42 {dimension_numbers = #tpu.dot_dimension_numbers<[1], [0], [0], [1], [0, 0, 1, 1], [], []>} : vector<8x32xf32>, vector<32x128xf32>, vector<8x128xf32> -> vector<8x128xf32>
    %113 = arith.addf %111, %112 : vector<8x128xf32>
    %114 = arith.negf %113 : vector<8x128xf32>
    %115 = math.exp %114 : vector<8x128xf32>
    %cst_43 = arith.constant 1.000000e+00 : f32
    %116 = vector.broadcast %cst_43 : f32 to vector<8x128xf32>
    %117 = arith.addf %116, %115 : vector<8x128xf32>
    %118 = arith.divf %116, %117 : vector<8x128xf32>
    %119 = vector.extract_strided_slice %118 {offsets = [0, 0], sizes = [8, 32], strides = [1, 1]} : vector<8x128xf32> to vector<8x32xf32>
    %120 = vector.extract_strided_slice %118 {offsets = [0, 32], sizes = [8, 32], strides = [1, 1]} : vector<8x128xf32> to vector<8x32xf32>
    %121 = vector.extract_strided_slice %118 {offsets = [0, 64], sizes = [8, 32], strides = [1, 1]} : vector<8x128xf32> to vector<8x32xf32>
    %cst_44 = arith.constant 2.000000e+00 : f32
    %122 = vector.broadcast %cst_44 : f32 to vector<8x32xf32>
    %123 = arith.mulf %122, %121 : vector<8x32xf32>
    %cst_45 = arith.constant 1.000000e+00 : f32
    %124 = vector.broadcast %cst_45 : f32 to vector<8x32xf32>
    %125 = arith.subf %123, %124 : vector<8x32xf32>
    %126 = vector.extract_strided_slice %118 {offsets = [0, 96], sizes = [8, 32], strides = [1, 1]} : vector<8x128xf32> to vector<8x32xf32>
    %127 = arith.mulf %120, %86 : vector<8x32xf32>
    %128 = arith.mulf %119, %125 : vector<8x32xf32>
    %129 = arith.addf %127, %128 : vector<8x32xf32>
    %130 = math.tanh %129 : vector<8x32xf32>
    %131 = arith.mulf %126, %130 : vector<8x32xf32>
    %cst_46 = arith.constant dense<0.000000e+00> : vector<8x128xf32>
    %132 = tpu.matmul %131, %12, %cst_46 {dimension_numbers = #tpu.dot_dimension_numbers<[1], [0], [0], [1], [0, 0, 1, 1], [], []>} : vector<8x32xf32>, vector<32x128xf32>, vector<8x128xf32> -> vector<8x128xf32>
    %cst_47 = arith.constant dense<0.000000e+00> : vector<8x128xf32>
    %133 = tpu.matmul %110, %13, %cst_47 {dimension_numbers = #tpu.dot_dimension_numbers<[1], [0], [0], [1], [0, 0, 1, 1], [], []>} : vector<8x32xf32>, vector<32x128xf32>, vector<8x128xf32> -> vector<8x128xf32>
    %134 = arith.addf %132, %133 : vector<8x128xf32>
    %135 = arith.addf %134, %16 : vector<8x128xf32>
    %136 = arith.negf %135 : vector<8x128xf32>
    %137 = math.exp %136 : vector<8x128xf32>
    %cst_48 = arith.constant 1.000000e+00 : f32
    %138 = vector.broadcast %cst_48 : f32 to vector<8x128xf32>
    %139 = arith.addf %138, %137 : vector<8x128xf32>
    %140 = arith.divf %138, %139 : vector<8x128xf32>
    %141 = vector.extract_strided_slice %140 {offsets = [0, 0], sizes = [8, 32], strides = [1, 1]} : vector<8x128xf32> to vector<8x32xf32>
    %142 = vector.extract_strided_slice %140 {offsets = [0, 32], sizes = [8, 32], strides = [1, 1]} : vector<8x128xf32> to vector<8x32xf32>
    %143 = vector.extract_strided_slice %140 {offsets = [0, 64], sizes = [8, 32], strides = [1, 1]} : vector<8x128xf32> to vector<8x32xf32>
    %cst_49 = arith.constant 2.000000e+00 : f32
    %144 = vector.broadcast %cst_49 : f32 to vector<8x32xf32>
    %145 = arith.mulf %144, %143 : vector<8x32xf32>
    %cst_50 = arith.constant 1.000000e+00 : f32
    %146 = vector.broadcast %cst_50 : f32 to vector<8x32xf32>
    %147 = arith.subf %145, %146 : vector<8x32xf32>
    %148 = vector.extract_strided_slice %140 {offsets = [0, 96], sizes = [8, 32], strides = [1, 1]} : vector<8x128xf32> to vector<8x32xf32>
    %149 = arith.mulf %142, %108 : vector<8x32xf32>
    %150 = arith.mulf %141, %147 : vector<8x32xf32>
    %151 = arith.addf %149, %150 : vector<8x32xf32>
    %152 = math.tanh %151 : vector<8x32xf32>
    %153 = arith.mulf %148, %152 : vector<8x32xf32>
    %154 = vector.extract_strided_slice %10 {offsets = [24, 0], sizes = [8, 128], strides = [1, 1]} : vector<64x128xf32> to vector<8x128xf32>
    %cst_51 = arith.constant dense<0.000000e+00> : vector<8x128xf32>
    %155 = tpu.matmul %131, %11, %cst_51 {dimension_numbers = #tpu.dot_dimension_numbers<[1], [0], [0], [1], [0, 0, 1, 1], [], []>} : vector<8x32xf32>, vector<32x128xf32>, vector<8x128xf32> -> vector<8x128xf32>
    %156 = arith.addf %154, %155 : vector<8x128xf32>
    %157 = arith.negf %156 : vector<8x128xf32>
    %158 = math.exp %157 : vector<8x128xf32>
    %cst_52 = arith.constant 1.000000e+00 : f32
    %159 = vector.broadcast %cst_52 : f32 to vector<8x128xf32>
    %160 = arith.addf %159, %158 : vector<8x128xf32>
    %161 = arith.divf %159, %160 : vector<8x128xf32>
    %162 = vector.extract_strided_slice %161 {offsets = [0, 0], sizes = [8, 32], strides = [1, 1]} : vector<8x128xf32> to vector<8x32xf32>
    %163 = vector.extract_strided_slice %161 {offsets = [0, 32], sizes = [8, 32], strides = [1, 1]} : vector<8x128xf32> to vector<8x32xf32>
    %164 = vector.extract_strided_slice %161 {offsets = [0, 64], sizes = [8, 32], strides = [1, 1]} : vector<8x128xf32> to vector<8x32xf32>
    %cst_53 = arith.constant 2.000000e+00 : f32
    %165 = vector.broadcast %cst_53 : f32 to vector<8x32xf32>
    %166 = arith.mulf %165, %164 : vector<8x32xf32>
    %cst_54 = arith.constant 1.000000e+00 : f32
    %167 = vector.broadcast %cst_54 : f32 to vector<8x32xf32>
    %168 = arith.subf %166, %167 : vector<8x32xf32>
    %169 = vector.extract_strided_slice %161 {offsets = [0, 96], sizes = [8, 32], strides = [1, 1]} : vector<8x128xf32> to vector<8x32xf32>
    %170 = arith.mulf %163, %129 : vector<8x32xf32>
    %171 = arith.mulf %162, %168 : vector<8x32xf32>
    %172 = arith.addf %170, %171 : vector<8x32xf32>
    %173 = math.tanh %172 : vector<8x32xf32>
    %174 = arith.mulf %169, %173 : vector<8x32xf32>
    %cst_55 = arith.constant dense<0.000000e+00> : vector<8x128xf32>
    %175 = tpu.matmul %174, %12, %cst_55 {dimension_numbers = #tpu.dot_dimension_numbers<[1], [0], [0], [1], [0, 0, 1, 1], [], []>} : vector<8x32xf32>, vector<32x128xf32>, vector<8x128xf32> -> vector<8x128xf32>
    %cst_56 = arith.constant dense<0.000000e+00> : vector<8x128xf32>
    %176 = tpu.matmul %153, %13, %cst_56 {dimension_numbers = #tpu.dot_dimension_numbers<[1], [0], [0], [1], [0, 0, 1, 1], [], []>} : vector<8x32xf32>, vector<32x128xf32>, vector<8x128xf32> -> vector<8x128xf32>
    %177 = arith.addf %175, %176 : vector<8x128xf32>
    %178 = arith.addf %177, %16 : vector<8x128xf32>
    %179 = arith.negf %178 : vector<8x128xf32>
    %180 = math.exp %179 : vector<8x128xf32>
    %cst_57 = arith.constant 1.000000e+00 : f32
    %181 = vector.broadcast %cst_57 : f32 to vector<8x128xf32>
    %182 = arith.addf %181, %180 : vector<8x128xf32>
    %183 = arith.divf %181, %182 : vector<8x128xf32>
    %184 = vector.extract_strided_slice %183 {offsets = [0, 0], sizes = [8, 32], strides = [1, 1]} : vector<8x128xf32> to vector<8x32xf32>
    %185 = vector.extract_strided_slice %183 {offsets = [0, 32], sizes = [8, 32], strides = [1, 1]} : vector<8x128xf32> to vector<8x32xf32>
    %186 = vector.extract_strided_slice %183 {offsets = [0, 64], sizes = [8, 32], strides = [1, 1]} : vector<8x128xf32> to vector<8x32xf32>
    %cst_58 = arith.constant 2.000000e+00 : f32
    %187 = vector.broadcast %cst_58 : f32 to vector<8x32xf32>
    %188 = arith.mulf %187, %186 : vector<8x32xf32>
    %cst_59 = arith.constant 1.000000e+00 : f32
    %189 = vector.broadcast %cst_59 : f32 to vector<8x32xf32>
    %190 = arith.subf %188, %189 : vector<8x32xf32>
    %191 = vector.extract_strided_slice %183 {offsets = [0, 96], sizes = [8, 32], strides = [1, 1]} : vector<8x128xf32> to vector<8x32xf32>
    %192 = arith.mulf %185, %151 : vector<8x32xf32>
    %193 = arith.mulf %184, %190 : vector<8x32xf32>
    %194 = arith.addf %192, %193 : vector<8x32xf32>
    %195 = math.tanh %194 : vector<8x32xf32>
    %196 = arith.mulf %191, %195 : vector<8x32xf32>
    %197 = vector.extract_strided_slice %10 {offsets = [32, 0], sizes = [8, 128], strides = [1, 1]} : vector<64x128xf32> to vector<8x128xf32>
    %cst_60 = arith.constant dense<0.000000e+00> : vector<8x128xf32>
    %198 = tpu.matmul %174, %11, %cst_60 {dimension_numbers = #tpu.dot_dimension_numbers<[1], [0], [0], [1], [0, 0, 1, 1], [], []>} : vector<8x32xf32>, vector<32x128xf32>, vector<8x128xf32> -> vector<8x128xf32>
    %199 = arith.addf %197, %198 : vector<8x128xf32>
    %200 = arith.negf %199 : vector<8x128xf32>
    %201 = math.exp %200 : vector<8x128xf32>
    %cst_61 = arith.constant 1.000000e+00 : f32
    %202 = vector.broadcast %cst_61 : f32 to vector<8x128xf32>
    %203 = arith.addf %202, %201 : vector<8x128xf32>
    %204 = arith.divf %202, %203 : vector<8x128xf32>
    %205 = vector.extract_strided_slice %204 {offsets = [0, 0], sizes = [8, 32], strides = [1, 1]} : vector<8x128xf32> to vector<8x32xf32>
    %206 = vector.extract_strided_slice %204 {offsets = [0, 32], sizes = [8, 32], strides = [1, 1]} : vector<8x128xf32> to vector<8x32xf32>
    %207 = vector.extract_strided_slice %204 {offsets = [0, 64], sizes = [8, 32], strides = [1, 1]} : vector<8x128xf32> to vector<8x32xf32>
    %cst_62 = arith.constant 2.000000e+00 : f32
    %208 = vector.broadcast %cst_62 : f32 to vector<8x32xf32>
    %209 = arith.mulf %208, %207 : vector<8x32xf32>
    %cst_63 = arith.constant 1.000000e+00 : f32
    %210 = vector.broadcast %cst_63 : f32 to vector<8x32xf32>
    %211 = arith.subf %209, %210 : vector<8x32xf32>
    %212 = vector.extract_strided_slice %204 {offsets = [0, 96], sizes = [8, 32], strides = [1, 1]} : vector<8x128xf32> to vector<8x32xf32>
    %213 = arith.mulf %206, %172 : vector<8x32xf32>
    %214 = arith.mulf %205, %211 : vector<8x32xf32>
    %215 = arith.addf %213, %214 : vector<8x32xf32>
    %216 = math.tanh %215 : vector<8x32xf32>
    %217 = arith.mulf %212, %216 : vector<8x32xf32>
    %cst_64 = arith.constant dense<0.000000e+00> : vector<8x128xf32>
    %218 = tpu.matmul %217, %12, %cst_64 {dimension_numbers = #tpu.dot_dimension_numbers<[1], [0], [0], [1], [0, 0, 1, 1], [], []>} : vector<8x32xf32>, vector<32x128xf32>, vector<8x128xf32> -> vector<8x128xf32>
    %cst_65 = arith.constant dense<0.000000e+00> : vector<8x128xf32>
    %219 = tpu.matmul %196, %13, %cst_65 {dimension_numbers = #tpu.dot_dimension_numbers<[1], [0], [0], [1], [0, 0, 1, 1], [], []>} : vector<8x32xf32>, vector<32x128xf32>, vector<8x128xf32> -> vector<8x128xf32>
    %220 = arith.addf %218, %219 : vector<8x128xf32>
    %221 = arith.addf %220, %16 : vector<8x128xf32>
    %222 = arith.negf %221 : vector<8x128xf32>
    %223 = math.exp %222 : vector<8x128xf32>
    %cst_66 = arith.constant 1.000000e+00 : f32
    %224 = vector.broadcast %cst_66 : f32 to vector<8x128xf32>
    %225 = arith.addf %224, %223 : vector<8x128xf32>
    %226 = arith.divf %224, %225 : vector<8x128xf32>
    %227 = vector.extract_strided_slice %226 {offsets = [0, 0], sizes = [8, 32], strides = [1, 1]} : vector<8x128xf32> to vector<8x32xf32>
    %228 = vector.extract_strided_slice %226 {offsets = [0, 32], sizes = [8, 32], strides = [1, 1]} : vector<8x128xf32> to vector<8x32xf32>
    %229 = vector.extract_strided_slice %226 {offsets = [0, 64], sizes = [8, 32], strides = [1, 1]} : vector<8x128xf32> to vector<8x32xf32>
    %cst_67 = arith.constant 2.000000e+00 : f32
    %230 = vector.broadcast %cst_67 : f32 to vector<8x32xf32>
    %231 = arith.mulf %230, %229 : vector<8x32xf32>
    %cst_68 = arith.constant 1.000000e+00 : f32
    %232 = vector.broadcast %cst_68 : f32 to vector<8x32xf32>
    %233 = arith.subf %231, %232 : vector<8x32xf32>
    %234 = vector.extract_strided_slice %226 {offsets = [0, 96], sizes = [8, 32], strides = [1, 1]} : vector<8x128xf32> to vector<8x32xf32>
    %235 = arith.mulf %228, %194 : vector<8x32xf32>
    %236 = arith.mulf %227, %233 : vector<8x32xf32>
    %237 = arith.addf %235, %236 : vector<8x32xf32>
    %238 = math.tanh %237 : vector<8x32xf32>
    %239 = arith.mulf %234, %238 : vector<8x32xf32>
    %240 = vector.extract_strided_slice %10 {offsets = [40, 0], sizes = [8, 128], strides = [1, 1]} : vector<64x128xf32> to vector<8x128xf32>
    %cst_69 = arith.constant dense<0.000000e+00> : vector<8x128xf32>
    %241 = tpu.matmul %217, %11, %cst_69 {dimension_numbers = #tpu.dot_dimension_numbers<[1], [0], [0], [1], [0, 0, 1, 1], [], []>} : vector<8x32xf32>, vector<32x128xf32>, vector<8x128xf32> -> vector<8x128xf32>
    %242 = arith.addf %240, %241 : vector<8x128xf32>
    %243 = arith.negf %242 : vector<8x128xf32>
    %244 = math.exp %243 : vector<8x128xf32>
    %cst_70 = arith.constant 1.000000e+00 : f32
    %245 = vector.broadcast %cst_70 : f32 to vector<8x128xf32>
    %246 = arith.addf %245, %244 : vector<8x128xf32>
    %247 = arith.divf %245, %246 : vector<8x128xf32>
    %248 = vector.extract_strided_slice %247 {offsets = [0, 0], sizes = [8, 32], strides = [1, 1]} : vector<8x128xf32> to vector<8x32xf32>
    %249 = vector.extract_strided_slice %247 {offsets = [0, 32], sizes = [8, 32], strides = [1, 1]} : vector<8x128xf32> to vector<8x32xf32>
    %250 = vector.extract_strided_slice %247 {offsets = [0, 64], sizes = [8, 32], strides = [1, 1]} : vector<8x128xf32> to vector<8x32xf32>
    %cst_71 = arith.constant 2.000000e+00 : f32
    %251 = vector.broadcast %cst_71 : f32 to vector<8x32xf32>
    %252 = arith.mulf %251, %250 : vector<8x32xf32>
    %cst_72 = arith.constant 1.000000e+00 : f32
    %253 = vector.broadcast %cst_72 : f32 to vector<8x32xf32>
    %254 = arith.subf %252, %253 : vector<8x32xf32>
    %255 = vector.extract_strided_slice %247 {offsets = [0, 96], sizes = [8, 32], strides = [1, 1]} : vector<8x128xf32> to vector<8x32xf32>
    %256 = arith.mulf %249, %215 : vector<8x32xf32>
    %257 = arith.mulf %248, %254 : vector<8x32xf32>
    %258 = arith.addf %256, %257 : vector<8x32xf32>
    %259 = math.tanh %258 : vector<8x32xf32>
    %260 = arith.mulf %255, %259 : vector<8x32xf32>
    %cst_73 = arith.constant dense<0.000000e+00> : vector<8x128xf32>
    %261 = tpu.matmul %260, %12, %cst_73 {dimension_numbers = #tpu.dot_dimension_numbers<[1], [0], [0], [1], [0, 0, 1, 1], [], []>} : vector<8x32xf32>, vector<32x128xf32>, vector<8x128xf32> -> vector<8x128xf32>
    %cst_74 = arith.constant dense<0.000000e+00> : vector<8x128xf32>
    %262 = tpu.matmul %239, %13, %cst_74 {dimension_numbers = #tpu.dot_dimension_numbers<[1], [0], [0], [1], [0, 0, 1, 1], [], []>} : vector<8x32xf32>, vector<32x128xf32>, vector<8x128xf32> -> vector<8x128xf32>
    %263 = arith.addf %261, %262 : vector<8x128xf32>
    %264 = arith.addf %263, %16 : vector<8x128xf32>
    %265 = arith.negf %264 : vector<8x128xf32>
    %266 = math.exp %265 : vector<8x128xf32>
    %cst_75 = arith.constant 1.000000e+00 : f32
    %267 = vector.broadcast %cst_75 : f32 to vector<8x128xf32>
    %268 = arith.addf %267, %266 : vector<8x128xf32>
    %269 = arith.divf %267, %268 : vector<8x128xf32>
    %270 = vector.extract_strided_slice %269 {offsets = [0, 0], sizes = [8, 32], strides = [1, 1]} : vector<8x128xf32> to vector<8x32xf32>
    %271 = vector.extract_strided_slice %269 {offsets = [0, 32], sizes = [8, 32], strides = [1, 1]} : vector<8x128xf32> to vector<8x32xf32>
    %272 = vector.extract_strided_slice %269 {offsets = [0, 64], sizes = [8, 32], strides = [1, 1]} : vector<8x128xf32> to vector<8x32xf32>
    %cst_76 = arith.constant 2.000000e+00 : f32
    %273 = vector.broadcast %cst_76 : f32 to vector<8x32xf32>
    %274 = arith.mulf %273, %272 : vector<8x32xf32>
    %cst_77 = arith.constant 1.000000e+00 : f32
    %275 = vector.broadcast %cst_77 : f32 to vector<8x32xf32>
    %276 = arith.subf %274, %275 : vector<8x32xf32>
    %277 = vector.extract_strided_slice %269 {offsets = [0, 96], sizes = [8, 32], strides = [1, 1]} : vector<8x128xf32> to vector<8x32xf32>
    %278 = arith.mulf %271, %237 : vector<8x32xf32>
    %279 = arith.mulf %270, %276 : vector<8x32xf32>
    %280 = arith.addf %278, %279 : vector<8x32xf32>
    %281 = math.tanh %280 : vector<8x32xf32>
    %282 = arith.mulf %277, %281 : vector<8x32xf32>
    %283 = vector.extract_strided_slice %10 {offsets = [48, 0], sizes = [8, 128], strides = [1, 1]} : vector<64x128xf32> to vector<8x128xf32>
    %cst_78 = arith.constant dense<0.000000e+00> : vector<8x128xf32>
    %284 = tpu.matmul %260, %11, %cst_78 {dimension_numbers = #tpu.dot_dimension_numbers<[1], [0], [0], [1], [0, 0, 1, 1], [], []>} : vector<8x32xf32>, vector<32x128xf32>, vector<8x128xf32> -> vector<8x128xf32>
    %285 = arith.addf %283, %284 : vector<8x128xf32>
    %286 = arith.negf %285 : vector<8x128xf32>
    %287 = math.exp %286 : vector<8x128xf32>
    %cst_79 = arith.constant 1.000000e+00 : f32
    %288 = vector.broadcast %cst_79 : f32 to vector<8x128xf32>
    %289 = arith.addf %288, %287 : vector<8x128xf32>
    %290 = arith.divf %288, %289 : vector<8x128xf32>
    %291 = vector.extract_strided_slice %290 {offsets = [0, 0], sizes = [8, 32], strides = [1, 1]} : vector<8x128xf32> to vector<8x32xf32>
    %292 = vector.extract_strided_slice %290 {offsets = [0, 32], sizes = [8, 32], strides = [1, 1]} : vector<8x128xf32> to vector<8x32xf32>
    %293 = vector.extract_strided_slice %290 {offsets = [0, 64], sizes = [8, 32], strides = [1, 1]} : vector<8x128xf32> to vector<8x32xf32>
    %cst_80 = arith.constant 2.000000e+00 : f32
    %294 = vector.broadcast %cst_80 : f32 to vector<8x32xf32>
    %295 = arith.mulf %294, %293 : vector<8x32xf32>
    %cst_81 = arith.constant 1.000000e+00 : f32
    %296 = vector.broadcast %cst_81 : f32 to vector<8x32xf32>
    %297 = arith.subf %295, %296 : vector<8x32xf32>
    %298 = vector.extract_strided_slice %290 {offsets = [0, 96], sizes = [8, 32], strides = [1, 1]} : vector<8x128xf32> to vector<8x32xf32>
    %299 = arith.mulf %292, %258 : vector<8x32xf32>
    %300 = arith.mulf %291, %297 : vector<8x32xf32>
    %301 = arith.addf %299, %300 : vector<8x32xf32>
    %302 = math.tanh %301 : vector<8x32xf32>
    %303 = arith.mulf %298, %302 : vector<8x32xf32>
    %cst_82 = arith.constant dense<0.000000e+00> : vector<8x128xf32>
    %304 = tpu.matmul %303, %12, %cst_82 {dimension_numbers = #tpu.dot_dimension_numbers<[1], [0], [0], [1], [0, 0, 1, 1], [], []>} : vector<8x32xf32>, vector<32x128xf32>, vector<8x128xf32> -> vector<8x128xf32>
    %cst_83 = arith.constant dense<0.000000e+00> : vector<8x128xf32>
    %305 = tpu.matmul %282, %13, %cst_83 {dimension_numbers = #tpu.dot_dimension_numbers<[1], [0], [0], [1], [0, 0, 1, 1], [], []>} : vector<8x32xf32>, vector<32x128xf32>, vector<8x128xf32> -> vector<8x128xf32>
    %306 = arith.addf %304, %305 : vector<8x128xf32>
    %307 = arith.addf %306, %16 : vector<8x128xf32>
    %308 = arith.negf %307 : vector<8x128xf32>
    %309 = math.exp %308 : vector<8x128xf32>
    %cst_84 = arith.constant 1.000000e+00 : f32
    %310 = vector.broadcast %cst_84 : f32 to vector<8x128xf32>
    %311 = arith.addf %310, %309 : vector<8x128xf32>
    %312 = arith.divf %310, %311 : vector<8x128xf32>
    %313 = vector.extract_strided_slice %312 {offsets = [0, 0], sizes = [8, 32], strides = [1, 1]} : vector<8x128xf32> to vector<8x32xf32>
    %314 = vector.extract_strided_slice %312 {offsets = [0, 32], sizes = [8, 32], strides = [1, 1]} : vector<8x128xf32> to vector<8x32xf32>
    %315 = vector.extract_strided_slice %312 {offsets = [0, 64], sizes = [8, 32], strides = [1, 1]} : vector<8x128xf32> to vector<8x32xf32>
    %cst_85 = arith.constant 2.000000e+00 : f32
    %316 = vector.broadcast %cst_85 : f32 to vector<8x32xf32>
    %317 = arith.mulf %316, %315 : vector<8x32xf32>
    %cst_86 = arith.constant 1.000000e+00 : f32
    %318 = vector.broadcast %cst_86 : f32 to vector<8x32xf32>
    %319 = arith.subf %317, %318 : vector<8x32xf32>
    %320 = vector.extract_strided_slice %312 {offsets = [0, 96], sizes = [8, 32], strides = [1, 1]} : vector<8x128xf32> to vector<8x32xf32>
    %321 = arith.mulf %314, %280 : vector<8x32xf32>
    %322 = arith.mulf %313, %319 : vector<8x32xf32>
    %323 = arith.addf %321, %322 : vector<8x32xf32>
    %324 = math.tanh %323 : vector<8x32xf32>
    %325 = arith.mulf %320, %324 : vector<8x32xf32>
    %326 = vector.extract_strided_slice %10 {offsets = [56, 0], sizes = [8, 128], strides = [1, 1]} : vector<64x128xf32> to vector<8x128xf32>
    %cst_87 = arith.constant dense<0.000000e+00> : vector<8x128xf32>
    %327 = tpu.matmul %303, %11, %cst_87 {dimension_numbers = #tpu.dot_dimension_numbers<[1], [0], [0], [1], [0, 0, 1, 1], [], []>} : vector<8x32xf32>, vector<32x128xf32>, vector<8x128xf32> -> vector<8x128xf32>
    %328 = arith.addf %326, %327 : vector<8x128xf32>
    %329 = arith.negf %328 : vector<8x128xf32>
    %330 = math.exp %329 : vector<8x128xf32>
    %cst_88 = arith.constant 1.000000e+00 : f32
    %331 = vector.broadcast %cst_88 : f32 to vector<8x128xf32>
    %332 = arith.addf %331, %330 : vector<8x128xf32>
    %333 = arith.divf %331, %332 : vector<8x128xf32>
    %334 = vector.extract_strided_slice %333 {offsets = [0, 0], sizes = [8, 32], strides = [1, 1]} : vector<8x128xf32> to vector<8x32xf32>
    %335 = vector.extract_strided_slice %333 {offsets = [0, 32], sizes = [8, 32], strides = [1, 1]} : vector<8x128xf32> to vector<8x32xf32>
    %336 = vector.extract_strided_slice %333 {offsets = [0, 64], sizes = [8, 32], strides = [1, 1]} : vector<8x128xf32> to vector<8x32xf32>
    %cst_89 = arith.constant 2.000000e+00 : f32
    %337 = vector.broadcast %cst_89 : f32 to vector<8x32xf32>
    %338 = arith.mulf %337, %336 : vector<8x32xf32>
    %cst_90 = arith.constant 1.000000e+00 : f32
    %339 = vector.broadcast %cst_90 : f32 to vector<8x32xf32>
    %340 = arith.subf %338, %339 : vector<8x32xf32>
    %341 = vector.extract_strided_slice %333 {offsets = [0, 96], sizes = [8, 32], strides = [1, 1]} : vector<8x128xf32> to vector<8x32xf32>
    %342 = arith.mulf %335, %301 : vector<8x32xf32>
    %343 = arith.mulf %334, %340 : vector<8x32xf32>
    %344 = arith.addf %342, %343 : vector<8x32xf32>
    %345 = math.tanh %344 : vector<8x32xf32>
    %346 = arith.mulf %341, %345 : vector<8x32xf32>
    %cst_91 = arith.constant dense<0.000000e+00> : vector<8x128xf32>
    %347 = tpu.matmul %346, %12, %cst_91 {dimension_numbers = #tpu.dot_dimension_numbers<[1], [0], [0], [1], [0, 0, 1, 1], [], []>} : vector<8x32xf32>, vector<32x128xf32>, vector<8x128xf32> -> vector<8x128xf32>
    %cst_92 = arith.constant dense<0.000000e+00> : vector<8x128xf32>
    %348 = tpu.matmul %325, %13, %cst_92 {dimension_numbers = #tpu.dot_dimension_numbers<[1], [0], [0], [1], [0, 0, 1, 1], [], []>} : vector<8x32xf32>, vector<32x128xf32>, vector<8x128xf32> -> vector<8x128xf32>
    %349 = arith.addf %347, %348 : vector<8x128xf32>
    %350 = arith.addf %349, %16 : vector<8x128xf32>
    %351 = arith.negf %350 : vector<8x128xf32>
    %352 = math.exp %351 : vector<8x128xf32>
    %cst_93 = arith.constant 1.000000e+00 : f32
    %353 = vector.broadcast %cst_93 : f32 to vector<8x128xf32>
    %354 = arith.addf %353, %352 : vector<8x128xf32>
    %355 = arith.divf %353, %354 : vector<8x128xf32>
    %356 = vector.extract_strided_slice %355 {offsets = [0, 0], sizes = [8, 32], strides = [1, 1]} : vector<8x128xf32> to vector<8x32xf32>
    %357 = vector.extract_strided_slice %355 {offsets = [0, 32], sizes = [8, 32], strides = [1, 1]} : vector<8x128xf32> to vector<8x32xf32>
    %358 = vector.extract_strided_slice %355 {offsets = [0, 64], sizes = [8, 32], strides = [1, 1]} : vector<8x128xf32> to vector<8x32xf32>
    %cst_94 = arith.constant 2.000000e+00 : f32
    %359 = vector.broadcast %cst_94 : f32 to vector<8x32xf32>
    %360 = arith.mulf %359, %358 : vector<8x32xf32>
    %cst_95 = arith.constant 1.000000e+00 : f32
    %361 = vector.broadcast %cst_95 : f32 to vector<8x32xf32>
    %362 = arith.subf %360, %361 : vector<8x32xf32>
    %363 = vector.extract_strided_slice %355 {offsets = [0, 96], sizes = [8, 32], strides = [1, 1]} : vector<8x128xf32> to vector<8x32xf32>
    %364 = arith.mulf %357, %323 : vector<8x32xf32>
    %365 = arith.mulf %356, %362 : vector<8x32xf32>
    %366 = arith.addf %364, %365 : vector<8x32xf32>
    %367 = math.tanh %366 : vector<8x32xf32>
    %368 = arith.mulf %363, %367 : vector<8x32xf32>
    %369 = tpu.concatenate %67, %110, %153, %196, %239, %282, %325, %368 in 0 : vector<8x32xf32>, vector<8x32xf32>, vector<8x32xf32>, vector<8x32xf32>, vector<8x32xf32>, vector<8x32xf32>, vector<8x32xf32>, vector<8x32xf32> -> vector<64x32xf32>
    %c0_96 = arith.constant 0 : index
    %c0_97 = arith.constant 0 : index
    %370 = vector.load %arg9[%c0_96, %c0_97] : memref<32x128xf32, #tpu.memory_space<vmem>>, vector<32x128xf32>
    %cst_98 = arith.constant dense<0.000000e+00> : vector<64x128xf32>
    %371 = tpu.matmul %369, %370, %cst_98 {dimension_numbers = #tpu.dot_dimension_numbers<[1], [0], [0], [1], [0, 0, 1, 1], [], []>} : vector<64x32xf32>, vector<32x128xf32>, vector<64x128xf32> -> vector<64x128xf32>
    %c0_99 = arith.constant 0 : index
    %c0_100 = arith.constant 0 : index
    %372 = vector.load %arg10[%c0_99, %c0_100] : memref<1x128xf32, #tpu.memory_space<vmem>>, vector<1x128xf32>
    %373 = vector.broadcast %372 : vector<1x128xf32> to vector<64x128xf32>
    %374 = arith.addf %371, %373 : vector<64x128xf32>
    %c0_101 = arith.constant 0 : index
    %c0_102 = arith.constant 0 : index
    %375 = vector.load %arg11[%c0_101, %c0_102] : memref<64x128xf32, #tpu.memory_space<vmem>>, vector<64x128xf32>
    tpu.vector_store %arg11[%c0_101, %c0_102], %374 {strides = array<i32>} : memref<64x128xf32, #tpu.memory_space<vmem>>, vector<64x128xf32>,
    %c0_103 = arith.constant 0 : index
    %c0_104 = arith.constant 0 : index
    %c0_105 = arith.constant 0 : index
    %376 = vector.load %arg12[%c0_103, %c0_104, %c0_105] : memref<2x8x32xf32, #tpu.memory_space<vmem>>, vector<1x8x32xf32>
    %377 = vector.shape_cast %376 : vector<1x8x32xf32> to vector<8x32xf32>
    %378 = vector.shape_cast %346 : vector<8x32xf32> to vector<1x8x32xf32>
    tpu.vector_store %arg12[%c0_103, %c0_104, %c0_105], %378 {strides = array<i32>} : memref<2x8x32xf32, #tpu.memory_space<vmem>>, vector<1x8x32xf32>,
    %c0_106 = arith.constant 0 : index
    %c0_107 = arith.constant 0 : index
    %c0_108 = arith.constant 0 : index
    %379 = vector.load %arg13[%c0_106, %c0_107, %c0_108] : memref<2x8x32xf32, #tpu.memory_space<vmem>>, vector<1x8x32xf32>
    %380 = vector.shape_cast %379 : vector<1x8x32xf32> to vector<8x32xf32>
    %381 = vector.shape_cast %344 : vector<8x32xf32> to vector<1x8x32xf32>
    tpu.vector_store %arg13[%c0_106, %c0_107, %c0_108], %381 {strides = array<i32>} : memref<2x8x32xf32, #tpu.memory_space<vmem>>, vector<1x8x32xf32>,
    %c1_109 = arith.constant 1 : index
    %c0_110 = arith.constant 0 : index
    %c0_111 = arith.constant 0 : index
    %382 = vector.load %arg12[%c1_109, %c0_110, %c0_111] : memref<2x8x32xf32, #tpu.memory_space<vmem>>, vector<1x8x32xf32>
    %383 = vector.shape_cast %382 : vector<1x8x32xf32> to vector<8x32xf32>
    %384 = vector.shape_cast %368 : vector<8x32xf32> to vector<1x8x32xf32>
    tpu.vector_store %arg12[%c1_109, %c0_110, %c0_111], %384 {strides = array<i32>} : memref<2x8x32xf32, #tpu.memory_space<vmem>>, vector<1x8x32xf32>,
    %c1_112 = arith.constant 1 : index
    %c0_113 = arith.constant 0 : index
    %c0_114 = arith.constant 0 : index
    %385 = vector.load %arg13[%c1_112, %c0_113, %c0_114] : memref<2x8x32xf32, #tpu.memory_space<vmem>>, vector<1x8x32xf32>
    %386 = vector.shape_cast %385 : vector<1x8x32xf32> to vector<8x32xf32>
    %387 = vector.shape_cast %366 : vector<8x32xf32> to vector<1x8x32xf32>
    tpu.vector_store %arg13[%c1_112, %c0_113, %c0_114], %387 {strides = array<i32>} : memref<2x8x32xf32, #tpu.memory_space<vmem>>, vector<1x8x32xf32>,
    return
  }
}

</mosaic_0001>

<llo_original>
// kernel: tpu_custom_call.1
$region0: #{tpu_custom_call.1}
  #allocation0 [shape = 'u32[]', space=smem, size = 0x4, offset = 0x4, fixed_abs, tag = 'smem constant byte address 0x4 - core index']
  #allocation1 [shape = 'u32[144,128]{1,0:T(1,128)}', space=vmem, size = 0x12000, scoped, tag = 'internal scratch']
  %s0 = inlined_call_operand.vmem [shape: s32[64,1], index: 0, kind: input, shape index: {}]
  %s1 = inlined_call_operand.vmem [shape: f32[64,128], index: 1, kind: input, shape index: {}]
  %s2 = inlined_call_operand.hbm [shape: f32[2,8,32], index: 2, kind: input, shape index: {}]
  %s3 = inlined_call_operand.hbm [shape: f32[2,8,32], index: 3, kind: input, shape index: {}]
  %s4 = inlined_call_operand.vmem [shape: f32[1,128], index: 4, kind: input, shape index: {}]
  %s5 = inlined_call_operand.hbm [shape: f32[32,128], index: 5, kind: input, shape index: {}]
  %s6 = inlined_call_operand.hbm [shape: f32[32,128], index: 6, kind: input, shape index: {}]
  %s7 = inlined_call_operand.hbm [shape: f32[32,128], index: 7, kind: input, shape index: {}]
  %s8 = inlined_call_operand.vmem [shape: f32[1,128], index: 8, kind: input, shape index: {}]
  %s9 = inlined_call_operand.vmem [shape: f32[32,128], index: 9, kind: input, shape index: {}]
  %s10 = inlined_call_operand.vmem [shape: f32[1,128], index: 10, kind: input, shape index: {}]
  %s11 = inlined_call_operand.hbm [shape: f32[64,128], index: 11, kind: output, shape index: {0}]
  %s12 = inlined_call_operand.hbm [shape: f32[2,8,32], index: 12, kind: output, shape index: {1}]
  %s13 = inlined_call_operand.hbm [shape: f32[2,8,32], index: 13, kind: output, shape index: {2}]
  %14 = xla_tuple %s11, %s12, %s13
  %s15 = sld [smem:[#allocation0]]
  $region90: #{tpu_custom_call.1} parent=0
    _
  %s17 = ssub.s32 1, %s15
  %s18 = scalar_select 0, %s17, %s15
  $region1: #{tpu_custom_call.1} parent=0
    #allocation2 [shape = 'u8[8192]{0}', space=vmem, size = 0x2000, scoped, tag = 'input window, operand 2, single buffered']
    #allocation3 [shape = 's32[1]{0}', space=sflag, size = 0x4, scoped, tag = 'scoped memory for tpu_custom_call.1']
    #allocation4 [shape = 's32[1]{0}', space=sflag, size = 0x4, scoped, tag = 'scoped memory for tpu_custom_call.1']
    #allocation5 [shape = 'u8[8192]{0}', space=vmem, size = 0x2000, scoped, tag = 'input window, operand 3, single buffered']
    #allocation6 [shape = 's32[1]{0}', space=sflag, size = 0x4, scoped, tag = 'scoped memory for tpu_custom_call.1']
    #allocation7 [shape = 'u8[16384]{0}', space=vmem, size = 0x4000, scoped, tag = 'input window, operand 5, single buffered']
    #allocation8 [shape = 'u8[16384]{0}', space=vmem, size = 0x4000, scoped, tag = 'input window, operand 6, single buffered']
    #allocation9 [shape = 's32[1]{0}', space=sflag, size = 0x4, scoped, tag = 'scoped memory for tpu_custom_call.1']
    #allocation10 [shape = 'u8[16384]{0}', space=vmem, size = 0x4000, scoped, tag = 'input window, operand 7, single buffered']
    #allocation11 [shape = 'u8[32768]{0}', space=vmem, size = 0x8000, scoped, tag = 'output window, operand 0, single buffered']
    #allocation12 [shape = 'u8[8192]{0}', space=vmem, size = 0x2000, scoped, tag = 'output window, operand 1, single buffered']
    #allocation13 [shape = 's32[1]{0}', space=sflag, size = 0x4, scoped, tag = 'scoped memory for tpu_custom_call.1']
    #allocation14 [shape = 'u8[8192]{0}', space=vmem, size = 0x2000, scoped, tag = 'output window, operand 2, single buffered']
    %19 = vsyncpa [#allocation3], 0
    %20 = vsyncpa [#allocation6], 0
    %21 = vsyncpa [#allocation9], 0
    %22 = vsyncpa [#allocation4], 0
    %23 = vsyncpa [#allocation13], 0
    // Predicated region
    $region2: #{tpu_custom_call.1} parent=1 // pred_check
      _
    $region3: #{tpu_custom_call.1} parent=1 // pred_check_branch
      %25 = sbr.rel (0) target = $region5
    $region4: #{tpu_custom_call.1} parent=1 // pred_region
      _
    $region5: #{tpu_custom_call.1} parent=1 // pred_fallthru
      _
    // Predicated region
    $region6: #{tpu_custom_call.1} parent=1 // pred_check
      _
    $region7: #{tpu_custom_call.1} parent=1 // pred_check_branch
      %27 = sbr.rel (0) target = $region9
    $region8: #{tpu_custom_call.1} parent=1 // pred_region
      _
    $region9: #{tpu_custom_call.1} parent=1 // pred_fallthru
      _
    // Predicated region
    $region10: #{tpu_custom_call.1} parent=1 // pred_check
      _
    $region11: #{tpu_custom_call.1} parent=1 // pred_check_branch
      %29 = sbr.rel (0) target = $region13
    $region12: #{tpu_custom_call.1} parent=1 // pred_region
      %s31 = ssub.s32 256, 256
      %32 = vsyncadd [#allocation3], %s31
      %s33 = sshll.u32 [#allocation2], 4
      %s34 = int_to_ptr.vmem [resolvable:$true] %s33
      %39 = dma.hbm_to_vmem [thread:$0]  %s2, 256, %s34, [#allocation3], 128, 128, 8
    $region13: #{tpu_custom_call.1} parent=1 // pred_fallthru
      _
    // Predicated region
    $region14: #{tpu_custom_call.1} parent=1 // pred_check
      _
    $region15: #{tpu_custom_call.1} parent=1 // pred_check_branch
      %41 = sbr.rel (0) target = $region17
    $region16: #{tpu_custom_call.1} parent=1 // pred_region
      %s43 = ssub.s32 256, 256
      %44 = vsyncadd [#allocation6], %s43
      %s45 = sshll.u32 [#allocation5], 4
      %s46 = int_to_ptr.vmem [resolvable:$true] %s45
      %51 = dma.hbm_to_vmem [thread:$0]  %s3, 256, %s46, [#allocation6], 128, 128, 8
    $region17: #{tpu_custom_call.1} parent=1 // pred_fallthru
      _
    // Predicated region
    $region18: #{tpu_custom_call.1} parent=1 // pred_check
      _
    $region19: #{tpu_custom_call.1} parent=1 // pred_check_branch
      %53 = sbr.rel (0) target = $region21
    $region20: #{tpu_custom_call.1} parent=1 // pred_region
      _
    $region21: #{tpu_custom_call.1} parent=1 // pred_fallthru
      _
    // Predicated region
    $region22: #{tpu_custom_call.1} parent=1 // pred_check
      _
    $region23: #{tpu_custom_call.1} parent=1 // pred_check_branch
      %55 = sbr.rel (0) target = $region25
    $region24: #{tpu_custom_call.1} parent=1 // pred_region
      %s57 = ssub.s32 512, 512
      %58 = vsyncadd [#allocation6], %s57
      %s59 = sshll.u32 [#allocation7], 4
      %s60 = int_to_ptr.vmem [resolvable:$true] %s59
      %65 = dma.hbm_to_vmem [thread:$0]  %s5, 512, %s60, [#allocation6], 128, 128, 8
    $region25: #{tpu_custom_call.1} parent=1 // pred_fallthru
      _
    // Predicated region
    $region26: #{tpu_custom_call.1} parent=1 // pred_check
      _
    $region27: #{tpu_custom_call.1} parent=1 // pred_check_branch
      %67 = sbr.rel (0) target = $region29
    $region28: #{tpu_custom_call.1} parent=1 // pred_region
      %s69 = ssub.s32 512, 512
      %70 = vsyncadd [#allocation9], %s69
      %s71 = sshll.u32 [#allocation8], 4
      %s72 = int_to_ptr.vmem [resolvable:$true] %s71
      %77 = dma.hbm_to_vmem [thread:$0]  %s6, 512, %s72, [#allocation9], 128, 128, 8
    $region29: #{tpu_custom_call.1} parent=1 // pred_fallthru
      _
    // Predicated region
    $region30: #{tpu_custom_call.1} parent=1 // pred_check
      _
    $region31: #{tpu_custom_call.1} parent=1 // pred_check_branch
      %79 = sbr.rel (0) target = $region33
    $region32: #{tpu_custom_call.1} parent=1 // pred_region
      %s81 = ssub.s32 512, 512
      %82 = vsyncadd [#allocation9], %s81
      %s83 = sshll.u32 [#allocation10], 4
      %s84 = int_to_ptr.vmem [resolvable:$true] %s83
      %89 = dma.hbm_to_vmem [thread:$0]  %s7, 512, %s84, [#allocation9], 128, 128, 8
    $region33: #{tpu_custom_call.1} parent=1 // pred_fallthru
      _
    // Predicated region
    $region34: #{tpu_custom_call.1} parent=1 // pred_check
      _
    $region35: #{tpu_custom_call.1} parent=1 // pred_check_branch
      %91 = sbr.rel (0) target = $region37
    $region36: #{tpu_custom_call.1} parent=1 // pred_region
      _
    $region37: #{tpu_custom_call.1} parent=1 // pred_fallthru
      _
    // Predicated region
    $region38: #{tpu_custom_call.1} parent=1 // pred_check
      _
    $region39: #{tpu_custom_call.1} parent=1 // pred_check_branch
      %93 = sbr.rel (0) target = $region41
    $region40: #{tpu_custom_call.1} parent=1 // pred_region
      _
    $region41: #{tpu_custom_call.1} parent=1 // pred_fallthru
      _
    // Predicated region
    $region42: #{tpu_custom_call.1} parent=1 // pred_check
      _
    $region43: #{tpu_custom_call.1} parent=1 // pred_check_branch
      %95 = sbr.rel (0) target = $region45
    $region44: #{tpu_custom_call.1} parent=1 // pred_region
      _
    $region45: #{tpu_custom_call.1} parent=1 // pred_fallthru
      _
    // Predicated region
    $region46: #{tpu_custom_call.1} parent=1 // pred_check
      _
    $region47: #{tpu_custom_call.1} parent=1 // pred_check_branch
      %97 = sbr.rel (0) target = $region49
    $region48: #{tpu_custom_call.1} parent=1 // pred_region
      %98 = dma.done [#allocation3], 256
    $region49: #{tpu_custom_call.1} parent=1 // pred_fallthru
      _
    // Predicated region
    $region50: #{tpu_custom_call.1} parent=1 // pred_check
      _
    $region51: #{tpu_custom_call.1} parent=1 // pred_check_branch
      %100 = sbr.rel (0) target = $region53
    $region52: #{tpu_custom_call.1} parent=1 // pred_region
      %101 = dma.done [#allocation6], 256
    $region53: #{tpu_custom_call.1} parent=1 // pred_fallthru
      _
    // Predicated region
    $region54: #{tpu_custom_call.1} parent=1 // pred_check
      _
    $region55: #{tpu_custom_call.1} parent=1 // pred_check_branch
      %103 = sbr.rel (0) target = $region57
    $region56: #{tpu_custom_call.1} parent=1 // pred_region
      %104 = dma.done [#allocation6], 512
    $region57: #{tpu_custom_call.1} parent=1 // pred_fallthru
      _
    // Predicated region
    $region58: #{tpu_custom_call.1} parent=1 // pred_check
      _
    $region59: #{tpu_custom_call.1} parent=1 // pred_check_branch
      %106 = sbr.rel (0) target = $region61
    $region60: #{tpu_custom_call.1} parent=1 // pred_region
      %107 = dma.done [#allocation9], 512
    $region61: #{tpu_custom_call.1} parent=1 // pred_fallthru
      _
    // Predicated region
    $region62: #{tpu_custom_call.1} parent=1 // pred_check
      _
    $region63: #{tpu_custom_call.1} parent=1 // pred_check_branch
      %109 = sbr.rel (0) target = $region65
    $region64: #{tpu_custom_call.1} parent=1 // pred_region
      %110 = dma.done [#allocation9], 512
    $region65: #{tpu_custom_call.1} parent=1 // pred_fallthru
      _
    %v111 = vld [vmem:[%s0] sm:$0xff]
    %v112 = vld [vmem:[%s0 + $0x8] sm:$0xff]
    %v113 = vld [vmem:[%s0 + $0x10] sm:$0xff]
    %v114 = vld [vmem:[%s0 + $0x18] sm:$0xff]
    %v115 = vld [vmem:[%s0 + $0x20] sm:$0xff]
    %v116 = vld [vmem:[%s0 + $0x28] sm:$0xff]
    %v117 = vld [vmem:[%s0 + $0x30] sm:$0xff]
    %v118 = vld [vmem:[%s0 + $0x38] sm:$0xff]
    %v119 = vlaneseq
    %v120 = vand.u32 %v119, 127
    %121 = vset.pattern.permute.xlu0 0
    %122 = vperm.xlu0 %121, %v111
    %v123 = vpop.permute.xlu0 %122
    %124 = vset.pattern.permute.xlu0 0
    %125 = vperm.xlu0 %124, %v112
    %v126 = vpop.permute.xlu0 %125
    %127 = vset.pattern.permute.xlu0 0
    %128 = vperm.xlu0 %127, %v113
    %v129 = vpop.permute.xlu0 %128
    %130 = vset.pattern.permute.xlu0 0
    %131 = vperm.xlu0 %130, %v114
    %v132 = vpop.permute.xlu0 %131
    %133 = vset.pattern.permute.xlu0 0
    %134 = vperm.xlu0 %133, %v115
    %v135 = vpop.permute.xlu0 %134
    %136 = vset.pattern.permute.xlu0 0
    %137 = vperm.xlu0 %136, %v116
    %v138 = vpop.permute.xlu0 %137
    %139 = vset.pattern.permute.xlu0 0
    %140 = vperm.xlu0 %139, %v117
    %v141 = vpop.permute.xlu0 %140
    %142 = vset.pattern.permute.xlu0 0
    %143 = vperm.xlu0 %142, %v118
    %v144 = vpop.permute.xlu0 %143
    %vm145 = vcmp.eq.s32.totalorder %v120, %v123
    %vm146 = vcmp.eq.s32.totalorder %v120, %v126
    %vm147 = vcmp.eq.s32.totalorder %v120, %v129
    %vm148 = vcmp.eq.s32.totalorder %v120, %v132
    %vm149 = vcmp.eq.s32.totalorder %v120, %v135
    %vm150 = vcmp.eq.s32.totalorder %v120, %v138
    %vm151 = vcmp.eq.s32.totalorder %v120, %v141
    %vm152 = vcmp.eq.s32.totalorder %v120, %v144
    %v153 = vsel %vm145, 1, 0
    %v154 = vsel %vm146, 1, 0
    %v155 = vsel %vm147, 1, 0
    %v156 = vsel %vm148, 1, 0
    %v157 = vsel %vm149, 1, 0
    %v158 = vsel %vm150, 1, 0
    %v159 = vsel %vm151, 1, 0
    %v160 = vsel %vm152, 1, 0
    %v161 = vcvt.s32.f32 %v153
    %v162 = vcvt.s32.f32 %v154
    %v163 = vcvt.s32.f32 %v155
    %v164 = vcvt.s32.f32 %v156
    %v165 = vcvt.s32.f32 %v157
    %v166 = vcvt.s32.f32 %v158
    %v167 = vcvt.s32.f32 %v159
    %v168 = vcvt.s32.f32 %v160
    %v169 = vld [vmem:[%s1] sm:$0xff]
    %v170 = vld [vmem:[%s1 + $0x8] sm:$0xff]
    %v171 = vld [vmem:[%s1 + $0x10] sm:$0xff]
    %v172 = vld [vmem:[%s1 + $0x18] sm:$0xff]
    %v173 = vld [vmem:[%s1 + $0x20] sm:$0xff]
    %v174 = vld [vmem:[%s1 + $0x28] sm:$0xff]
    %v175 = vld [vmem:[%s1 + $0x30] sm:$0xff]
    %v176 = vld [vmem:[%s1 + $0x38] sm:$0xff]
    %v177 = vld [vmem:[%s4] sm:$0x1]
    %v179 = vlaneseq
    %v180 = vshrl.u32 %v179, 7
    %v181 = vsub.s32 0, %v180
    %v182 = vrot.slane %v177, %v181
    %vm184 = vcmask 523264
    %v186 = vsel %vm184, %v161, 0
    %v189 = vsel %vm184, %v162, 0
    %v192 = vsel %vm184, %v163, 0
    %v195 = vsel %vm184, %v164, 0
    %v198 = vsel %vm184, %v165, 0
    %v201 = vsel %vm184, %v166, 0
    %v204 = vsel %vm184, %v167, 0
    %v207 = vsel %vm184, %v168, 0
    %209 = vmatprep.subr.mxu0 0.0
    %210 = vmatpush1.msra.mxu0 %v169
    %211 = vmatprep.subr.mxu0 0.0
    %212 = vmatpush1.msra.mxu0 %v170
    %213 = vmatprep.subr.mxu0 0.0
    %214 = vmatpush1.msra.mxu0 %v171
    %215 = vmatprep.subr.mxu0 0.0
    %216 = vmatpush1.msra.mxu0 %v172
    %217 = vmatprep.subr.mxu0 0.0
    %218 = vmatpush1.msra.mxu0 %v173
    %219 = vmatprep.subr.mxu0 0.0
    %220 = vmatpush1.msra.mxu0 %v174
    %221 = vmatprep.subr.mxu0 0.0
    %222 = vmatpush1.msra.mxu0 %v175
    %223 = vmatprep.subr.mxu0 0.0
    %224 = vmatpush1.msra.mxu0 %v176
    %225 = vmatprep.subr.mxu0 0.0
    %226 = vmatpush1.msra.mxu0 0.0
    %227 = vmatprep.subr.mxu0 0.0
    %228 = vmatpush1.msra.mxu0 0.0
    %229 = vmatprep.subr.mxu0 0.0
    %230 = vmatpush1.msra.mxu0 0.0
    %231 = vmatprep.subr.mxu0 0.0
    %232 = vmatpush1.msra.mxu0 0.0
    %233 = vmatprep.subr.mxu0 0.0
    %234 = vmatpush1.msra.mxu0 0.0
    %235 = vmatprep.subr.mxu0 0.0
    %236 = vmatpush1.msra.mxu0 0.0
    %237 = vmatprep.subr.mxu0 0.0
    %238 = vmatpush1.msra.mxu0 0.0
    %239 = vmatprep.subr.mxu0 0.0
    %240 = vmatpush1.msra.mxu0 0.0
    %241 = vmatprep.subr.mxu0 0.0
    %242 = vmatpush1.msra.mxu0 0.0
    %243 = vmatprep.subr.mxu0 0.0
    %244 = vmatpush1.msra.mxu0 0.0
    %245 = vmatprep.subr.mxu0 0.0
    %246 = vmatpush1.msra.mxu0 0.0
    %247 = vmatprep.subr.mxu0 0.0
    %248 = vmatpush1.msra.mxu0 0.0
    %249 = vmatprep.subr.mxu0 0.0
    %250 = vmatpush1.msra.mxu0 0.0
    %251 = vmatprep.subr.mxu0 0.0
    %252 = vmatpush1.msra.mxu0 0.0
    %253 = vmatprep.subr.mxu0 0.0
    %254 = vmatpush1.msra.mxu0 0.0
    %255 = vmatprep.subr.mxu0 0.0
    %256 = vmatpush1.msra.mxu0 0.0
    %257 = vmatprep.subr.mxu0 0.0
    %258 = vmatpush1.msra.mxu0 0.0
    %259 = vmatprep.subr.mxu0 0.0
    %260 = vmatpush1.msra.mxu0 0.0
    %261 = vmatprep.subr.mxu0 0.0
    %262 = vmatpush1.msra.mxu0 0.0
    %263 = vmatprep.subr.mxu0 0.0
    %264 = vmatpush1.msra.mxu0 0.0
    %265 = vmatprep.subr.mxu0 0.0
    %266 = vmatpush1.msra.mxu0 0.0
    %267 = vmatprep.subr.mxu0 0.0
    %268 = vmatpush1.msra.mxu0 0.0
    %269 = vmatprep.subr.mxu0 0.0
    %270 = vmatpush1.msra.mxu0 0.0
    %271 = vmatprep.subr.mxu0 0.0
    %272 = vmatpush1.msra.mxu0 0.0
    %273 = vmatprep.mubr.f32.mxu0 0.0
    %274 = vmatmul.mubr.f32.gmra.mrb[0].mxu0 %v186
    %v275 = vpop.f32.mrb[0].mxu0
    %v276 = vadd.f32 %v182, %v275
    %v277 = vpop.f32.mrb[0].mxu0
    %278 = vmatprep.mubr.f32.mxu0 0.0
    %279 = vmatmul.mubr.f32.gmra.mrb[0].mxu0 %v189
    %v280 = vpop.f32.mrb[0].mxu0
    %v281 = vadd.f32 %v182, %v280
    %v282 = vpop.f32.mrb[0].mxu0
    %283 = vmatprep.mubr.f32.mxu0 0.0
    %284 = vmatmul.mubr.f32.gmra.mrb[0].mxu0 %v192
    %v285 = vpop.f32.mrb[0].mxu0
    %v286 = vadd.f32 %v182, %v285
    %v287 = vpop.f32.mrb[0].mxu0
    %288 = vmatprep.mubr.f32.mxu0 0.0
    %289 = vmatmul.mubr.f32.gmra.mrb[0].mxu0 %v195
    %v290 = vpop.f32.mrb[0].mxu0
    %v291 = vadd.f32 %v182, %v290
    %v292 = vpop.f32.mrb[0].mxu0
    %293 = vmatprep.mubr.f32.mxu0 0.0
    %294 = vmatmul.mubr.f32.gmra.mrb[0].mxu0 %v198
    %v295 = vpop.f32.mrb[0].mxu0
    %v296 = vadd.f32 %v182, %v295
    %v297 = vpop.f32.mrb[0].mxu0
    %298 = vmatprep.mubr.f32.mxu0 0.0
    %299 = vmatmul.mubr.f32.gmra.mrb[0].mxu0 %v201
    %v300 = vpop.f32.mrb[0].mxu0
    %v301 = vadd.f32 %v182, %v300
    %v302 = vpop.f32.mrb[0].mxu0
    %303 = vmatprep.mubr.f32.mxu0 0.0
    %304 = vmatmul.mubr.f32.gmra.mrb[0].mxu0 %v204
    %v305 = vpop.f32.mrb[0].mxu0
    %v306 = vadd.f32 %v182, %v305
    %v307 = vpop.f32.mrb[0].mxu0
    %308 = vmatprep.mubr.f32.mxu0 0.0
    %309 = vmatmul.mubr.f32.gmra.mrb[0].mxu0 %v207
    %v310 = vpop.f32.mrb[0].mxu0
    %v311 = vadd.f32 %v182, %v310
    %v312 = vpop.f32.mrb[0].mxu0
    %313 = vdwg.mxu0
    %v314 = vld [vmem:[#allocation7] sm:$0xff]
    %v315 = vld [vmem:[#allocation7 + $0x8] sm:$0xff]
    %v316 = vld [vmem:[#allocation7 + $0x10] sm:$0xff]
    %v317 = vld [vmem:[#allocation7 + $0x18] sm:$0xff]
    %v318 = vld [vmem:[#allocation8] sm:$0xff]
    %v319 = vld [vmem:[#allocation8 + $0x8] sm:$0xff]
    %v320 = vld [vmem:[#allocation8 + $0x10] sm:$0xff]
    %v321 = vld [vmem:[#allocation8 + $0x18] sm:$0xff]
    %v322 = vld [vmem:[#allocation10] sm:$0xff]
    %v323 = vld [vmem:[#allocation10 + $0x8] sm:$0xff]
    %v324 = vld [vmem:[#allocation10 + $0x10] sm:$0xff]
    %v325 = vld [vmem:[#allocation10 + $0x18] sm:$0xff]
    %v326 = vld [vmem:[%s8] sm:$0x1]
    %v328 = vlaneseq
    %v329 = vshrl.u32 %v328, 7
    %v330 = vsub.s32 0, %v329
    %v331 = vrot.slane %v326, %v330
    %v333 = vld [vmem:[#allocation2] sm:$0xff]
    %s334 = scalar_lea.vmem [#allocation2], 8
    %v335 = vld [vmem:[%s334] sm:$0xff]
    %v336 = vld [vmem:[#allocation5] sm:$0xff]
    %s337 = scalar_lea.vmem [#allocation5], 8
    %v338 = vld [vmem:[%s337] sm:$0xff]
    %vm339 = vcmask 261120
    %v341 = vsel %vm339, %v333, 0
    %343 = vmatprep.subr.mxu0 0.0
    %344 = vmatpush1.msra.mxu0 %v314
    %345 = vmatprep.subr.mxu0 0.0
    %346 = vmatpush1.msra.mxu0 %v315
    %347 = vmatprep.subr.mxu0 0.0
    %348 = vmatpush1.msra.mxu0 %v316
    %349 = vmatprep.subr.mxu0 0.0
    %350 = vmatpush1.msra.mxu0 %v317
    %351 = vmatprep.subr.mxu0 0.0
    %352 = vmatpush1.msra.mxu0 0.0
    %353 = vmatprep.subr.mxu0 0.0
    %354 = vmatpush1.msra.mxu0 0.0
    %355 = vmatprep.subr.mxu0 0.0
    %356 = vmatpush1.msra.mxu0 0.0
    %357 = vmatprep.subr.mxu0 0.0
    %358 = vmatpush1.msra.mxu0 0.0
    %359 = vmatprep.subr.mxu0 0.0
    %360 = vmatpush1.msra.mxu0 0.0
    %361 = vmatprep.subr.mxu0 0.0
    %362 = vmatpush1.msra.mxu0 0.0
    %363 = vmatprep.subr.mxu0 0.0
    %364 = vmatpush1.msra.mxu0 0.0
    %365 = vmatprep.subr.mxu0 0.0
    %366 = vmatpush1.msra.mxu0 0.0
    %367 = vmatprep.subr.mxu0 0.0
    %368 = vmatpush1.msra.mxu0 0.0
    %369 = vmatprep.subr.mxu0 0.0
    %370 = vmatpush1.msra.mxu0 0.0
    %371 = vmatprep.subr.mxu0 0.0
    %372 = vmatpush1.msra.mxu0 0.0
    %373 = vmatprep.subr.mxu0 0.0
    %374 = vmatpush1.msra.mxu0 0.0
    %375 = vmatprep.subr.mxu0 0.0
    %376 = vmatpush1.msra.mxu0 0.0
    %377 = vmatprep.subr.mxu0 0.0
    %378 = vmatpush1.msra.mxu0 0.0
    %379 = vmatprep.subr.mxu0 0.0
    %380 = vmatpush1.msra.mxu0 0.0
    %381 = vmatprep.subr.mxu0 0.0
    %382 = vmatpush1.msra.mxu0 0.0
    %383 = vmatprep.subr.mxu0 0.0
    %384 = vmatpush1.msra.mxu0 0.0
    %385 = vmatprep.subr.mxu0 0.0
    %386 = vmatpush1.msra.mxu0 0.0
    %387 = vmatprep.subr.mxu0 0.0
    %388 = vmatpush1.msra.mxu0 0.0
    %389 = vmatprep.subr.mxu0 0.0
    %390 = vmatpush1.msra.mxu0 0.0
    %391 = vmatprep.subr.mxu0 0.0
    %392 = vmatpush1.msra.mxu0 0.0
    %393 = vmatprep.subr.mxu0 0.0
    %394 = vmatpush1.msra.mxu0 0.0
    %395 = vmatprep.subr.mxu0 0.0
    %396 = vmatpush1.msra.mxu0 0.0
    %397 = vmatprep.subr.mxu0 0.0
    %398 = vmatpush1.msra.mxu0 0.0
    %399 = vmatprep.subr.mxu0 0.0
    %400 = vmatpush1.msra.mxu0 0.0
    %401 = vmatprep.subr.mxu0 0.0
    %402 = vmatpush1.msra.mxu0 0.0
    %403 = vmatprep.subr.mxu0 0.0
    %404 = vmatpush1.msra.mxu0 0.0
    %405 = vmatprep.subr.mxu0 0.0
    %406 = vmatpush1.msra.mxu0 0.0
    %407 = vmatprep.mubr.f32.mxu0 0.0
    %408 = vmatmul.mubr.f32.gmra.mrb[0].mxu0 %v341
    %v409 = vpop.f32.mrb[0].mxu0
    %v410 = vadd.f32 0.0, %v409
    %v411 = vpop.f32.mrb[0].mxu0
    %412 = vdwg.mxu0
    %v413 = vadd.f32 %v276, %v410
    %v414 = vxor.u32 %v413, 2147483648
    %v415 = vmul.f32 %v414, 1.442695
    %v416 = vpow.pop %v415
    %v417 = vadd.f32 %v416, 1.0
    %v418 = vrcp.pop %v417
    %v419 = vmul.f32 1.0, %v418
    %v420 = vmul.f32 %v419, 2.0
    %v421 = vsub.f32 %v420, 1.0
    %423 = vrot.lane.b32.xlu0 %v336, 32
    %v424 = vpop.permute.xlu0 %423
    %v426 = vmul.f32 %v419, %v424
    %428 = vrot.lane.b32.xlu0 %v421, 64
    %v429 = vpop.permute.xlu0 %428
    %v431 = vmul.f32 %v419, %v429
    %433 = vrot.lane.b32.xlu0 %v431, 32
    %v434 = vpop.permute.xlu0 %433
    %v436 = vadd.f32 %v426, %v434
    %v437 = vtanh.pop %v436
    %439 = vrot.lane.b32.xlu0 %v437, 64
    %v440 = vpop.permute.xlu0 %439
    %v442 = vmul.f32 %v419, %v440
    %v444 = vsel %vm339, %v335, 0
    %446 = vmatprep.subr.mxu0 0.0
    %447 = vmatpush1.msra.mxu0 %v322
    %448 = vmatprep.subr.mxu0 0.0
    %449 = vmatpush1.msra.mxu0 %v323
    %450 = vmatprep.subr.mxu0 0.0
    %451 = vmatpush1.msra.mxu0 %v324
    %452 = vmatprep.subr.mxu0 0.0
    %453 = vmatpush1.msra.mxu0 %v325
    %454 = vmatprep.subr.mxu0 0.0
    %455 = vmatpush1.msra.mxu0 0.0
    %456 = vmatprep.subr.mxu0 0.0
    %457 = vmatpush1.msra.mxu0 0.0
    %458 = vmatprep.subr.mxu0 0.0
    %459 = vmatpush1.msra.mxu0 0.0
    %460 = vmatprep.subr.mxu0 0.0
    %461 = vmatpush1.msra.mxu0 0.0
    %462 = vmatprep.subr.mxu0 0.0
    %463 = vmatpush1.msra.mxu0 0.0
    %464 = vmatprep.subr.mxu0 0.0
    %465 = vmatpush1.msra.mxu0 0.0
    %466 = vmatprep.subr.mxu0 0.0
    %467 = vmatpush1.msra.mxu0 0.0
    %468 = vmatprep.subr.mxu0 0.0
    %469 = vmatpush1.msra.mxu0 0.0
    %470 = vmatprep.subr.mxu0 0.0
    %471 = vmatpush1.msra.mxu0 0.0
    %472 = vmatprep.subr.mxu0 0.0
    %473 = vmatpush1.msra.mxu0 0.0
    %474 = vmatprep.subr.mxu0 0.0
    %475 = vmatpush1.msra.mxu0 0.0
    %476 = vmatprep.subr.mxu0 0.0
    %477 = vmatpush1.msra.mxu0 0.0
    %478 = vmatprep.subr.mxu0 0.0
    %479 = vmatpush1.msra.mxu0 0.0
    %480 = vmatprep.subr.mxu0 0.0
    %481 = vmatpush1.msra.mxu0 0.0
    %482 = vmatprep.subr.mxu0 0.0
    %483 = vmatpush1.msra.mxu0 0.0
    %484 = vmatprep.subr.mxu0 0.0
    %485 = vmatpush1.msra.mxu0 0.0
    %486 = vmatprep.subr.mxu0 0.0
    %487 = vmatpush1.msra.mxu0 0.0
    %488 = vmatprep.subr.mxu0 0.0
    %489 = vmatpush1.msra.mxu0 0.0
    %490 = vmatprep.subr.mxu0 0.0
    %491 = vmatpush1.msra.mxu0 0.0
    %492 = vmatprep.subr.mxu0 0.0
    %493 = vmatpush1.msra.mxu0 0.0
    %494 = vmatprep.subr.mxu0 0.0
    %495 = vmatpush1.msra.mxu0 0.0
    %496 = vmatprep.subr.mxu0 0.0
    %497 = vmatpush1.msra.mxu0 0.0
    %498 = vmatprep.subr.mxu0 0.0
    %499 = vmatpush1.msra.mxu0 0.0
    %500 = vmatprep.subr.mxu0 0.0
    %501 = vmatpush1.msra.mxu0 0.0
    %502 = vmatprep.subr.mxu0 0.0
    %503 = vmatpush1.msra.mxu0 0.0
    %504 = vmatprep.subr.mxu0 0.0
    %505 = vmatpush1.msra.mxu0 0.0
    %506 = vmatprep.subr.mxu0 0.0
    %507 = vmatpush1.msra.mxu0 0.0
    %508 = vmatprep.subr.mxu0 0.0
    %509 = vmatpush1.msra.mxu0 0.0
    %510 = vmatprep.mubr.f32.mxu0 0.0
    %511 = vmatmul.mubr.f32.gmra.mrb[0].mxu0 %v444
    %v512 = vpop.f32.mrb[0].mxu0
    %v513 = vadd.f32 0.0, %v512
    %v514 = vpop.f32.mrb[0].mxu0
    %515 = vdwg.mxu0
    %517 = vrot.lane.b32.xlu0 %v442, 32
    %v518 = vpop.permute.xlu0 %517
    %v519 = vsel %vm339, %v518, 0
    %521 = vmatprep.subr.mxu0 0.0
    %522 = vmatpush1.msra.mxu0 %v318
    %523 = vmatprep.subr.mxu0 0.0
    %524 = vmatpush1.msra.mxu0 %v319
    %525 = vmatprep.subr.mxu0 0.0
    %526 = vmatpush1.msra.mxu0 %v320
    %527 = vmatprep.subr.mxu0 0.0
    %528 = vmatpush1.msra.mxu0 %v321
    %529 = vmatprep.subr.mxu0 0.0
    %530 = vmatpush1.msra.mxu0 0.0
    %531 = vmatprep.subr.mxu0 0.0
    %532 = vmatpush1.msra.mxu0 0.0
    %533 = vmatprep.subr.mxu0 0.0
    %534 = vmatpush1.msra.mxu0 0.0
    %535 = vmatprep.subr.mxu0 0.0
    %536 = vmatpush1.msra.mxu0 0.0
    %537 = vmatprep.subr.mxu0 0.0
    %538 = vmatpush1.msra.mxu0 0.0
    %539 = vmatprep.subr.mxu0 0.0
    %540 = vmatpush1.msra.mxu0 0.0
    %541 = vmatprep.subr.mxu0 0.0
    %542 = vmatpush1.msra.mxu0 0.0
    %543 = vmatprep.subr.mxu0 0.0
    %544 = vmatpush1.msra.mxu0 0.0
    %545 = vmatprep.subr.mxu0 0.0
    %546 = vmatpush1.msra.mxu0 0.0
    %547 = vmatprep.subr.mxu0 0.0
    %548 = vmatpush1.msra.mxu0 0.0
    %549 = vmatprep.subr.mxu0 0.0
    %550 = vmatpush1.msra.mxu0 0.0
    %551 = vmatprep.subr.mxu0 0.0
    %552 = vmatpush1.msra.mxu0 0.0
    %553 = vmatprep.subr.mxu0 0.0
    %554 = vmatpush1.msra.mxu0 0.0
    %555 = vmatprep.subr.mxu0 0.0
    %556 = vmatpush1.msra.mxu0 0.0
    %557 = vmatprep.subr.mxu0 0.0
    %558 = vmatpush1.msra.mxu0 0.0
    %559 = vmatprep.subr.mxu0 0.0
    %560 = vmatpush1.msra.mxu0 0.0
    %561 = vmatprep.subr.mxu0 0.0
    %562 = vmatpush1.msra.mxu0 0.0
    %563 = vmatprep.subr.mxu0 0.0
    %564 = vmatpush1.msra.mxu0 0.0
    %565 = vmatprep.subr.mxu0 0.0
    %566 = vmatpush1.msra.mxu0 0.0
    %567 = vmatprep.subr.mxu0 0.0
    %568 = vmatpush1.msra.mxu0 0.0
    %569 = vmatprep.subr.mxu0 0.0
    %570 = vmatpush1.msra.mxu0 0.0
    %571 = vmatprep.subr.mxu0 0.0
    %572 = vmatpush1.msra.mxu0 0.0
    %573 = vmatprep.subr.mxu0 0.0
    %574 = vmatpush1.msra.mxu0 0.0
    %575 = vmatprep.subr.mxu0 0.0
    %576 = vmatpush1.msra.mxu0 0.0
    %577 = vmatprep.subr.mxu0 0.0
    %578 = vmatpush1.msra.mxu0 0.0
    %579 = vmatprep.subr.mxu0 0.0
    %580 = vmatpush1.msra.mxu0 0.0
    %581 = vmatprep.subr.mxu0 0.0
    %582 = vmatpush1.msra.mxu0 0.0
    %583 = vmatprep.subr.mxu0 0.0
    %584 = vmatpush1.msra.mxu0 0.0
    %585 = vmatprep.mubr.f32.mxu0 0.0
    %586 = vmatmul.mubr.f32.gmra.mrb[0].mxu0 %v519
    %v587 = vpop.f32.mrb[0].mxu0
    %v588 = vadd.f32 %v513, %v587
    %v589 = vpop.f32.mrb[0].mxu0
    %590 = vdwg.mxu0
    %v591 = vadd.f32 %v588, %v331
    %v592 = vxor.u32 %v591, 2147483648
    %v593 = vmul.f32 %v592, 1.442695
    %v594 = vpow.pop %v593
    %v595 = vadd.f32 %v594, 1.0
    %v596 = vrcp.pop %v595
    %v597 = vmul.f32 1.0, %v596
    %v598 = vmul.f32 %v597, 2.0
    %v599 = vsub.f32 %v598, 1.0
    %601 = vrot.lane.b32.xlu0 %v338, 32
    %v602 = vpop.permute.xlu0 %601
    %v604 = vmul.f32 %v597, %v602
    %606 = vrot.lane.b32.xlu0 %v599, 64
    %v607 = vpop.permute.xlu0 %606
    %v609 = vmul.f32 %v597, %v607
    %611 = vrot.lane.b32.xlu0 %v609, 32
    %v612 = vpop.permute.xlu0 %611
    %v614 = vadd.f32 %v604, %v612
    %v615 = vtanh.pop %v614
    %617 = vrot.lane.b32.xlu0 %v615, 64
    %v618 = vpop.permute.xlu0 %617
    %v620 = vmul.f32 %v597, %v618
    %621 = vmatprep.subr.mxu0 0.0
    %622 = vmatpush1.msra.mxu0 %v314
    %623 = vmatprep.subr.mxu0 0.0
    %624 = vmatpush1.msra.mxu0 %v315
    %625 = vmatprep.subr.mxu0 0.0
    %626 = vmatpush1.msra.mxu0 %v316
    %627 = vmatprep.subr.mxu0 0.0
    %628 = vmatpush1.msra.mxu0 %v317
    %629 = vmatprep.subr.mxu0 0.0
    %630 = vmatpush1.msra.mxu0 0.0
    %631 = vmatprep.subr.mxu0 0.0
    %632 = vmatpush1.msra.mxu0 0.0
    %633 = vmatprep.subr.mxu0 0.0
    %634 = vmatpush1.msra.mxu0 0.0
    %635 = vmatprep.subr.mxu0 0.0
    %636 = vmatpush1.msra.mxu0 0.0
    %637 = vmatprep.subr.mxu0 0.0
    %638 = vmatpush1.msra.mxu0 0.0
    %639 = vmatprep.subr.mxu0 0.0
    %640 = vmatpush1.msra.mxu0 0.0
    %641 = vmatprep.subr.mxu0 0.0
    %642 = vmatpush1.msra.mxu0 0.0
    %643 = vmatprep.subr.mxu0 0.0
    %644 = vmatpush1.msra.mxu0 0.0
    %645 = vmatprep.subr.mxu0 0.0
    %646 = vmatpush1.msra.mxu0 0.0
    %647 = vmatprep.subr.mxu0 0.0
    %648 = vmatpush1.msra.mxu0 0.0
    %649 = vmatprep.subr.mxu0 0.0
    %650 = vmatpush1.msra.mxu0 0.0
    %651 = vmatprep.subr.mxu0 0.0
    %652 = vmatpush1.msra.mxu0 0.0
    %653 = vmatprep.subr.mxu0 0.0
    %654 = vmatpush1.msra.mxu0 0.0
    %655 = vmatprep.subr.mxu0 0.0
    %656 = vmatpush1.msra.mxu0 0.0
    %657 = vmatprep.subr.mxu0 0.0
    %658 = vmatpush1.msra.mxu0 0.0
    %659 = vmatprep.subr.mxu0 0.0
    %660 = vmatpush1.msra.mxu0 0.0
    %661 = vmatprep.subr.mxu0 0.0
    %662 = vmatpush1.msra.mxu0 0.0
    %663 = vmatprep.subr.mxu0 0.0
    %664 = vmatpush1.msra.mxu0 0.0
    %665 = vmatprep.subr.mxu0 0.0
    %666 = vmatpush1.msra.mxu0 0.0
    %667 = vmatprep.subr.mxu0 0.0
    %668 = vmatpush1.msra.mxu0 0.0
    %669 = vmatprep.subr.mxu0 0.0
    %670 = vmatpush1.msra.mxu0 0.0
    %671 = vmatprep.subr.mxu0 0.0
    %672 = vmatpush1.msra.mxu0 0.0
    %673 = vmatprep.subr.mxu0 0.0
    %674 = vmatpush1.msra.mxu0 0.0
    %675 = vmatprep.subr.mxu0 0.0
    %676 = vmatpush1.msra.mxu0 0.0
    %677 = vmatprep.subr.mxu0 0.0
    %678 = vmatpush1.msra.mxu0 0.0
    %679 = vmatprep.subr.mxu0 0.0
    %680 = vmatpush1.msra.mxu0 0.0
    %681 = vmatprep.subr.mxu0 0.0
    %682 = vmatpush1.msra.mxu0 0.0
    %683 = vmatprep.subr.mxu0 0.0
    %684 = vmatpush1.msra.mxu0 0.0
    %685 = vmatprep.mubr.f32.mxu0 0.0
    %686 = vmatmul.mubr.f32.gmra.mrb[0].mxu0 %v519
    %v687 = vpop.f32.mrb[0].mxu0
    %v688 = vadd.f32 0.0, %v687
    %v689 = vpop.f32.mrb[0].mxu0
    %690 = vdwg.mxu0
    %v691 = vadd.f32 %v281, %v688
    %v692 = vxor.u32 %v691, 2147483648
    %v693 = vmul.f32 %v692, 1.442695
    %v694 = vpow.pop %v693
    %v695 = vadd.f32 %v694, 1.0
    %v696 = vrcp.pop %v695
    %v697 = vmul.f32 1.0, %v696
    %v698 = vmul.f32 %v697, 2.0
    %v699 = vsub.f32 %v698, 1.0
    %v700 = vmul.f32 %v697, %v436
    %702 = vrot.lane.b32.xlu0 %v699, 64
    %v703 = vpop.permute.xlu0 %702
    %v705 = vmul.f32 %v697, %v703
    %707 = vrot.lane.b32.xlu0 %v705, 32
    %v708 = vpop.permute.xlu0 %707
    %v710 = vadd.f32 %v700, %v708
    %v711 = vtanh.pop %v710
    %713 = vrot.lane.b32.xlu0 %v711, 64
    %v714 = vpop.permute.xlu0 %713
    %v716 = vmul.f32 %v697, %v714
    %718 = vrot.lane.b32.xlu0 %v620, 32
    %v719 = vpop.permute.xlu0 %718
    %v720 = vsel %vm339, %v719, 0
    %722 = vmatprep.subr.mxu0 0.0
    %723 = vmatpush1.msra.mxu0 %v322
    %724 = vmatprep.subr.mxu0 0.0
    %725 = vmatpush1.msra.mxu0 %v323
    %726 = vmatprep.subr.mxu0 0.0
    %727 = vmatpush1.msra.mxu0 %v324
    %728 = vmatprep.subr.mxu0 0.0
    %729 = vmatpush1.msra.mxu0 %v325
    %730 = vmatprep.subr.mxu0 0.0
    %731 = vmatpush1.msra.mxu0 0.0
    %732 = vmatprep.subr.mxu0 0.0
    %733 = vmatpush1.msra.mxu0 0.0
    %734 = vmatprep.subr.mxu0 0.0
    %735 = vmatpush1.msra.mxu0 0.0
    %736 = vmatprep.subr.mxu0 0.0
    %737 = vmatpush1.msra.mxu0 0.0
    %738 = vmatprep.subr.mxu0 0.0
    %739 = vmatpush1.msra.mxu0 0.0
    %740 = vmatprep.subr.mxu0 0.0
    %741 = vmatpush1.msra.mxu0 0.0
    %742 = vmatprep.subr.mxu0 0.0
    %743 = vmatpush1.msra.mxu0 0.0
    %744 = vmatprep.subr.mxu0 0.0
    %745 = vmatpush1.msra.mxu0 0.0
    %746 = vmatprep.subr.mxu0 0.0
    %747 = vmatpush1.msra.mxu0 0.0
    %748 = vmatprep.subr.mxu0 0.0
    %749 = vmatpush1.msra.mxu0 0.0
    %750 = vmatprep.subr.mxu0 0.0
    %751 = vmatpush1.msra.mxu0 0.0
    %752 = vmatprep.subr.mxu0 0.0
    %753 = vmatpush1.msra.mxu0 0.0
    %754 = vmatprep.subr.mxu0 0.0
    %755 = vmatpush1.msra.mxu0 0.0
    %756 = vmatprep.subr.mxu0 0.0
    %757 = vmatpush1.msra.mxu0 0.0
    %758 = vmatprep.subr.mxu0 0.0
    %759 = vmatpush1.msra.mxu0 0.0
    %760 = vmatprep.subr.mxu0 0.0
    %761 = vmatpush1.msra.mxu0 0.0
    %762 = vmatprep.subr.mxu0 0.0
    %763 = vmatpush1.msra.mxu0 0.0
    %764 = vmatprep.subr.mxu0 0.0
    %765 = vmatpush1.msra.mxu0 0.0
    %766 = vmatprep.subr.mxu0 0.0
    %767 = vmatpush1.msra.mxu0 0.0
    %768 = vmatprep.subr.mxu0 0.0
    %769 = vmatpush1.msra.mxu0 0.0
    %770 = vmatprep.subr.mxu0 0.0
    %771 = vmatpush1.msra.mxu0 0.0
    %772 = vmatprep.subr.mxu0 0.0
    %773 = vmatpush1.msra.mxu0 0.0
    %774 = vmatprep.subr.mxu0 0.0
    %775 = vmatpush1.msra.mxu0 0.0
    %776 = vmatprep.subr.mxu0 0.0
    %777 = vmatpush1.msra.mxu0 0.0
    %778 = vmatprep.subr.mxu0 0.0
    %779 = vmatpush1.msra.mxu0 0.0
    %780 = vmatprep.subr.mxu0 0.0
    %781 = vmatpush1.msra.mxu0 0.0
    %782 = vmatprep.subr.mxu0 0.0
    %783 = vmatpush1.msra.mxu0 0.0
    %784 = vmatprep.subr.mxu0 0.0
    %785 = vmatpush1.msra.mxu0 0.0
    %786 = vmatprep.mubr.f32.mxu0 0.0
    %787 = vmatmul.mubr.f32.gmra.mrb[0].mxu0 %v720
    %v788 = vpop.f32.mrb[0].mxu0
    %v789 = vadd.f32 0.0, %v788
    %v790 = vpop.f32.mrb[0].mxu0
    %791 = vdwg.mxu0
    %793 = vrot.lane.b32.xlu0 %v716, 32
    %v794 = vpop.permute.xlu0 %793
    %v795 = vsel %vm339, %v794, 0
    %797 = vmatprep.subr.mxu0 0.0
    %798 = vmatpush1.msra.mxu0 %v318
    %799 = vmatprep.subr.mxu0 0.0
    %800 = vmatpush1.msra.mxu0 %v319
    %801 = vmatprep.subr.mxu0 0.0
    %802 = vmatpush1.msra.mxu0 %v320
    %803 = vmatprep.subr.mxu0 0.0
    %804 = vmatpush1.msra.mxu0 %v321
    %805 = vmatprep.subr.mxu0 0.0
    %806 = vmatpush1.msra.mxu0 0.0
    %807 = vmatprep.subr.mxu0 0.0
    %808 = vmatpush1.msra.mxu0 0.0
    %809 = vmatprep.subr.mxu0 0.0
    %810 = vmatpush1.msra.mxu0 0.0
    %811 = vmatprep.subr.mxu0 0.0
    %812 = vmatpush1.msra.mxu0 0.0
    %813 = vmatprep.subr.mxu0 0.0
    %814 = vmatpush1.msra.mxu0 0.0
    %815 = vmatprep.subr.mxu0 0.0
    %816 = vmatpush1.msra.mxu0 0.0
    %817 = vmatprep.subr.mxu0 0.0
    %818 = vmatpush1.msra.mxu0 0.0
    %819 = vmatprep.subr.mxu0 0.0
    %820 = vmatpush1.msra.mxu0 0.0
    %821 = vmatprep.subr.mxu0 0.0
    %822 = vmatpush1.msra.mxu0 0.0
    %823 = vmatprep.subr.mxu0 0.0
    %824 = vmatpush1.msra.mxu0 0.0
    %825 = vmatprep.subr.mxu0 0.0
    %826 = vmatpush1.msra.mxu0 0.0
    %827 = vmatprep.subr.mxu0 0.0
    %828 = vmatpush1.msra.mxu0 0.0
    %829 = vmatprep.subr.mxu0 0.0
    %830 = vmatpush1.msra.mxu0 0.0
    %831 = vmatprep.subr.mxu0 0.0
    %832 = vmatpush1.msra.mxu0 0.0
    %833 = vmatprep.subr.mxu0 0.0
    %834 = vmatpush1.msra.mxu0 0.0
    %835 = vmatprep.subr.mxu0 0.0
    %836 = vmatpush1.msra.mxu0 0.0
    %837 = vmatprep.subr.mxu0 0.0
    %838 = vmatpush1.msra.mxu0 0.0
    %839 = vmatprep.subr.mxu0 0.0
    %840 = vmatpush1.msra.mxu0 0.0
    %841 = vmatprep.subr.mxu0 0.0
    %842 = vmatpush1.msra.mxu0 0.0
    %843 = vmatprep.subr.mxu0 0.0
    %844 = vmatpush1.msra.mxu0 0.0
    %845 = vmatprep.subr.mxu0 0.0
    %846 = vmatpush1.msra.mxu0 0.0
    %847 = vmatprep.subr.mxu0 0.0
    %848 = vmatpush1.msra.mxu0 0.0
    %849 = vmatprep.subr.mxu0 0.0
    %850 = vmatpush1.msra.mxu0 0.0
    %851 = vmatprep.subr.mxu0 0.0
    %852 = vmatpush1.msra.mxu0 0.0
    %853 = vmatprep.subr.mxu0 0.0
    %854 = vmatpush1.msra.mxu0 0.0
    %855 = vmatprep.subr.mxu0 0.0
    %856 = vmatpush1.msra.mxu0 0.0
    %857 = vmatprep.subr.mxu0 0.0
    %858 = vmatpush1.msra.mxu0 0.0
    %859 = vmatprep.subr.mxu0 0.0
    %860 = vmatpush1.msra.mxu0 0.0
    %861 = vmatprep.mubr.f32.mxu0 0.0
    %862 = vmatmul.mubr.f32.gmra.mrb[0].mxu0 %v795
    %v863 = vpop.f32.mrb[0].mxu0
    %v864 = vadd.f32 %v789, %v863
    %v865 = vpop.f32.mrb[0].mxu0
    %866 = vdwg.mxu0
    %v867 = vadd.f32 %v864, %v331
    %v868 = vxor.u32 %v867, 2147483648
    %v869 = vmul.f32 %v868, 1.442695
    %v870 = vpow.pop %v869
    %v871 = vadd.f32 %v870, 1.0
    %v872 = vrcp.pop %v871
    %v873 = vmul.f32 1.0, %v872
    %v874 = vmul.f32 %v873, 2.0
    %v875 = vsub.f32 %v874, 1.0
    %v876 = vmul.f32 %v873, %v614
    %878 = vrot.lane.b32.xlu0 %v875, 64
    %v879 = vpop.permute.xlu0 %878
    %v881 = vmul.f32 %v873, %v879
    %883 = vrot.lane.b32.xlu0 %v881, 32
    %v884 = vpop.permute.xlu0 %883
    %v886 = vadd.f32 %v876, %v884
    %v887 = vtanh.pop %v886
    %889 = vrot.lane.b32.xlu0 %v887, 64
    %v890 = vpop.permute.xlu0 %889
    %v892 = vmul.f32 %v873, %v890
    %893 = vmatprep.subr.mxu0 0.0
    %894 = vmatpush1.msra.mxu0 %v314
    %895 = vmatprep.subr.mxu0 0.0
    %896 = vmatpush1.msra.mxu0 %v315
    %897 = vmatprep.subr.mxu0 0.0
    %898 = vmatpush1.msra.mxu0 %v316
    %899 = vmatprep.subr.mxu0 0.0
    %900 = vmatpush1.msra.mxu0 %v317
    %901 = vmatprep.subr.mxu0 0.0
    %902 = vmatpush1.msra.mxu0 0.0
    %903 = vmatprep.subr.mxu0 0.0
    %904 = vmatpush1.msra.mxu0 0.0
    %905 = vmatprep.subr.mxu0 0.0
    %906 = vmatpush1.msra.mxu0 0.0
    %907 = vmatprep.subr.mxu0 0.0
    %908 = vmatpush1.msra.mxu0 0.0
    %909 = vmatprep.subr.mxu0 0.0
    %910 = vmatpush1.msra.mxu0 0.0
    %911 = vmatprep.subr.mxu0 0.0
    %912 = vmatpush1.msra.mxu0 0.0
    %913 = vmatprep.subr.mxu0 0.0
    %914 = vmatpush1.msra.mxu0 0.0
    %915 = vmatprep.subr.mxu0 0.0
    %916 = vmatpush1.msra.mxu0 0.0
    %917 = vmatprep.subr.mxu0 0.0
    %918 = vmatpush1.msra.mxu0 0.0
    %919 = vmatprep.subr.mxu0 0.0
    %920 = vmatpush1.msra.mxu0 0.0
    %921 = vmatprep.subr.mxu0 0.0
    %922 = vmatpush1.msra.mxu0 0.0
    %923 = vmatprep.subr.mxu0 0.0
    %924 = vmatpush1.msra.mxu0 0.0
    %925 = vmatprep.subr.mxu0 0.0
    %926 = vmatpush1.msra.mxu0 0.0
    %927 = vmatprep.subr.mxu0 0.0
    %928 = vmatpush1.msra.mxu0 0.0
    %929 = vmatprep.subr.mxu0 0.0
    %930 = vmatpush1.msra.mxu0 0.0
    %931 = vmatprep.subr.mxu0 0.0
    %932 = vmatpush1.msra.mxu0 0.0
    %933 = vmatprep.subr.mxu0 0.0
    %934 = vmatpush1.msra.mxu0 0.0
    %935 = vmatprep.subr.mxu0 0.0
    %936 = vmatpush1.msra.mxu0 0.0
    %937 = vmatprep.subr.mxu0 0.0
    %938 = vmatpush1.msra.mxu0 0.0
    %939 = vmatprep.subr.mxu0 0.0
    %940 = vmatpush1.msra.mxu0 0.0
    %941 = vmatprep.subr.mxu0 0.0
    %942 = vmatpush1.msra.mxu0 0.0
    %943 = vmatprep.subr.mxu0 0.0
    %944 = vmatpush1.msra.mxu0 0.0
    %945 = vmatprep.subr.mxu0 0.0
    %946 = vmatpush1.msra.mxu0 0.0
    %947 = vmatprep.subr.mxu0 0.0
    %948 = vmatpush1.msra.mxu0 0.0
    %949 = vmatprep.subr.mxu0 0.0
    %950 = vmatpush1.msra.mxu0 0.0
    %951 = vmatprep.subr.mxu0 0.0
    %952 = vmatpush1.msra.mxu0 0.0
    %953 = vmatprep.subr.mxu0 0.0
    %954 = vmatpush1.msra.mxu0 0.0
    %955 = vmatprep.subr.mxu0 0.0
    %956 = vmatpush1.msra.mxu0 0.0
    %957 = vmatprep.mubr.f32.mxu0 0.0
    %958 = vmatmul.mubr.f32.gmra.mrb[0].mxu0 %v795
    %v959 = vpop.f32.mrb[0].mxu0
    %v960 = vadd.f32 0.0, %v959
    %v961 = vpop.f32.mrb[0].mxu0
    %962 = vdwg.mxu0
    %v963 = vadd.f32 %v286, %v960
    %v964 = vxor.u32 %v963, 2147483648
    %v965 = vmul.f32 %v964, 1.442695
    %v966 = vpow.pop %v965
    %v967 = vadd.f32 %v966, 1.0
    %v968 = vrcp.pop %v967
    %v969 = vmul.f32 1.0, %v968
    %v970 = vmul.f32 %v969, 2.0
    %v971 = vsub.f32 %v970, 1.0
    %v972 = vmul.f32 %v969, %v710
    %974 = vrot.lane.b32.xlu0 %v971, 64
    %v975 = vpop.permute.xlu0 %974
    %v977 = vmul.f32 %v969, %v975
    %979 = vrot.lane.b32.xlu0 %v977, 32
    %v980 = vpop.permute.xlu0 %979
    %v982 = vadd.f32 %v972, %v980
    %v983 = vtanh.pop %v982
    %985 = vrot.lane.b32.xlu0 %v983, 64
    %v986 = vpop.permute.xlu0 %985
    %v988 = vmul.f32 %v969, %v986
    %990 = vrot.lane.b32.xlu0 %v892, 32
    %v991 = vpop.permute.xlu0 %990
    %v992 = vsel %vm339, %v991, 0
    %994 = vmatprep.subr.mxu0 0.0
    %995 = vmatpush1.msra.mxu0 %v322
    %996 = vmatprep.subr.mxu0 0.0
    %997 = vmatpush1.msra.mxu0 %v323
    %998 = vmatprep.subr.mxu0 0.0
    %999 = vmatpush1.msra.mxu0 %v324
    %1000 = vmatprep.subr.mxu0 0.0
    %1001 = vmatpush1.msra.mxu0 %v325
    %1002 = vmatprep.subr.mxu0 0.0
    %1003 = vmatpush1.msra.mxu0 0.0
    %1004 = vmatprep.subr.mxu0 0.0
    %1005 = vmatpush1.msra.mxu0 0.0
    %1006 = vmatprep.subr.mxu0 0.0
    %1007 = vmatpush1.msra.mxu0 0.0
    %1008 = vmatprep.subr.mxu0 0.0
    %1009 = vmatpush1.msra.mxu0 0.0
    %1010 = vmatprep.subr.mxu0 0.0
    %1011 = vmatpush1.msra.mxu0 0.0
    %1012 = vmatprep.subr.mxu0 0.0
    %1013 = vmatpush1.msra.mxu0 0.0
    %1014 = vmatprep.subr.mxu0 0.0
    %1015 = vmatpush1.msra.mxu0 0.0
    %1016 = vmatprep.subr.mxu0 0.0
    %1017 = vmatpush1.msra.mxu0 0.0
    %1018 = vmatprep.subr.mxu0 0.0
    %1019 = vmatpush1.msra.mxu0 0.0
    %1020 = vmatprep.subr.mxu0 0.0
    %1021 = vmatpush1.msra.mxu0 0.0
    %1022 = vmatprep.subr.mxu0 0.0
    %1023 = vmatpush1.msra.mxu0 0.0
    %1024 = vmatprep.subr.mxu0 0.0
    %1025 = vmatpush1.msra.mxu0 0.0
    %1026 = vmatprep.subr.mxu0 0.0
    %1027 = vmatpush1.msra.mxu0 0.0
    %1028 = vmatprep.subr.mxu0 0.0
    %1029 = vmatpush1.msra.mxu0 0.0
    %1030 = vmatprep.subr.mxu0 0.0
    %1031 = vmatpush1.msra.mxu0 0.0
    %1032 = vmatprep.subr.mxu0 0.0
    %1033 = vmatpush1.msra.mxu0 0.0
    %1034 = vmatprep.subr.mxu0 0.0
    %1035 = vmatpush1.msra.mxu0 0.0
    %1036 = vmatprep.subr.mxu0 0.0
    %1037 = vmatpush1.msra.mxu0 0.0
    %1038 = vmatprep.subr.mxu0 0.0
    %1039 = vmatpush1.msra.mxu0 0.0
    %1040 = vmatprep.subr.mxu0 0.0
    %1041 = vmatpush1.msra.mxu0 0.0
    %1042 = vmatprep.subr.mxu0 0.0
    %1043 = vmatpush1.msra.mxu0 0.0
    %1044 = vmatprep.subr.mxu0 0.0
    %1045 = vmatpush1.msra.mxu0 0.0
    %1046 = vmatprep.subr.mxu0 0.0
    %1047 = vmatpush1.msra.mxu0 0.0
    %1048 = vmatprep.subr.mxu0 0.0
    %1049 = vmatpush1.msra.mxu0 0.0
    %1050 = vmatprep.subr.mxu0 0.0
    %1051 = vmatpush1.msra.mxu0 0.0
    %1052 = vmatprep.subr.mxu0 0.0
    %1053 = vmatpush1.msra.mxu0 0.0
    %1054 = vmatprep.subr.mxu0 0.0
    %1055 = vmatpush1.msra.mxu0 0.0
    %1056 = vmatprep.subr.mxu0 0.0
    %1057 = vmatpush1.msra.mxu0 0.0
    %1058 = vmatprep.mubr.f32.mxu0 0.0
    %1059 = vmatmul.mubr.f32.gmra.mrb[0].mxu0 %v992
    %v1060 = vpop.f32.mrb[0].mxu0
    %v1061 = vadd.f32 0.0, %v1060
    %v1062 = vpop.f32.mrb[0].mxu0
    %1063 = vdwg.mxu0
    %1065 = vrot.lane.b32.xlu0 %v988, 32
    %v1066 = vpop.permute.xlu0 %1065
    %v1067 = vsel %vm339, %v1066, 0
    %1069 = vmatprep.subr.mxu0 0.0
    %1070 = vmatpush1.msra.mxu0 %v318
    %1071 = vmatprep.subr.mxu0 0.0
    %1072 = vmatpush1.msra.mxu0 %v319
    %1073 = vmatprep.subr.mxu0 0.0
    %1074 = vmatpush1.msra.mxu0 %v320
    %1075 = vmatprep.subr.mxu0 0.0
    %1076 = vmatpush1.msra.mxu0 %v321
    %1077 = vmatprep.subr.mxu0 0.0
    %1078 = vmatpush1.msra.mxu0 0.0
    %1079 = vmatprep.subr.mxu0 0.0
    %1080 = vmatpush1.msra.mxu0 0.0
    %1081 = vmatprep.subr.mxu0 0.0
    %1082 = vmatpush1.msra.mxu0 0.0
    %1083 = vmatprep.subr.mxu0 0.0
    %1084 = vmatpush1.msra.mxu0 0.0
    %1085 = vmatprep.subr.mxu0 0.0
    %1086 = vmatpush1.msra.mxu0 0.0
    %1087 = vmatprep.subr.mxu0 0.0
    %1088 = vmatpush1.msra.mxu0 0.0
    %1089 = vmatprep.subr.mxu0 0.0
    %1090 = vmatpush1.msra.mxu0 0.0
    %1091 = vmatprep.subr.mxu0 0.0
    %1092 = vmatpush1.msra.mxu0 0.0
    %1093 = vmatprep.subr.mxu0 0.0
    %1094 = vmatpush1.msra.mxu0 0.0
    %1095 = vmatprep.subr.mxu0 0.0
    %1096 = vmatpush1.msra.mxu0 0.0
    %1097 = vmatprep.subr.mxu0 0.0
    %1098 = vmatpush1.msra.mxu0 0.0
    %1099 = vmatprep.subr.mxu0 0.0
    %1100 = vmatpush1.msra.mxu0 0.0
    %1101 = vmatprep.subr.mxu0 0.0
    %1102 = vmatpush1.msra.mxu0 0.0
    %1103 = vmatprep.subr.mxu0 0.0
    %1104 = vmatpush1.msra.mxu0 0.0
    %1105 = vmatprep.subr.mxu0 0.0
    %1106 = vmatpush1.msra.mxu0 0.0
    %1107 = vmatprep.subr.mxu0 0.0
    %1108 = vmatpush1.msra.mxu0 0.0
    %1109 = vmatprep.subr.mxu0 0.0
    %1110 = vmatpush1.msra.mxu0 0.0
    %1111 = vmatprep.subr.mxu0 0.0
    %1112 = vmatpush1.msra.mxu0 0.0
    %1113 = vmatprep.subr.mxu0 0.0
    %1114 = vmatpush1.msra.mxu0 0.0
    %1115 = vmatprep.subr.mxu0 0.0
    %1116 = vmatpush1.msra.mxu0 0.0
    %1117 = vmatprep.subr.mxu0 0.0
    %1118 = vmatpush1.msra.mxu0 0.0
    %1119 = vmatprep.subr.mxu0 0.0
    %1120 = vmatpush1.msra.mxu0 0.0
    %1121 = vmatprep.subr.mxu0 0.0
    %1122 = vmatpush1.msra.mxu0 0.0
    %1123 = vmatprep.subr.mxu0 0.0
    %1124 = vmatpush1.msra.mxu0 0.0
    %1125 = vmatprep.subr.mxu0 0.0
    %1126 = vmatpush1.msra.mxu0 0.0
    %1127 = vmatprep.subr.mxu0 0.0
    %1128 = vmatpush1.msra.mxu0 0.0
    %1129 = vmatprep.subr.mxu0 0.0
    %1130 = vmatpush1.msra.mxu0 0.0
    %1131 = vmatprep.subr.mxu0 0.0
    %1132 = vmatpush1.msra.mxu0 0.0
    %1133 = vmatprep.mubr.f32.mxu0 0.0
    %1134 = vmatmul.mubr.f32.gmra.mrb[0].mxu0 %v1067
    %v1135 = vpop.f32.mrb[0].mxu0
    %v1136 = vadd.f32 %v1061, %v1135
    %v1137 = vpop.f32.mrb[0].mxu0
    %1138 = vdwg.mxu0
    %v1139 = vadd.f32 %v1136, %v331
    %v1140 = vxor.u32 %v1139, 2147483648
    %v1141 = vmul.f32 %v1140, 1.442695
    %v1142 = vpow.pop %v1141
    %v1143 = vadd.f32 %v1142, 1.0
    %v1144 = vrcp.pop %v1143
    %v1145 = vmul.f32 1.0, %v1144
    %v1146 = vmul.f32 %v1145, 2.0
    %v1147 = vsub.f32 %v1146, 1.0
    %v1148 = vmul.f32 %v1145, %v886
    %1150 = vrot.lane.b32.xlu0 %v1147, 64
    %v1151 = vpop.permute.xlu0 %1150
    %v1153 = vmul.f32 %v1145, %v1151
    %1155 = vrot.lane.b32.xlu0 %v1153, 32
    %v1156 = vpop.permute.xlu0 %1155
    %v1158 = vadd.f32 %v1148, %v1156
    %v1159 = vtanh.pop %v1158
    %1161 = vrot.lane.b32.xlu0 %v1159, 64
    %v1162 = vpop.permute.xlu0 %1161
    %v1164 = vmul.f32 %v1145, %v1162
    %1165 = vmatprep.subr.mxu0 0.0
    %1166 = vmatpush1.msra.mxu0 %v314
    %1167 = vmatprep.subr.mxu0 0.0
    %1168 = vmatpush1.msra.mxu0 %v315
    %1169 = vmatprep.subr.mxu0 0.0
    %1170 = vmatpush1.msra.mxu0 %v316
    %1171 = vmatprep.subr.mxu0 0.0
    %1172 = vmatpush1.msra.mxu0 %v317
    %1173 = vmatprep.subr.mxu0 0.0
    %1174 = vmatpush1.msra.mxu0 0.0
    %1175 = vmatprep.subr.mxu0 0.0
    %1176 = vmatpush1.msra.mxu0 0.0
    %1177 = vmatprep.subr.mxu0 0.0
    %1178 = vmatpush1.msra.mxu0 0.0
    %1179 = vmatprep.subr.mxu0 0.0
    %1180 = vmatpush1.msra.mxu0 0.0
    %1181 = vmatprep.subr.mxu0 0.0
    %1182 = vmatpush1.msra.mxu0 0.0
    %1183 = vmatprep.subr.mxu0 0.0
    %1184 = vmatpush1.msra.mxu0 0.0
    %1185 = vmatprep.subr.mxu0 0.0
    %1186 = vmatpush1.msra.mxu0 0.0
    %1187 = vmatprep.subr.mxu0 0.0
    %1188 = vmatpush1.msra.mxu0 0.0
    %1189 = vmatprep.subr.mxu0 0.0
    %1190 = vmatpush1.msra.mxu0 0.0
    %1191 = vmatprep.subr.mxu0 0.0
    %1192 = vmatpush1.msra.mxu0 0.0
    %1193 = vmatprep.subr.mxu0 0.0
    %1194 = vmatpush1.msra.mxu0 0.0
    %1195 = vmatprep.subr.mxu0 0.0
    %1196 = vmatpush1.msra.mxu0 0.0
    %1197 = vmatprep.subr.mxu0 0.0
    %1198 = vmatpush1.msra.mxu0 0.0
    %1199 = vmatprep.subr.mxu0 0.0
    %1200 = vmatpush1.msra.mxu0 0.0
    %1201 = vmatprep.subr.mxu0 0.0
    %1202 = vmatpush1.msra.mxu0 0.0
    %1203 = vmatprep.subr.mxu0 0.0
    %1204 = vmatpush1.msra.mxu0 0.0
    %1205 = vmatprep.subr.mxu0 0.0
    %1206 = vmatpush1.msra.mxu0 0.0
    %1207 = vmatprep.subr.mxu0 0.0
    %1208 = vmatpush1.msra.mxu0 0.0
    %1209 = vmatprep.subr.mxu0 0.0
    %1210 = vmatpush1.msra.mxu0 0.0
    %1211 = vmatprep.subr.mxu0 0.0
    %1212 = vmatpush1.msra.mxu0 0.0
    %1213 = vmatprep.subr.mxu0 0.0
    %1214 = vmatpush1.msra.mxu0 0.0
    %1215 = vmatprep.subr.mxu0 0.0
    %1216 = vmatpush1.msra.mxu0 0.0
    %1217 = vmatprep.subr.mxu0 0.0
    %1218 = vmatpush1.msra.mxu0 0.0
    %1219 = vmatprep.subr.mxu0 0.0
    %1220 = vmatpush1.msra.mxu0 0.0
    %1221 = vmatprep.subr.mxu0 0.0
    %1222 = vmatpush1.msra.mxu0 0.0
    %1223 = vmatprep.subr.mxu0 0.0
    %1224 = vmatpush1.msra.mxu0 0.0
    %1225 = vmatprep.subr.mxu0 0.0
    %1226 = vmatpush1.msra.mxu0 0.0
    %1227 = vmatprep.subr.mxu0 0.0
    %1228 = vmatpush1.msra.mxu0 0.0
    %1229 = vmatprep.mubr.f32.mxu0 0.0
    %1230 = vmatmul.mubr.f32.gmra.mrb[0].mxu0 %v1067
    %v1231 = vpop.f32.mrb[0].mxu0
    %v1232 = vadd.f32 0.0, %v1231
    %v1233 = vpop.f32.mrb[0].mxu0
    %1234 = vdwg.mxu0
    %v1235 = vadd.f32 %v291, %v1232
    %v1236 = vxor.u32 %v1235, 2147483648
    %v1237 = vmul.f32 %v1236, 1.442695
    %v1238 = vpow.pop %v1237
    %v1239 = vadd.f32 %v1238, 1.0
    %v1240 = vrcp.pop %v1239
    %v1241 = vmul.f32 1.0, %v1240
    %v1242 = vmul.f32 %v1241, 2.0
    %v1243 = vsub.f32 %v1242, 1.0
    %v1244 = vmul.f32 %v1241, %v982
    %1246 = vrot.lane.b32.xlu0 %v1243, 64
    %v1247 = vpop.permute.xlu0 %1246
    %v1249 = vmul.f32 %v1241, %v1247
    %1251 = vrot.lane.b32.xlu0 %v1249, 32
    %v1252 = vpop.permute.xlu0 %1251
    %v1254 = vadd.f32 %v1244, %v1252
    %v1255 = vtanh.pop %v1254
    %1257 = vrot.lane.b32.xlu0 %v1255, 64
    %v1258 = vpop.permute.xlu0 %1257
    %v1260 = vmul.f32 %v1241, %v1258
    %1262 = vrot.lane.b32.xlu0 %v1164, 32
    %v1263 = vpop.permute.xlu0 %1262
    %v1264 = vsel %vm339, %v1263, 0
    %1266 = vmatprep.subr.mxu0 0.0
    %1267 = vmatpush1.msra.mxu0 %v322
    %1268 = vmatprep.subr.mxu0 0.0
    %1269 = vmatpush1.msra.mxu0 %v323
    %1270 = vmatprep.subr.mxu0 0.0
    %1271 = vmatpush1.msra.mxu0 %v324
    %1272 = vmatprep.subr.mxu0 0.0
    %1273 = vmatpush1.msra.mxu0 %v325
    %1274 = vmatprep.subr.mxu0 0.0
    %1275 = vmatpush1.msra.mxu0 0.0
    %1276 = vmatprep.subr.mxu0 0.0
    %1277 = vmatpush1.msra.mxu0 0.0
    %1278 = vmatprep.subr.mxu0 0.0
    %1279 = vmatpush1.msra.mxu0 0.0
    %1280 = vmatprep.subr.mxu0 0.0
    %1281 = vmatpush1.msra.mxu0 0.0
    %1282 = vmatprep.subr.mxu0 0.0
    %1283 = vmatpush1.msra.mxu0 0.0
    %1284 = vmatprep.subr.mxu0 0.0
    %1285 = vmatpush1.msra.mxu0 0.0
    %1286 = vmatprep.subr.mxu0 0.0
    %1287 = vmatpush1.msra.mxu0 0.0
    %1288 = vmatprep.subr.mxu0 0.0
    %1289 = vmatpush1.msra.mxu0 0.0
    %1290 = vmatprep.subr.mxu0 0.0
    %1291 = vmatpush1.msra.mxu0 0.0
    %1292 = vmatprep.subr.mxu0 0.0
    %1293 = vmatpush1.msra.mxu0 0.0
    %1294 = vmatprep.subr.mxu0 0.0
    %1295 = vmatpush1.msra.mxu0 0.0
    %1296 = vmatprep.subr.mxu0 0.0
    %1297 = vmatpush1.msra.mxu0 0.0
    %1298 = vmatprep.subr.mxu0 0.0
    %1299 = vmatpush1.msra.mxu0 0.0
    %1300 = vmatprep.subr.mxu0 0.0
    %1301 = vmatpush1.msra.mxu0 0.0
    %1302 = vmatprep.subr.mxu0 0.0
    %1303 = vmatpush1.msra.mxu0 0.0
    %1304 = vmatprep.subr.mxu0 0.0
    %1305 = vmatpush1.msra.mxu0 0.0
    %1306 = vmatprep.subr.mxu0 0.0
    %1307 = vmatpush1.msra.mxu0 0.0
    %1308 = vmatprep.subr.mxu0 0.0
    %1309 = vmatpush1.msra.mxu0 0.0
    %1310 = vmatprep.subr.mxu0 0.0
    %1311 = vmatpush1.msra.mxu0 0.0
    %1312 = vmatprep.subr.mxu0 0.0
    %1313 = vmatpush1.msra.mxu0 0.0
    %1314 = vmatprep.subr.mxu0 0.0
    %1315 = vmatpush1.msra.mxu0 0.0
    %1316 = vmatprep.subr.mxu0 0.0
    %1317 = vmatpush1.msra.mxu0 0.0
    %1318 = vmatprep.subr.mxu0 0.0
    %1319 = vmatpush1.msra.mxu0 0.0
    %1320 = vmatprep.subr.mxu0 0.0
    %1321 = vmatpush1.msra.mxu0 0.0
    %1322 = vmatprep.subr.mxu0 0.0
    %1323 = vmatpush1.msra.mxu0 0.0
    %1324 = vmatprep.subr.mxu0 0.0
    %1325 = vmatpush1.msra.mxu0 0.0
    %1326 = vmatprep.subr.mxu0 0.0
    %1327 = vmatpush1.msra.mxu0 0.0
    %1328 = vmatprep.subr.mxu0 0.0
    %1329 = vmatpush1.msra.mxu0 0.0
    %1330 = vmatprep.mubr.f32.mxu0 0.0
    %1331 = vmatmul.mubr.f32.gmra.mrb[0].mxu0 %v1264
    %v1332 = vpop.f32.mrb[0].mxu0
    %v1333 = vadd.f32 0.0, %v1332
    %v1334 = vpop.f32.mrb[0].mxu0
    %1335 = vdwg.mxu0
    %1337 = vrot.lane.b32.xlu0 %v1260, 32
    %v1338 = vpop.permute.xlu0 %1337
    %v1339 = vsel %vm339, %v1338, 0
    %1341 = vmatprep.subr.mxu0 0.0
    %1342 = vmatpush1.msra.mxu0 %v318
    %1343 = vmatprep.subr.mxu0 0.0
    %1344 = vmatpush1.msra.mxu0 %v319
    %1345 = vmatprep.subr.mxu0 0.0
    %1346 = vmatpush1.msra.mxu0 %v320
    %1347 = vmatprep.subr.mxu0 0.0
    %1348 = vmatpush1.msra.mxu0 %v321
    %1349 = vmatprep.subr.mxu0 0.0
    %1350 = vmatpush1.msra.mxu0 0.0
    %1351 = vmatprep.subr.mxu0 0.0
    %1352 = vmatpush1.msra.mxu0 0.0
    %1353 = vmatprep.subr.mxu0 0.0
    %1354 = vmatpush1.msra.mxu0 0.0
    %1355 = vmatprep.subr.mxu0 0.0
    %1356 = vmatpush1.msra.mxu0 0.0
    %1357 = vmatprep.subr.mxu0 0.0
    %1358 = vmatpush1.msra.mxu0 0.0
    %1359 = vmatprep.subr.mxu0 0.0
    %1360 = vmatpush1.msra.mxu0 0.0
    %1361 = vmatprep.subr.mxu0 0.0
    %1362 = vmatpush1.msra.mxu0 0.0
    %1363 = vmatprep.subr.mxu0 0.0
    %1364 = vmatpush1.msra.mxu0 0.0
    %1365 = vmatprep.subr.mxu0 0.0
    %1366 = vmatpush1.msra.mxu0 0.0
    %1367 = vmatprep.subr.mxu0 0.0
    %1368 = vmatpush1.msra.mxu0 0.0
    %1369 = vmatprep.subr.mxu0 0.0
    %1370 = vmatpush1.msra.mxu0 0.0
    %1371 = vmatprep.subr.mxu0 0.0
    %1372 = vmatpush1.msra.mxu0 0.0
    %1373 = vmatprep.subr.mxu0 0.0
    %1374 = vmatpush1.msra.mxu0 0.0
    %1375 = vmatprep.subr.mxu0 0.0
    %1376 = vmatpush1.msra.mxu0 0.0
    %1377 = vmatprep.subr.mxu0 0.0
    %1378 = vmatpush1.msra.mxu0 0.0
    %1379 = vmatprep.subr.mxu0 0.0
    %1380 = vmatpush1.msra.mxu0 0.0
    %1381 = vmatprep.subr.mxu0 0.0
    %1382 = vmatpush1.msra.mxu0 0.0
    %1383 = vmatprep.subr.mxu0 0.0
    %1384 = vmatpush1.msra.mxu0 0.0
    %1385 = vmatprep.subr.mxu0 0.0
    %1386 = vmatpush1.msra.mxu0 0.0
    %1387 = vmatprep.subr.mxu0 0.0
    %1388 = vmatpush1.msra.mxu0 0.0
    %1389 = vmatprep.subr.mxu0 0.0
    %1390 = vmatpush1.msra.mxu0 0.0
    %1391 = vmatprep.subr.mxu0 0.0
    %1392 = vmatpush1.msra.mxu0 0.0
    %1393 = vmatprep.subr.mxu0 0.0
    %1394 = vmatpush1.msra.mxu0 0.0
    %1395 = vmatprep.subr.mxu0 0.0
    %1396 = vmatpush1.msra.mxu0 0.0
    %1397 = vmatprep.subr.mxu0 0.0
    %1398 = vmatpush1.msra.mxu0 0.0
    %1399 = vmatprep.subr.mxu0 0.0
    %1400 = vmatpush1.msra.mxu0 0.0
    %1401 = vmatprep.subr.mxu0 0.0
    %1402 = vmatpush1.msra.mxu0 0.0
    %1403 = vmatprep.subr.mxu0 0.0
    %1404 = vmatpush1.msra.mxu0 0.0
    %1405 = vmatprep.mubr.f32.mxu0 0.0
    %1406 = vmatmul.mubr.f32.gmra.mrb[0].mxu0 %v1339
    %v1407 = vpop.f32.mrb[0].mxu0
    %v1408 = vadd.f32 %v1333, %v1407
    %v1409 = vpop.f32.mrb[0].mxu0
    %1410 = vdwg.mxu0
    %v1411 = vadd.f32 %v1408, %v331
    %v1412 = vxor.u32 %v1411, 2147483648
    %v1413 = vmul.f32 %v1412, 1.442695
    %v1414 = vpow.pop %v1413
    %v1415 = vadd.f32 %v1414, 1.0
    %v1416 = vrcp.pop %v1415
    %v1417 = vmul.f32 1.0, %v1416
    %v1418 = vmul.f32 %v1417, 2.0
    %v1419 = vsub.f32 %v1418, 1.0
    %v1420 = vmul.f32 %v1417, %v1158
    %1422 = vrot.lane.b32.xlu0 %v1419, 64
    %v1423 = vpop.permute.xlu0 %1422
    %v1425 = vmul.f32 %v1417, %v1423
    %1427 = vrot.lane.b32.xlu0 %v1425, 32
    %v1428 = vpop.permute.xlu0 %1427
    %v1430 = vadd.f32 %v1420, %v1428
    %v1431 = vtanh.pop %v1430
    %1433 = vrot.lane.b32.xlu0 %v1431, 64
    %v1434 = vpop.permute.xlu0 %1433
    %v1436 = vmul.f32 %v1417, %v1434
    %1437 = vmatprep.subr.mxu0 0.0
    %1438 = vmatpush1.msra.mxu0 %v314
    %1439 = vmatprep.subr.mxu0 0.0
    %1440 = vmatpush1.msra.mxu0 %v315
    %1441 = vmatprep.subr.mxu0 0.0
    %1442 = vmatpush1.msra.mxu0 %v316
    %1443 = vmatprep.subr.mxu0 0.0
    %1444 = vmatpush1.msra.mxu0 %v317
    %1445 = vmatprep.subr.mxu0 0.0
    %1446 = vmatpush1.msra.mxu0 0.0
    %1447 = vmatprep.subr.mxu0 0.0
    %1448 = vmatpush1.msra.mxu0 0.0
    %1449 = vmatprep.subr.mxu0 0.0
    %1450 = vmatpush1.msra.mxu0 0.0
    %1451 = vmatprep.subr.mxu0 0.0
    %1452 = vmatpush1.msra.mxu0 0.0
    %1453 = vmatprep.subr.mxu0 0.0
    %1454 = vmatpush1.msra.mxu0 0.0
    %1455 = vmatprep.subr.mxu0 0.0
    %1456 = vmatpush1.msra.mxu0 0.0
    %1457 = vmatprep.subr.mxu0 0.0
    %1458 = vmatpush1.msra.mxu0 0.0
    %1459 = vmatprep.subr.mxu0 0.0
    %1460 = vmatpush1.msra.mxu0 0.0
    %1461 = vmatprep.subr.mxu0 0.0
    %1462 = vmatpush1.msra.mxu0 0.0
    %1463 = vmatprep.subr.mxu0 0.0
    %1464 = vmatpush1.msra.mxu0 0.0
    %1465 = vmatprep.subr.mxu0 0.0
    %1466 = vmatpush1.msra.mxu0 0.0
    %1467 = vmatprep.subr.mxu0 0.0
    %1468 = vmatpush1.msra.mxu0 0.0
    %1469 = vmatprep.subr.mxu0 0.0
    %1470 = vmatpush1.msra.mxu0 0.0
    %1471 = vmatprep.subr.mxu0 0.0
    %1472 = vmatpush1.msra.mxu0 0.0
    %1473 = vmatprep.subr.mxu0 0.0
    %1474 = vmatpush1.msra.mxu0 0.0
    %1475 = vmatprep.subr.mxu0 0.0
    %1476 = vmatpush1.msra.mxu0 0.0
    %1477 = vmatprep.subr.mxu0 0.0
    %1478 = vmatpush1.msra.mxu0 0.0
    %1479 = vmatprep.subr.mxu0 0.0
    %1480 = vmatpush1.msra.mxu0 0.0
    %1481 = vmatprep.subr.mxu0 0.0
    %1482 = vmatpush1.msra.mxu0 0.0
    %1483 = vmatprep.subr.mxu0 0.0
    %1484 = vmatpush1.msra.mxu0 0.0
    %1485 = vmatprep.subr.mxu0 0.0
    %1486 = vmatpush1.msra.mxu0 0.0
    %1487 = vmatprep.subr.mxu0 0.0
    %1488 = vmatpush1.msra.mxu0 0.0
    %1489 = vmatprep.subr.mxu0 0.0
    %1490 = vmatpush1.msra.mxu0 0.0
    %1491 = vmatprep.subr.mxu0 0.0
    %1492 = vmatpush1.msra.mxu0 0.0
    %1493 = vmatprep.subr.mxu0 0.0
    %1494 = vmatpush1.msra.mxu0 0.0
    %1495 = vmatprep.subr.mxu0 0.0
    %1496 = vmatpush1.msra.mxu0 0.0
    %1497 = vmatprep.subr.mxu0 0.0
    %1498 = vmatpush1.msra.mxu0 0.0
    %1499 = vmatprep.subr.mxu0 0.0
    %1500 = vmatpush1.msra.mxu0 0.0
    %1501 = vmatprep.mubr.f32.mxu0 0.0
    %1502 = vmatmul.mubr.f32.gmra.mrb[0].mxu0 %v1339
    %v1503 = vpop.f32.mrb[0].mxu0
    %v1504 = vadd.f32 0.0, %v1503
    %v1505 = vpop.f32.mrb[0].mxu0
    %1506 = vdwg.mxu0
    %v1507 = vadd.f32 %v296, %v1504
    %v1508 = vxor.u32 %v1507, 2147483648
    %v1509 = vmul.f32 %v1508, 1.442695
    %v1510 = vpow.pop %v1509
    %v1511 = vadd.f32 %v1510, 1.0
    %v1512 = vrcp.pop %v1511
    %v1513 = vmul.f32 1.0, %v1512
    %v1514 = vmul.f32 %v1513, 2.0
    %v1515 = vsub.f32 %v1514, 1.0
    %v1516 = vmul.f32 %v1513, %v1254
    %1518 = vrot.lane.b32.xlu0 %v1515, 64
    %v1519 = vpop.permute.xlu0 %1518
    %v1521 = vmul.f32 %v1513, %v1519
    %1523 = vrot.lane.b32.xlu0 %v1521, 32
    %v1524 = vpop.permute.xlu0 %1523
    %v1526 = vadd.f32 %v1516, %v1524
    %v1527 = vtanh.pop %v1526
    %1529 = vrot.lane.b32.xlu0 %v1527, 64
    %v1530 = vpop.permute.xlu0 %1529
    %v1532 = vmul.f32 %v1513, %v1530
    %1534 = vrot.lane.b32.xlu0 %v1436, 32
    %v1535 = vpop.permute.xlu0 %1534
    %v1536 = vsel %vm339, %v1535, 0
    %1538 = vmatprep.subr.mxu0 0.0
    %1539 = vmatpush1.msra.mxu0 %v322
    %1540 = vmatprep.subr.mxu0 0.0
    %1541 = vmatpush1.msra.mxu0 %v323
    %1542 = vmatprep.subr.mxu0 0.0
    %1543 = vmatpush1.msra.mxu0 %v324
    %1544 = vmatprep.subr.mxu0 0.0
    %1545 = vmatpush1.msra.mxu0 %v325
    %1546 = vmatprep.subr.mxu0 0.0
    %1547 = vmatpush1.msra.mxu0 0.0
    %1548 = vmatprep.subr.mxu0 0.0
    %1549 = vmatpush1.msra.mxu0 0.0
    %1550 = vmatprep.subr.mxu0 0.0
    %1551 = vmatpush1.msra.mxu0 0.0
    %1552 = vmatprep.subr.mxu0 0.0
    %1553 = vmatpush1.msra.mxu0 0.0
    %1554 = vmatprep.subr.mxu0 0.0
    %1555 = vmatpush1.msra.mxu0 0.0
    %1556 = vmatprep.subr.mxu0 0.0
    %1557 = vmatpush1.msra.mxu0 0.0
    %1558 = vmatprep.subr.mxu0 0.0
    %1559 = vmatpush1.msra.mxu0 0.0
    %1560 = vmatprep.subr.mxu0 0.0
    %1561 = vmatpush1.msra.mxu0 0.0
    %1562 = vmatprep.subr.mxu0 0.0
    %1563 = vmatpush1.msra.mxu0 0.0
    %1564 = vmatprep.subr.mxu0 0.0
    %1565 = vmatpush1.msra.mxu0 0.0
    %1566 = vmatprep.subr.mxu0 0.0
    %1567 = vmatpush1.msra.mxu0 0.0
    %1568 = vmatprep.subr.mxu0 0.0
    %1569 = vmatpush1.msra.mxu0 0.0
    %1570 = vmatprep.subr.mxu0 0.0
    %1571 = vmatpush1.msra.mxu0 0.0
    %1572 = vmatprep.subr.mxu0 0.0
    %1573 = vmatpush1.msra.mxu0 0.0
    %1574 = vmatprep.subr.mxu0 0.0
    %1575 = vmatpush1.msra.mxu0 0.0
    %1576 = vmatprep.subr.mxu0 0.0
    %1577 = vmatpush1.msra.mxu0 0.0
    %1578 = vmatprep.subr.mxu0 0.0
    %1579 = vmatpush1.msra.mxu0 0.0
    %1580 = vmatprep.subr.mxu0 0.0
    %1581 = vmatpush1.msra.mxu0 0.0
    %1582 = vmatprep.subr.mxu0 0.0
    %1583 = vmatpush1.msra.mxu0 0.0
    %1584 = vmatprep.subr.mxu0 0.0
    %1585 = vmatpush1.msra.mxu0 0.0
    %1586 = vmatprep.subr.mxu0 0.0
    %1587 = vmatpush1.msra.mxu0 0.0
    %1588 = vmatprep.subr.mxu0 0.0
    %1589 = vmatpush1.msra.mxu0 0.0
    %1590 = vmatprep.subr.mxu0 0.0
    %1591 = vmatpush1.msra.mxu0 0.0
    %1592 = vmatprep.subr.mxu0 0.0
    %1593 = vmatpush1.msra.mxu0 0.0
    %1594 = vmatprep.subr.mxu0 0.0
    %1595 = vmatpush1.msra.mxu0 0.0
    %1596 = vmatprep.subr.mxu0 0.0
    %1597 = vmatpush1.msra.mxu0 0.0
    %1598 = vmatprep.subr.mxu0 0.0
    %1599 = vmatpush1.msra.mxu0 0.0
    %1600 = vmatprep.subr.mxu0 0.0
    %1601 = vmatpush1.msra.mxu0 0.0
    %1602 = vmatprep.mubr.f32.mxu0 0.0
    %1603 = vmatmul.mubr.f32.gmra.mrb[0].mxu0 %v1536
    %v1604 = vpop.f32.mrb[0].mxu0
    %v1605 = vadd.f32 0.0, %v1604
    %v1606 = vpop.f32.mrb[0].mxu0
    %1607 = vdwg.mxu0
    %1609 = vrot.lane.b32.xlu0 %v1532, 32
    %v1610 = vpop.permute.xlu0 %1609
    %v1611 = vsel %vm339, %v1610, 0
    %1613 = vmatprep.subr.mxu0 0.0
    %1614 = vmatpush1.msra.mxu0 %v318
    %1615 = vmatprep.subr.mxu0 0.0
    %1616 = vmatpush1.msra.mxu0 %v319
    %1617 = vmatprep.subr.mxu0 0.0
    %1618 = vmatpush1.msra.mxu0 %v320
    %1619 = vmatprep.subr.mxu0 0.0
    %1620 = vmatpush1.msra.mxu0 %v321
    %1621 = vmatprep.subr.mxu0 0.0
    %1622 = vmatpush1.msra.mxu0 0.0
    %1623 = vmatprep.subr.mxu0 0.0
    %1624 = vmatpush1.msra.mxu0 0.0
    %1625 = vmatprep.subr.mxu0 0.0
    %1626 = vmatpush1.msra.mxu0 0.0
    %1627 = vmatprep.subr.mxu0 0.0
    %1628 = vmatpush1.msra.mxu0 0.0
    %1629 = vmatprep.subr.mxu0 0.0
    %1630 = vmatpush1.msra.mxu0 0.0
    %1631 = vmatprep.subr.mxu0 0.0
    %1632 = vmatpush1.msra.mxu0 0.0
    %1633 = vmatprep.subr.mxu0 0.0
    %1634 = vmatpush1.msra.mxu0 0.0
    %1635 = vmatprep.subr.mxu0 0.0
    %1636 = vmatpush1.msra.mxu0 0.0
    %1637 = vmatprep.subr.mxu0 0.0
    %1638 = vmatpush1.msra.mxu0 0.0
    %1639 = vmatprep.subr.mxu0 0.0
    %1640 = vmatpush1.msra.mxu0 0.0
    %1641 = vmatprep.subr.mxu0 0.0
    %1642 = vmatpush1.msra.mxu0 0.0
    %1643 = vmatprep.subr.mxu0 0.0
    %1644 = vmatpush1.msra.mxu0 0.0
    %1645 = vmatprep.subr.mxu0 0.0
    %1646 = vmatpush1.msra.mxu0 0.0
    %1647 = vmatprep.subr.mxu0 0.0
    %1648 = vmatpush1.msra.mxu0 0.0
    %1649 = vmatprep.subr.mxu0 0.0
    %1650 = vmatpush1.msra.mxu0 0.0
    %1651 = vmatprep.subr.mxu0 0.0
    %1652 = vmatpush1.msra.mxu0 0.0
    %1653 = vmatprep.subr.mxu0 0.0
    %1654 = vmatpush1.msra.mxu0 0.0
    %1655 = vmatprep.subr.mxu0 0.0
    %1656 = vmatpush1.msra.mxu0 0.0
    %1657 = vmatprep.subr.mxu0 0.0
    %1658 = vmatpush1.msra.mxu0 0.0
    %1659 = vmatprep.subr.mxu0 0.0
    %1660 = vmatpush1.msra.mxu0 0.0
    %1661 = vmatprep.subr.mxu0 0.0
    %1662 = vmatpush1.msra.mxu0 0.0
    %1663 = vmatprep.subr.mxu0 0.0
    %1664 = vmatpush1.msra.mxu0 0.0
    %1665 = vmatprep.subr.mxu0 0.0
    %1666 = vmatpush1.msra.mxu0 0.0
    %1667 = vmatprep.subr.mxu0 0.0
    %1668 = vmatpush1.msra.mxu0 0.0
    %1669 = vmatprep.subr.mxu0 0.0
    %1670 = vmatpush1.msra.mxu0 0.0
    %1671 = vmatprep.subr.mxu0 0.0
    %1672 = vmatpush1.msra.mxu0 0.0
    %1673 = vmatprep.subr.mxu0 0.0
    %1674 = vmatpush1.msra.mxu0 0.0
    %1675 = vmatprep.subr.mxu0 0.0
    %1676 = vmatpush1.msra.mxu0 0.0
    %1677 = vmatprep.mubr.f32.mxu0 0.0
    %1678 = vmatmul.mubr.f32.gmra.mrb[0].mxu0 %v1611
    %v1679 = vpop.f32.mrb[0].mxu0
    %v1680 = vadd.f32 %v1605, %v1679
    %v1681 = vpop.f32.mrb[0].mxu0
    %1682 = vdwg.mxu0
    %v1683 = vadd.f32 %v1680, %v331
    %v1684 = vxor.u32 %v1683, 2147483648
    %v1685 = vmul.f32 %v1684, 1.442695
    %v1686 = vpow.pop %v1685
    %v1687 = vadd.f32 %v1686, 1.0
    %v1688 = vrcp.pop %v1687
    %v1689 = vmul.f32 1.0, %v1688
    %v1690 = vmul.f32 %v1689, 2.0
    %v1691 = vsub.f32 %v1690, 1.0
    %v1692 = vmul.f32 %v1689, %v1430
    %1694 = vrot.lane.b32.xlu0 %v1691, 64
    %v1695 = vpop.permute.xlu0 %1694
    %v1697 = vmul.f32 %v1689, %v1695
    %1699 = vrot.lane.b32.xlu0 %v1697, 32
    %v1700 = vpop.permute.xlu0 %1699
    %v1702 = vadd.f32 %v1692, %v1700
    %v1703 = vtanh.pop %v1702
    %1705 = vrot.lane.b32.xlu0 %v1703, 64
    %v1706 = vpop.permute.xlu0 %1705
    %v1708 = vmul.f32 %v1689, %v1706
    %1709 = vmatprep.subr.mxu0 0.0
    %1710 = vmatpush1.msra.mxu0 %v314
    %1711 = vmatprep.subr.mxu0 0.0
    %1712 = vmatpush1.msra.mxu0 %v315
    %1713 = vmatprep.subr.mxu0 0.0
    %1714 = vmatpush1.msra.mxu0 %v316
    %1715 = vmatprep.subr.mxu0 0.0
    %1716 = vmatpush1.msra.mxu0 %v317
    %1717 = vmatprep.subr.mxu0 0.0
    %1718 = vmatpush1.msra.mxu0 0.0
    %1719 = vmatprep.subr.mxu0 0.0
    %1720 = vmatpush1.msra.mxu0 0.0
    %1721 = vmatprep.subr.mxu0 0.0
    %1722 = vmatpush1.msra.mxu0 0.0
    %1723 = vmatprep.subr.mxu0 0.0
    %1724 = vmatpush1.msra.mxu0 0.0
    %1725 = vmatprep.subr.mxu0 0.0
    %1726 = vmatpush1.msra.mxu0 0.0
    %1727 = vmatprep.subr.mxu0 0.0
    %1728 = vmatpush1.msra.mxu0 0.0
    %1729 = vmatprep.subr.mxu0 0.0
    %1730 = vmatpush1.msra.mxu0 0.0
    %1731 = vmatprep.subr.mxu0 0.0
    %1732 = vmatpush1.msra.mxu0 0.0
    %1733 = vmatprep.subr.mxu0 0.0
    %1734 = vmatpush1.msra.mxu0 0.0
    %1735 = vmatprep.subr.mxu0 0.0
    %1736 = vmatpush1.msra.mxu0 0.0
    %1737 = vmatprep.subr.mxu0 0.0
    %1738 = vmatpush1.msra.mxu0 0.0
    %1739 = vmatprep.subr.mxu0 0.0
    %1740 = vmatpush1.msra.mxu0 0.0
    %1741 = vmatprep.subr.mxu0 0.0
    %1742 = vmatpush1.msra.mxu0 0.0
    %1743 = vmatprep.subr.mxu0 0.0
    %1744 = vmatpush1.msra.mxu0 0.0
    %1745 = vmatprep.subr.mxu0 0.0
    %1746 = vmatpush1.msra.mxu0 0.0
    %1747 = vmatprep.subr.mxu0 0.0
    %1748 = vmatpush1.msra.mxu0 0.0
    %1749 = vmatprep.subr.mxu0 0.0
    %1750 = vmatpush1.msra.mxu0 0.0
    %1751 = vmatprep.subr.mxu0 0.0
    %1752 = vmatpush1.msra.mxu0 0.0
    %1753 = vmatprep.subr.mxu0 0.0
    %1754 = vmatpush1.msra.mxu0 0.0
    %1755 = vmatprep.subr.mxu0 0.0
    %1756 = vmatpush1.msra.mxu0 0.0
    %1757 = vmatprep.subr.mxu0 0.0
    %1758 = vmatpush1.msra.mxu0 0.0
    %1759 = vmatprep.subr.mxu0 0.0
    %1760 = vmatpush1.msra.mxu0 0.0
    %1761 = vmatprep.subr.mxu0 0.0
    %1762 = vmatpush1.msra.mxu0 0.0
    %1763 = vmatprep.subr.mxu0 0.0
    %1764 = vmatpush1.msra.mxu0 0.0
    %1765 = vmatprep.subr.mxu0 0.0
    %1766 = vmatpush1.msra.mxu0 0.0
    %1767 = vmatprep.subr.mxu0 0.0
    %1768 = vmatpush1.msra.mxu0 0.0
    %1769 = vmatprep.subr.mxu0 0.0
    %1770 = vmatpush1.msra.mxu0 0.0
    %1771 = vmatprep.subr.mxu0 0.0
    %1772 = vmatpush1.msra.mxu0 0.0
    %1773 = vmatprep.mubr.f32.mxu0 0.0
    %1774 = vmatmul.mubr.f32.gmra.mrb[0].mxu0 %v1611
    %v1775 = vpop.f32.mrb[0].mxu0
    %v1776 = vadd.f32 0.0, %v1775
    %v1777 = vpop.f32.mrb[0].mxu0
    %1778 = vdwg.mxu0
    %v1779 = vadd.f32 %v301, %v1776
    %v1780 = vxor.u32 %v1779, 2147483648
    %v1781 = vmul.f32 %v1780, 1.442695
    %v1782 = vpow.pop %v1781
    %v1783 = vadd.f32 %v1782, 1.0
    %v1784 = vrcp.pop %v1783
    %v1785 = vmul.f32 1.0, %v1784
    %v1786 = vmul.f32 %v1785, 2.0
    %v1787 = vsub.f32 %v1786, 1.0
    %v1788 = vmul.f32 %v1785, %v1526
    %1790 = vrot.lane.b32.xlu0 %v1787, 64
    %v1791 = vpop.permute.xlu0 %1790
    %v1793 = vmul.f32 %v1785, %v1791
    %1795 = vrot.lane.b32.xlu0 %v1793, 32
    %v1796 = vpop.permute.xlu0 %1795
    %v1798 = vadd.f32 %v1788, %v1796
    %v1799 = vtanh.pop %v1798
    %1801 = vrot.lane.b32.xlu0 %v1799, 64
    %v1802 = vpop.permute.xlu0 %1801
    %v1804 = vmul.f32 %v1785, %v1802
    %1806 = vrot.lane.b32.xlu0 %v1708, 32
    %v1807 = vpop.permute.xlu0 %1806
    %v1808 = vsel %vm339, %v1807, 0
    %1810 = vmatprep.subr.mxu0 0.0
    %1811 = vmatpush1.msra.mxu0 %v322
    %1812 = vmatprep.subr.mxu0 0.0
    %1813 = vmatpush1.msra.mxu0 %v323
    %1814 = vmatprep.subr.mxu0 0.0
    %1815 = vmatpush1.msra.mxu0 %v324
    %1816 = vmatprep.subr.mxu0 0.0
    %1817 = vmatpush1.msra.mxu0 %v325
    %1818 = vmatprep.subr.mxu0 0.0
    %1819 = vmatpush1.msra.mxu0 0.0
    %1820 = vmatprep.subr.mxu0 0.0
    %1821 = vmatpush1.msra.mxu0 0.0
    %1822 = vmatprep.subr.mxu0 0.0
    %1823 = vmatpush1.msra.mxu0 0.0
    %1824 = vmatprep.subr.mxu0 0.0
    %1825 = vmatpush1.msra.mxu0 0.0
    %1826 = vmatprep.subr.mxu0 0.0
    %1827 = vmatpush1.msra.mxu0 0.0
    %1828 = vmatprep.subr.mxu0 0.0
    %1829 = vmatpush1.msra.mxu0 0.0
    %1830 = vmatprep.subr.mxu0 0.0
    %1831 = vmatpush1.msra.mxu0 0.0
    %1832 = vmatprep.subr.mxu0 0.0
    %1833 = vmatpush1.msra.mxu0 0.0
    %1834 = vmatprep.subr.mxu0 0.0
    %1835 = vmatpush1.msra.mxu0 0.0
    %1836 = vmatprep.subr.mxu0 0.0
    %1837 = vmatpush1.msra.mxu0 0.0
    %1838 = vmatprep.subr.mxu0 0.0
    %1839 = vmatpush1.msra.mxu0 0.0
    %1840 = vmatprep.subr.mxu0 0.0
    %1841 = vmatpush1.msra.mxu0 0.0
    %1842 = vmatprep.subr.mxu0 0.0
    %1843 = vmatpush1.msra.mxu0 0.0
    %1844 = vmatprep.subr.mxu0 0.0
    %1845 = vmatpush1.msra.mxu0 0.0
    %1846 = vmatprep.subr.mxu0 0.0
    %1847 = vmatpush1.msra.mxu0 0.0
    %1848 = vmatprep.subr.mxu0 0.0
    %1849 = vmatpush1.msra.mxu0 0.0
    %1850 = vmatprep.subr.mxu0 0.0
    %1851 = vmatpush1.msra.mxu0 0.0
    %1852 = vmatprep.subr.mxu0 0.0
    %1853 = vmatpush1.msra.mxu0 0.0
    %1854 = vmatprep.subr.mxu0 0.0
    %1855 = vmatpush1.msra.mxu0 0.0
    %1856 = vmatprep.subr.mxu0 0.0
    %1857 = vmatpush1.msra.mxu0 0.0
    %1858 = vmatprep.subr.mxu0 0.0
    %1859 = vmatpush1.msra.mxu0 0.0
    %1860 = vmatprep.subr.mxu0 0.0
    %1861 = vmatpush1.msra.mxu0 0.0
    %1862 = vmatprep.subr.mxu0 0.0
    %1863 = vmatpush1.msra.mxu0 0.0
    %1864 = vmatprep.subr.mxu0 0.0
    %1865 = vmatpush1.msra.mxu0 0.0
    %1866 = vmatprep.subr.mxu0 0.0
    %1867 = vmatpush1.msra.mxu0 0.0
    %1868 = vmatprep.subr.mxu0 0.0
    %1869 = vmatpush1.msra.mxu0 0.0
    %1870 = vmatprep.subr.mxu0 0.0
    %1871 = vmatpush1.msra.mxu0 0.0
    %1872 = vmatprep.subr.mxu0 0.0
    %1873 = vmatpush1.msra.mxu0 0.0
    %1874 = vmatprep.mubr.f32.mxu0 0.0
    %1875 = vmatmul.mubr.f32.gmra.mrb[0].mxu0 %v1808
    %v1876 = vpop.f32.mrb[0].mxu0
    %v1877 = vadd.f32 0.0, %v1876
    %v1878 = vpop.f32.mrb[0].mxu0
    %1879 = vdwg.mxu0
    %1881 = vrot.lane.b32.xlu0 %v1804, 32
    %v1882 = vpop.permute.xlu0 %1881
    %v1883 = vsel %vm339, %v1882, 0
    %1885 = vmatprep.subr.mxu0 0.0
    %1886 = vmatpush1.msra.mxu0 %v318
    %1887 = vmatprep.subr.mxu0 0.0
    %1888 = vmatpush1.msra.mxu0 %v319
    %1889 = vmatprep.subr.mxu0 0.0
    %1890 = vmatpush1.msra.mxu0 %v320
    %1891 = vmatprep.subr.mxu0 0.0
    %1892 = vmatpush1.msra.mxu0 %v321
    %1893 = vmatprep.subr.mxu0 0.0
    %1894 = vmatpush1.msra.mxu0 0.0
    %1895 = vmatprep.subr.mxu0 0.0
    %1896 = vmatpush1.msra.mxu0 0.0
    %1897 = vmatprep.subr.mxu0 0.0
    %1898 = vmatpush1.msra.mxu0 0.0
    %1899 = vmatprep.subr.mxu0 0.0
    %1900 = vmatpush1.msra.mxu0 0.0
    %1901 = vmatprep.subr.mxu0 0.0
    %1902 = vmatpush1.msra.mxu0 0.0
    %1903 = vmatprep.subr.mxu0 0.0
    %1904 = vmatpush1.msra.mxu0 0.0
    %1905 = vmatprep.subr.mxu0 0.0
    %1906 = vmatpush1.msra.mxu0 0.0
    %1907 = vmatprep.subr.mxu0 0.0
    %1908 = vmatpush1.msra.mxu0 0.0
    %1909 = vmatprep.subr.mxu0 0.0
    %1910 = vmatpush1.msra.mxu0 0.0
    %1911 = vmatprep.subr.mxu0 0.0
    %1912 = vmatpush1.msra.mxu0 0.0
    %1913 = vmatprep.subr.mxu0 0.0
    %1914 = vmatpush1.msra.mxu0 0.0
    %1915 = vmatprep.subr.mxu0 0.0
    %1916 = vmatpush1.msra.mxu0 0.0
    %1917 = vmatprep.subr.mxu0 0.0
    %1918 = vmatpush1.msra.mxu0 0.0
    %1919 = vmatprep.subr.mxu0 0.0
    %1920 = vmatpush1.msra.mxu0 0.0
    %1921 = vmatprep.subr.mxu0 0.0
    %1922 = vmatpush1.msra.mxu0 0.0
    %1923 = vmatprep.subr.mxu0 0.0
    %1924 = vmatpush1.msra.mxu0 0.0
    %1925 = vmatprep.subr.mxu0 0.0
    %1926 = vmatpush1.msra.mxu0 0.0
    %1927 = vmatprep.subr.mxu0 0.0
    %1928 = vmatpush1.msra.mxu0 0.0
    %1929 = vmatprep.subr.mxu0 0.0
    %1930 = vmatpush1.msra.mxu0 0.0
    %1931 = vmatprep.subr.mxu0 0.0
    %1932 = vmatpush1.msra.mxu0 0.0
    %1933 = vmatprep.subr.mxu0 0.0
    %1934 = vmatpush1.msra.mxu0 0.0
    %1935 = vmatprep.subr.mxu0 0.0
    %1936 = vmatpush1.msra.mxu0 0.0
    %1937 = vmatprep.subr.mxu0 0.0
    %1938 = vmatpush1.msra.mxu0 0.0
    %1939 = vmatprep.subr.mxu0 0.0
    %1940 = vmatpush1.msra.mxu0 0.0
    %1941 = vmatprep.subr.mxu0 0.0
    %1942 = vmatpush1.msra.mxu0 0.0
    %1943 = vmatprep.subr.mxu0 0.0
    %1944 = vmatpush1.msra.mxu0 0.0
    %1945 = vmatprep.subr.mxu0 0.0
    %1946 = vmatpush1.msra.mxu0 0.0
    %1947 = vmatprep.subr.mxu0 0.0
    %1948 = vmatpush1.msra.mxu0 0.0
    %1949 = vmatprep.mubr.f32.mxu0 0.0
    %1950 = vmatmul.mubr.f32.gmra.mrb[0].mxu0 %v1883
    %v1951 = vpop.f32.mrb[0].mxu0
    %v1952 = vadd.f32 %v1877, %v1951
    %v1953 = vpop.f32.mrb[0].mxu0
    %1954 = vdwg.mxu0
    %v1955 = vadd.f32 %v1952, %v331
    %v1956 = vxor.u32 %v1955, 2147483648
    %v1957 = vmul.f32 %v1956, 1.442695
    %v1958 = vpow.pop %v1957
    %v1959 = vadd.f32 %v1958, 1.0
    %v1960 = vrcp.pop %v1959
    %v1961 = vmul.f32 1.0, %v1960
    %v1962 = vmul.f32 %v1961, 2.0
    %v1963 = vsub.f32 %v1962, 1.0
    %v1964 = vmul.f32 %v1961, %v1702
    %1966 = vrot.lane.b32.xlu0 %v1963, 64
    %v1967 = vpop.permute.xlu0 %1966
    %v1969 = vmul.f32 %v1961, %v1967
    %1971 = vrot.lane.b32.xlu0 %v1969, 32
    %v1972 = vpop.permute.xlu0 %1971
    %v1974 = vadd.f32 %v1964, %v1972
    %v1975 = vtanh.pop %v1974
    %1977 = vrot.lane.b32.xlu0 %v1975, 64
    %v1978 = vpop.permute.xlu0 %1977
    %v1980 = vmul.f32 %v1961, %v1978
    %1981 = vmatprep.subr.mxu0 0.0
    %1982 = vmatpush1.msra.mxu0 %v314
    %1983 = vmatprep.subr.mxu0 0.0
    %1984 = vmatpush1.msra.mxu0 %v315
    %1985 = vmatprep.subr.mxu0 0.0
    %1986 = vmatpush1.msra.mxu0 %v316
    %1987 = vmatprep.subr.mxu0 0.0
    %1988 = vmatpush1.msra.mxu0 %v317
    %1989 = vmatprep.subr.mxu0 0.0
    %1990 = vmatpush1.msra.mxu0 0.0
    %1991 = vmatprep.subr.mxu0 0.0
    %1992 = vmatpush1.msra.mxu0 0.0
    %1993 = vmatprep.subr.mxu0 0.0
    %1994 = vmatpush1.msra.mxu0 0.0
    %1995 = vmatprep.subr.mxu0 0.0
    %1996 = vmatpush1.msra.mxu0 0.0
    %1997 = vmatprep.subr.mxu0 0.0
    %1998 = vmatpush1.msra.mxu0 0.0
    %1999 = vmatprep.subr.mxu0 0.0
    %2000 = vmatpush1.msra.mxu0 0.0
    %2001 = vmatprep.subr.mxu0 0.0
    %2002 = vmatpush1.msra.mxu0 0.0
    %2003 = vmatprep.subr.mxu0 0.0
    %2004 = vmatpush1.msra.mxu0 0.0
    %2005 = vmatprep.subr.mxu0 0.0
    %2006 = vmatpush1.msra.mxu0 0.0
    %2007 = vmatprep.subr.mxu0 0.0
    %2008 = vmatpush1.msra.mxu0 0.0
    %2009 = vmatprep.subr.mxu0 0.0
    %2010 = vmatpush1.msra.mxu0 0.0
    %2011 = vmatprep.subr.mxu0 0.0
    %2012 = vmatpush1.msra.mxu0 0.0
    %2013 = vmatprep.subr.mxu0 0.0
    %2014 = vmatpush1.msra.mxu0 0.0
    %2015 = vmatprep.subr.mxu0 0.0
    %2016 = vmatpush1.msra.mxu0 0.0
    %2017 = vmatprep.subr.mxu0 0.0
    %2018 = vmatpush1.msra.mxu0 0.0
    %2019 = vmatprep.subr.mxu0 0.0
    %2020 = vmatpush1.msra.mxu0 0.0
    %2021 = vmatprep.subr.mxu0 0.0
    %2022 = vmatpush1.msra.mxu0 0.0
    %2023 = vmatprep.subr.mxu0 0.0
    %2024 = vmatpush1.msra.mxu0 0.0
    %2025 = vmatprep.subr.mxu0 0.0
    %2026 = vmatpush1.msra.mxu0 0.0
    %2027 = vmatprep.subr.mxu0 0.0
    %2028 = vmatpush1.msra.mxu0 0.0
    %2029 = vmatprep.subr.mxu0 0.0
    %2030 = vmatpush1.msra.mxu0 0.0
    %2031 = vmatprep.subr.mxu0 0.0
    %2032 = vmatpush1.msra.mxu0 0.0
    %2033 = vmatprep.subr.mxu0 0.0
    %2034 = vmatpush1.msra.mxu0 0.0
    %2035 = vmatprep.subr.mxu0 0.0
    %2036 = vmatpush1.msra.mxu0 0.0
    %2037 = vmatprep.subr.mxu0 0.0
    %2038 = vmatpush1.msra.mxu0 0.0
    %2039 = vmatprep.subr.mxu0 0.0
    %2040 = vmatpush1.msra.mxu0 0.0
    %2041 = vmatprep.subr.mxu0 0.0
    %2042 = vmatpush1.msra.mxu0 0.0
    %2043 = vmatprep.subr.mxu0 0.0
    %2044 = vmatpush1.msra.mxu0 0.0
    %2045 = vmatprep.mubr.f32.mxu0 0.0
    %2046 = vmatmul.mubr.f32.gmra.mrb[0].mxu0 %v1883
    %v2047 = vpop.f32.mrb[0].mxu0
    %v2048 = vadd.f32 0.0, %v2047
    %v2049 = vpop.f32.mrb[0].mxu0
    %2050 = vdwg.mxu0
    %v2051 = vadd.f32 %v306, %v2048
    %v2052 = vxor.u32 %v2051, 2147483648
    %v2053 = vmul.f32 %v2052, 1.442695
    %v2054 = vpow.pop %v2053
    %v2055 = vadd.f32 %v2054, 1.0
    %v2056 = vrcp.pop %v2055
    %v2057 = vmul.f32 1.0, %v2056
    %v2058 = vmul.f32 %v2057, 2.0
    %v2059 = vsub.f32 %v2058, 1.0
    %v2060 = vmul.f32 %v2057, %v1798
    %2062 = vrot.lane.b32.xlu0 %v2059, 64
    %v2063 = vpop.permute.xlu0 %2062
    %v2065 = vmul.f32 %v2057, %v2063
    %2067 = vrot.lane.b32.xlu0 %v2065, 32
    %v2068 = vpop.permute.xlu0 %2067
    %v2070 = vadd.f32 %v2060, %v2068
    %v2071 = vtanh.pop %v2070
    %2073 = vrot.lane.b32.xlu0 %v2071, 64
    %v2074 = vpop.permute.xlu0 %2073
    %v2076 = vmul.f32 %v2057, %v2074
    %2078 = vrot.lane.b32.xlu0 %v1980, 32
    %v2079 = vpop.permute.xlu0 %2078
    %v2080 = vsel %vm339, %v2079, 0
    %2082 = vmatprep.subr.mxu0 0.0
    %2083 = vmatpush1.msra.mxu0 %v322
    %2084 = vmatprep.subr.mxu0 0.0
    %2085 = vmatpush1.msra.mxu0 %v323
    %2086 = vmatprep.subr.mxu0 0.0
    %2087 = vmatpush1.msra.mxu0 %v324
    %2088 = vmatprep.subr.mxu0 0.0
    %2089 = vmatpush1.msra.mxu0 %v325
    %2090 = vmatprep.subr.mxu0 0.0
    %2091 = vmatpush1.msra.mxu0 0.0
    %2092 = vmatprep.subr.mxu0 0.0
    %2093 = vmatpush1.msra.mxu0 0.0
    %2094 = vmatprep.subr.mxu0 0.0
    %2095 = vmatpush1.msra.mxu0 0.0
    %2096 = vmatprep.subr.mxu0 0.0
    %2097 = vmatpush1.msra.mxu0 0.0
    %2098 = vmatprep.subr.mxu0 0.0
    %2099 = vmatpush1.msra.mxu0 0.0
    %2100 = vmatprep.subr.mxu0 0.0
    %2101 = vmatpush1.msra.mxu0 0.0
    %2102 = vmatprep.subr.mxu0 0.0
    %2103 = vmatpush1.msra.mxu0 0.0
    %2104 = vmatprep.subr.mxu0 0.0
    %2105 = vmatpush1.msra.mxu0 0.0
    %2106 = vmatprep.subr.mxu0 0.0
    %2107 = vmatpush1.msra.mxu0 0.0
    %2108 = vmatprep.subr.mxu0 0.0
    %2109 = vmatpush1.msra.mxu0 0.0
    %2110 = vmatprep.subr.mxu0 0.0
    %2111 = vmatpush1.msra.mxu0 0.0
    %2112 = vmatprep.subr.mxu0 0.0
    %2113 = vmatpush1.msra.mxu0 0.0
    %2114 = vmatprep.subr.mxu0 0.0
    %2115 = vmatpush1.msra.mxu0 0.0
    %2116 = vmatprep.subr.mxu0 0.0
    %2117 = vmatpush1.msra.mxu0 0.0
    %2118 = vmatprep.subr.mxu0 0.0
    %2119 = vmatpush1.msra.mxu0 0.0
    %2120 = vmatprep.subr.mxu0 0.0
    %2121 = vmatpush1.msra.mxu0 0.0
    %2122 = vmatprep.subr.mxu0 0.0
    %2123 = vmatpush1.msra.mxu0 0.0
    %2124 = vmatprep.subr.mxu0 0.0
    %2125 = vmatpush1.msra.mxu0 0.0
    %2126 = vmatprep.subr.mxu0 0.0
    %2127 = vmatpush1.msra.mxu0 0.0
    %2128 = vmatprep.subr.mxu0 0.0
    %2129 = vmatpush1.msra.mxu0 0.0
    %2130 = vmatprep.subr.mxu0 0.0
    %2131 = vmatpush1.msra.mxu0 0.0
    %2132 = vmatprep.subr.mxu0 0.0
    %2133 = vmatpush1.msra.mxu0 0.0
    %2134 = vmatprep.subr.mxu0 0.0
    %2135 = vmatpush1.msra.mxu0 0.0
    %2136 = vmatprep.subr.mxu0 0.0
    %2137 = vmatpush1.msra.mxu0 0.0
    %2138 = vmatprep.subr.mxu0 0.0
    %2139 = vmatpush1.msra.mxu0 0.0
    %2140 = vmatprep.subr.mxu0 0.0
    %2141 = vmatpush1.msra.mxu0 0.0
    %2142 = vmatprep.subr.mxu0 0.0
    %2143 = vmatpush1.msra.mxu0 0.0
    %2144 = vmatprep.subr.mxu0 0.0
    %2145 = vmatpush1.msra.mxu0 0.0
    %2146 = vmatprep.mubr.f32.mxu0 0.0
    %2147 = vmatmul.mubr.f32.gmra.mrb[0].mxu0 %v2080
    %v2148 = vpop.f32.mrb[0].mxu0
    %v2149 = vadd.f32 0.0, %v2148
    %v2150 = vpop.f32.mrb[0].mxu0
    %2151 = vdwg.mxu0
    %2153 = vrot.lane.b32.xlu0 %v2076, 32
    %v2154 = vpop.permute.xlu0 %2153
    %v2155 = vsel %vm339, %v2154, 0
    %2157 = vmatprep.subr.mxu0 0.0
    %2158 = vmatpush1.msra.mxu0 %v318
    %2159 = vmatprep.subr.mxu0 0.0
    %2160 = vmatpush1.msra.mxu0 %v319
    %2161 = vmatprep.subr.mxu0 0.0
    %2162 = vmatpush1.msra.mxu0 %v320
    %2163 = vmatprep.subr.mxu0 0.0
    %2164 = vmatpush1.msra.mxu0 %v321
    %2165 = vmatprep.subr.mxu0 0.0
    %2166 = vmatpush1.msra.mxu0 0.0
    %2167 = vmatprep.subr.mxu0 0.0
    %2168 = vmatpush1.msra.mxu0 0.0
    %2169 = vmatprep.subr.mxu0 0.0
    %2170 = vmatpush1.msra.mxu0 0.0
    %2171 = vmatprep.subr.mxu0 0.0
    %2172 = vmatpush1.msra.mxu0 0.0
    %2173 = vmatprep.subr.mxu0 0.0
    %2174 = vmatpush1.msra.mxu0 0.0
    %2175 = vmatprep.subr.mxu0 0.0
    %2176 = vmatpush1.msra.mxu0 0.0
    %2177 = vmatprep.subr.mxu0 0.0
    %2178 = vmatpush1.msra.mxu0 0.0
    %2179 = vmatprep.subr.mxu0 0.0
    %2180 = vmatpush1.msra.mxu0 0.0
    %2181 = vmatprep.subr.mxu0 0.0
    %2182 = vmatpush1.msra.mxu0 0.0
    %2183 = vmatprep.subr.mxu0 0.0
    %2184 = vmatpush1.msra.mxu0 0.0
    %2185 = vmatprep.subr.mxu0 0.0
    %2186 = vmatpush1.msra.mxu0 0.0
    %2187 = vmatprep.subr.mxu0 0.0
    %2188 = vmatpush1.msra.mxu0 0.0
    %2189 = vmatprep.subr.mxu0 0.0
    %2190 = vmatpush1.msra.mxu0 0.0
    %2191 = vmatprep.subr.mxu0 0.0
    %2192 = vmatpush1.msra.mxu0 0.0
    %2193 = vmatprep.subr.mxu0 0.0
    %2194 = vmatpush1.msra.mxu0 0.0
    %2195 = vmatprep.subr.mxu0 0.0
    %2196 = vmatpush1.msra.mxu0 0.0
    %2197 = vmatprep.subr.mxu0 0.0
    %2198 = vmatpush1.msra.mxu0 0.0
    %2199 = vmatprep.subr.mxu0 0.0
    %2200 = vmatpush1.msra.mxu0 0.0
    %2201 = vmatprep.subr.mxu0 0.0
    %2202 = vmatpush1.msra.mxu0 0.0
    %2203 = vmatprep.subr.mxu0 0.0
    %2204 = vmatpush1.msra.mxu0 0.0
    %2205 = vmatprep.subr.mxu0 0.0
    %2206 = vmatpush1.msra.mxu0 0.0
    %2207 = vmatprep.subr.mxu0 0.0
    %2208 = vmatpush1.msra.mxu0 0.0
    %2209 = vmatprep.subr.mxu0 0.0
    %2210 = vmatpush1.msra.mxu0 0.0
    %2211 = vmatprep.subr.mxu0 0.0
    %2212 = vmatpush1.msra.mxu0 0.0
    %2213 = vmatprep.subr.mxu0 0.0
    %2214 = vmatpush1.msra.mxu0 0.0
    %2215 = vmatprep.subr.mxu0 0.0
    %2216 = vmatpush1.msra.mxu0 0.0
    %2217 = vmatprep.subr.mxu0 0.0
    %2218 = vmatpush1.msra.mxu0 0.0
    %2219 = vmatprep.subr.mxu0 0.0
    %2220 = vmatpush1.msra.mxu0 0.0
    %2221 = vmatprep.mubr.f32.mxu0 0.0
    %2222 = vmatmul.mubr.f32.gmra.mrb[0].mxu0 %v2155
    %v2223 = vpop.f32.mrb[0].mxu0
    %v2224 = vadd.f32 %v2149, %v2223
    %v2225 = vpop.f32.mrb[0].mxu0
    %2226 = vdwg.mxu0
    %v2227 = vadd.f32 %v2224, %v331
    %v2228 = vxor.u32 %v2227, 2147483648
    %v2229 = vmul.f32 %v2228, 1.442695
    %v2230 = vpow.pop %v2229
    %v2231 = vadd.f32 %v2230, 1.0
    %v2232 = vrcp.pop %v2231
    %v2233 = vmul.f32 1.0, %v2232
    %v2234 = vmul.f32 %v2233, 2.0
    %v2235 = vsub.f32 %v2234, 1.0
    %v2236 = vmul.f32 %v2233, %v1974
    %2238 = vrot.lane.b32.xlu0 %v2235, 64
    %v2239 = vpop.permute.xlu0 %2238
    %v2241 = vmul.f32 %v2233, %v2239
    %2243 = vrot.lane.b32.xlu0 %v2241, 32
    %v2244 = vpop.permute.xlu0 %2243
    %v2246 = vadd.f32 %v2236, %v2244
    %v2247 = vtanh.pop %v2246
    %2249 = vrot.lane.b32.xlu0 %v2247, 64
    %v2250 = vpop.permute.xlu0 %2249
    %v2252 = vmul.f32 %v2233, %v2250
    %2253 = vmatprep.subr.mxu0 0.0
    %2254 = vmatpush1.msra.mxu0 %v314
    %2255 = vmatprep.subr.mxu0 0.0
    %2256 = vmatpush1.msra.mxu0 %v315
    %2257 = vmatprep.subr.mxu0 0.0
    %2258 = vmatpush1.msra.mxu0 %v316
    %2259 = vmatprep.subr.mxu0 0.0
    %2260 = vmatpush1.msra.mxu0 %v317
    %2261 = vmatprep.subr.mxu0 0.0
    %2262 = vmatpush1.msra.mxu0 0.0
    %2263 = vmatprep.subr.mxu0 0.0
    %2264 = vmatpush1.msra.mxu0 0.0
    %2265 = vmatprep.subr.mxu0 0.0
    %2266 = vmatpush1.msra.mxu0 0.0
    %2267 = vmatprep.subr.mxu0 0.0
    %2268 = vmatpush1.msra.mxu0 0.0
    %2269 = vmatprep.subr.mxu0 0.0
    %2270 = vmatpush1.msra.mxu0 0.0
    %2271 = vmatprep.subr.mxu0 0.0
    %2272 = vmatpush1.msra.mxu0 0.0
    %2273 = vmatprep.subr.mxu0 0.0
    %2274 = vmatpush1.msra.mxu0 0.0
    %2275 = vmatprep.subr.mxu0 0.0
    %2276 = vmatpush1.msra.mxu0 0.0
    %2277 = vmatprep.subr.mxu0 0.0
    %2278 = vmatpush1.msra.mxu0 0.0
    %2279 = vmatprep.subr.mxu0 0.0
    %2280 = vmatpush1.msra.mxu0 0.0
    %2281 = vmatprep.subr.mxu0 0.0
    %2282 = vmatpush1.msra.mxu0 0.0
    %2283 = vmatprep.subr.mxu0 0.0
    %2284 = vmatpush1.msra.mxu0 0.0
    %2285 = vmatprep.subr.mxu0 0.0
    %2286 = vmatpush1.msra.mxu0 0.0
    %2287 = vmatprep.subr.mxu0 0.0
    %2288 = vmatpush1.msra.mxu0 0.0
    %2289 = vmatprep.subr.mxu0 0.0
    %2290 = vmatpush1.msra.mxu0 0.0
    %2291 = vmatprep.subr.mxu0 0.0
    %2292 = vmatpush1.msra.mxu0 0.0
    %2293 = vmatprep.subr.mxu0 0.0
    %2294 = vmatpush1.msra.mxu0 0.0
    %2295 = vmatprep.subr.mxu0 0.0
    %2296 = vmatpush1.msra.mxu0 0.0
    %2297 = vmatprep.subr.mxu0 0.0
    %2298 = vmatpush1.msra.mxu0 0.0
    %2299 = vmatprep.subr.mxu0 0.0
    %2300 = vmatpush1.msra.mxu0 0.0
    %2301 = vmatprep.subr.mxu0 0.0
    %2302 = vmatpush1.msra.mxu0 0.0
    %2303 = vmatprep.subr.mxu0 0.0
    %2304 = vmatpush1.msra.mxu0 0.0
    %2305 = vmatprep.subr.mxu0 0.0
    %2306 = vmatpush1.msra.mxu0 0.0
    %2307 = vmatprep.subr.mxu0 0.0
    %2308 = vmatpush1.msra.mxu0 0.0
    %2309 = vmatprep.subr.mxu0 0.0
    %2310 = vmatpush1.msra.mxu0 0.0
    %2311 = vmatprep.subr.mxu0 0.0
    %2312 = vmatpush1.msra.mxu0 0.0
    %2313 = vmatprep.subr.mxu0 0.0
    %2314 = vmatpush1.msra.mxu0 0.0
    %2315 = vmatprep.subr.mxu0 0.0
    %2316 = vmatpush1.msra.mxu0 0.0
    %2317 = vmatprep.mubr.f32.mxu0 0.0
    %2318 = vmatmul.mubr.f32.gmra.mrb[0].mxu0 %v2155
    %v2319 = vpop.f32.mrb[0].mxu0
    %v2320 = vadd.f32 0.0, %v2319
    %v2321 = vpop.f32.mrb[0].mxu0
    %2322 = vdwg.mxu0
    %v2323 = vadd.f32 %v311, %v2320
    %v2324 = vxor.u32 %v2323, 2147483648
    %v2325 = vmul.f32 %v2324, 1.442695
    %v2326 = vpow.pop %v2325
    %v2327 = vadd.f32 %v2326, 1.0
    %v2328 = vrcp.pop %v2327
    %v2329 = vmul.f32 1.0, %v2328
    %v2330 = vmul.f32 %v2329, 2.0
    %v2331 = vsub.f32 %v2330, 1.0
    %v2332 = vmul.f32 %v2329, %v2070
    %2334 = vrot.lane.b32.xlu0 %v2331, 64
    %v2335 = vpop.permute.xlu0 %2334
    %v2337 = vmul.f32 %v2329, %v2335
    %2339 = vrot.lane.b32.xlu0 %v2337, 32
    %v2340 = vpop.permute.xlu0 %2339
    %v2342 = vadd.f32 %v2332, %v2340
    %v2343 = vtanh.pop %v2342
    %2345 = vrot.lane.b32.xlu0 %v2343, 64
    %v2346 = vpop.permute.xlu0 %2345
    %v2348 = vmul.f32 %v2329, %v2346
    %2350 = vrot.lane.b32.xlu0 %v2252, 32
    %v2351 = vpop.permute.xlu0 %2350
    %v2352 = vsel %vm339, %v2351, 0
    %2354 = vmatprep.subr.mxu0 0.0
    %2355 = vmatpush1.msra.mxu0 %v322
    %2356 = vmatprep.subr.mxu0 0.0
    %2357 = vmatpush1.msra.mxu0 %v323
    %2358 = vmatprep.subr.mxu0 0.0
    %2359 = vmatpush1.msra.mxu0 %v324
    %2360 = vmatprep.subr.mxu0 0.0
    %2361 = vmatpush1.msra.mxu0 %v325
    %2362 = vmatprep.subr.mxu0 0.0
    %2363 = vmatpush1.msra.mxu0 0.0
    %2364 = vmatprep.subr.mxu0 0.0
    %2365 = vmatpush1.msra.mxu0 0.0
    %2366 = vmatprep.subr.mxu0 0.0
    %2367 = vmatpush1.msra.mxu0 0.0
    %2368 = vmatprep.subr.mxu0 0.0
    %2369 = vmatpush1.msra.mxu0 0.0
    %2370 = vmatprep.subr.mxu0 0.0
    %2371 = vmatpush1.msra.mxu0 0.0
    %2372 = vmatprep.subr.mxu0 0.0
    %2373 = vmatpush1.msra.mxu0 0.0
    %2374 = vmatprep.subr.mxu0 0.0
    %2375 = vmatpush1.msra.mxu0 0.0
    %2376 = vmatprep.subr.mxu0 0.0
    %2377 = vmatpush1.msra.mxu0 0.0
    %2378 = vmatprep.subr.mxu0 0.0
    %2379 = vmatpush1.msra.mxu0 0.0
    %2380 = vmatprep.subr.mxu0 0.0
    %2381 = vmatpush1.msra.mxu0 0.0
    %2382 = vmatprep.subr.mxu0 0.0
    %2383 = vmatpush1.msra.mxu0 0.0
    %2384 = vmatprep.subr.mxu0 0.0
    %2385 = vmatpush1.msra.mxu0 0.0
    %2386 = vmatprep.subr.mxu0 0.0
    %2387 = vmatpush1.msra.mxu0 0.0
    %2388 = vmatprep.subr.mxu0 0.0
    %2389 = vmatpush1.msra.mxu0 0.0
    %2390 = vmatprep.subr.mxu0 0.0
    %2391 = vmatpush1.msra.mxu0 0.0
    %2392 = vmatprep.subr.mxu0 0.0
    %2393 = vmatpush1.msra.mxu0 0.0
    %2394 = vmatprep.subr.mxu0 0.0
    %2395 = vmatpush1.msra.mxu0 0.0
    %2396 = vmatprep.subr.mxu0 0.0
    %2397 = vmatpush1.msra.mxu0 0.0
    %2398 = vmatprep.subr.mxu0 0.0
    %2399 = vmatpush1.msra.mxu0 0.0
    %2400 = vmatprep.subr.mxu0 0.0
    %2401 = vmatpush1.msra.mxu0 0.0
    %2402 = vmatprep.subr.mxu0 0.0
    %2403 = vmatpush1.msra.mxu0 0.0
    %2404 = vmatprep.subr.mxu0 0.0
    %2405 = vmatpush1.msra.mxu0 0.0
    %2406 = vmatprep.subr.mxu0 0.0
    %2407 = vmatpush1.msra.mxu0 0.0
    %2408 = vmatprep.subr.mxu0 0.0
    %2409 = vmatpush1.msra.mxu0 0.0
    %2410 = vmatprep.subr.mxu0 0.0
    %2411 = vmatpush1.msra.mxu0 0.0
    %2412 = vmatprep.subr.mxu0 0.0
    %2413 = vmatpush1.msra.mxu0 0.0
    %2414 = vmatprep.subr.mxu0 0.0
    %2415 = vmatpush1.msra.mxu0 0.0
    %2416 = vmatprep.subr.mxu0 0.0
    %2417 = vmatpush1.msra.mxu0 0.0
    %2418 = vmatprep.mubr.f32.mxu0 0.0
    %2419 = vmatmul.mubr.f32.gmra.mrb[0].mxu0 %v2352
    %v2420 = vpop.f32.mrb[0].mxu0
    %v2421 = vadd.f32 0.0, %v2420
    %v2422 = vpop.f32.mrb[0].mxu0
    %2423 = vdwg.mxu0
    %2425 = vrot.lane.b32.xlu0 %v2348, 32
    %v2426 = vpop.permute.xlu0 %2425
    %v2427 = vsel %vm339, %v2426, 0
    %2429 = vmatprep.subr.mxu0 0.0
    %2430 = vmatpush1.msra.mxu0 %v318
    %2431 = vmatprep.subr.mxu0 0.0
    %2432 = vmatpush1.msra.mxu0 %v319
    %2433 = vmatprep.subr.mxu0 0.0
    %2434 = vmatpush1.msra.mxu0 %v320
    %2435 = vmatprep.subr.mxu0 0.0
    %2436 = vmatpush1.msra.mxu0 %v321
    %2437 = vmatprep.subr.mxu0 0.0
    %2438 = vmatpush1.msra.mxu0 0.0
    %2439 = vmatprep.subr.mxu0 0.0
    %2440 = vmatpush1.msra.mxu0 0.0
    %2441 = vmatprep.subr.mxu0 0.0
    %2442 = vmatpush1.msra.mxu0 0.0
    %2443 = vmatprep.subr.mxu0 0.0
    %2444 = vmatpush1.msra.mxu0 0.0
    %2445 = vmatprep.subr.mxu0 0.0
    %2446 = vmatpush1.msra.mxu0 0.0
    %2447 = vmatprep.subr.mxu0 0.0
    %2448 = vmatpush1.msra.mxu0 0.0
    %2449 = vmatprep.subr.mxu0 0.0
    %2450 = vmatpush1.msra.mxu0 0.0
    %2451 = vmatprep.subr.mxu0 0.0
    %2452 = vmatpush1.msra.mxu0 0.0
    %2453 = vmatprep.subr.mxu0 0.0
    %2454 = vmatpush1.msra.mxu0 0.0
    %2455 = vmatprep.subr.mxu0 0.0
    %2456 = vmatpush1.msra.mxu0 0.0
    %2457 = vmatprep.subr.mxu0 0.0
    %2458 = vmatpush1.msra.mxu0 0.0
    %2459 = vmatprep.subr.mxu0 0.0
    %2460 = vmatpush1.msra.mxu0 0.0
    %2461 = vmatprep.subr.mxu0 0.0
    %2462 = vmatpush1.msra.mxu0 0.0
    %2463 = vmatprep.subr.mxu0 0.0
    %2464 = vmatpush1.msra.mxu0 0.0
    %2465 = vmatprep.subr.mxu0 0.0
    %2466 = vmatpush1.msra.mxu0 0.0
    %2467 = vmatprep.subr.mxu0 0.0
    %2468 = vmatpush1.msra.mxu0 0.0
    %2469 = vmatprep.subr.mxu0 0.0
    %2470 = vmatpush1.msra.mxu0 0.0
    %2471 = vmatprep.subr.mxu0 0.0
    %2472 = vmatpush1.msra.mxu0 0.0
    %2473 = vmatprep.subr.mxu0 0.0
    %2474 = vmatpush1.msra.mxu0 0.0
    %2475 = vmatprep.subr.mxu0 0.0
    %2476 = vmatpush1.msra.mxu0 0.0
    %2477 = vmatprep.subr.mxu0 0.0
    %2478 = vmatpush1.msra.mxu0 0.0
    %2479 = vmatprep.subr.mxu0 0.0
    %2480 = vmatpush1.msra.mxu0 0.0
    %2481 = vmatprep.subr.mxu0 0.0
    %2482 = vmatpush1.msra.mxu0 0.0
    %2483 = vmatprep.subr.mxu0 0.0
    %2484 = vmatpush1.msra.mxu0 0.0
    %2485 = vmatprep.subr.mxu0 0.0
    %2486 = vmatpush1.msra.mxu0 0.0
    %2487 = vmatprep.subr.mxu0 0.0
    %2488 = vmatpush1.msra.mxu0 0.0
    %2489 = vmatprep.subr.mxu0 0.0
    %2490 = vmatpush1.msra.mxu0 0.0
    %2491 = vmatprep.subr.mxu0 0.0
    %2492 = vmatpush1.msra.mxu0 0.0
    %2493 = vmatprep.mubr.f32.mxu0 0.0
    %2494 = vmatmul.mubr.f32.gmra.mrb[0].mxu0 %v2427
    %v2495 = vpop.f32.mrb[0].mxu0
    %v2496 = vadd.f32 %v2421, %v2495
    %v2497 = vpop.f32.mrb[0].mxu0
    %2498 = vdwg.mxu0
    %v2499 = vadd.f32 %v2496, %v331
    %v2500 = vxor.u32 %v2499, 2147483648
    %v2501 = vmul.f32 %v2500, 1.442695
    %v2502 = vpow.pop %v2501
    %v2503 = vadd.f32 %v2502, 1.0
    %v2504 = vrcp.pop %v2503
    %v2505 = vmul.f32 1.0, %v2504
    %v2506 = vmul.f32 %v2505, 2.0
    %v2507 = vsub.f32 %v2506, 1.0
    %v2508 = vmul.f32 %v2505, %v2246
    %2510 = vrot.lane.b32.xlu0 %v2507, 64
    %v2511 = vpop.permute.xlu0 %2510
    %v2513 = vmul.f32 %v2505, %v2511
    %2515 = vrot.lane.b32.xlu0 %v2513, 32
    %v2516 = vpop.permute.xlu0 %2515
    %v2518 = vadd.f32 %v2508, %v2516
    %v2519 = vtanh.pop %v2518
    %2521 = vrot.lane.b32.xlu0 %v2519, 64
    %v2522 = vpop.permute.xlu0 %2521
    %v2524 = vmul.f32 %v2505, %v2522
    %v2525 = vld [vmem:[%s9] sm:$0xff]
    %v2526 = vld [vmem:[%s9 + $0x8] sm:$0xff]
    %v2527 = vld [vmem:[%s9 + $0x10] sm:$0xff]
    %v2528 = vld [vmem:[%s9 + $0x18] sm:$0xff]
    %v2529 = vld [vmem:[%s10] sm:$0x1]
    %v2531 = vlaneseq
    %v2532 = vshrl.u32 %v2531, 7
    %v2533 = vsub.s32 0, %v2532
    %v2534 = vrot.slane %v2529, %v2533
    %2537 = vrot.lane.b32.xlu0 %v2524, 32
    %v2538 = vpop.permute.xlu0 %2537
    %v2539 = vsel %vm339, %v2538, 0
    %2541 = vmatprep.subr.mxu0 0.0
    %2542 = vmatpush1.msra.mxu0 %v2525
    %2543 = vmatprep.subr.mxu0 0.0
    %2544 = vmatpush1.msra.mxu0 %v2526
    %2545 = vmatprep.subr.mxu0 0.0
    %2546 = vmatpush1.msra.mxu0 %v2527
    %2547 = vmatprep.subr.mxu0 0.0
    %2548 = vmatpush1.msra.mxu0 %v2528
    %2549 = vmatprep.subr.mxu0 0.0
    %2550 = vmatpush1.msra.mxu0 0.0
    %2551 = vmatprep.subr.mxu0 0.0
    %2552 = vmatpush1.msra.mxu0 0.0
    %2553 = vmatprep.subr.mxu0 0.0
    %2554 = vmatpush1.msra.mxu0 0.0
    %2555 = vmatprep.subr.mxu0 0.0
    %2556 = vmatpush1.msra.mxu0 0.0
    %2557 = vmatprep.subr.mxu0 0.0
    %2558 = vmatpush1.msra.mxu0 0.0
    %2559 = vmatprep.subr.mxu0 0.0
    %2560 = vmatpush1.msra.mxu0 0.0
    %2561 = vmatprep.subr.mxu0 0.0
    %2562 = vmatpush1.msra.mxu0 0.0
    %2563 = vmatprep.subr.mxu0 0.0
    %2564 = vmatpush1.msra.mxu0 0.0
    %2565 = vmatprep.subr.mxu0 0.0
    %2566 = vmatpush1.msra.mxu0 0.0
    %2567 = vmatprep.subr.mxu0 0.0
    %2568 = vmatpush1.msra.mxu0 0.0
    %2569 = vmatprep.subr.mxu0 0.0
    %2570 = vmatpush1.msra.mxu0 0.0
    %2571 = vmatprep.subr.mxu0 0.0
    %2572 = vmatpush1.msra.mxu0 0.0
    %2573 = vmatprep.subr.mxu0 0.0
    %2574 = vmatpush1.msra.mxu0 0.0
    %2575 = vmatprep.subr.mxu0 0.0
    %2576 = vmatpush1.msra.mxu0 0.0
    %2577 = vmatprep.subr.mxu0 0.0
    %2578 = vmatpush1.msra.mxu0 0.0
    %2579 = vmatprep.subr.mxu0 0.0
    %2580 = vmatpush1.msra.mxu0 0.0
    %2581 = vmatprep.subr.mxu0 0.0
    %2582 = vmatpush1.msra.mxu0 0.0
    %2583 = vmatprep.subr.mxu0 0.0
    %2584 = vmatpush1.msra.mxu0 0.0
    %2585 = vmatprep.subr.mxu0 0.0
    %2586 = vmatpush1.msra.mxu0 0.0
    %2587 = vmatprep.subr.mxu0 0.0
    %2588 = vmatpush1.msra.mxu0 0.0
    %2589 = vmatprep.subr.mxu0 0.0
    %2590 = vmatpush1.msra.mxu0 0.0
    %2591 = vmatprep.subr.mxu0 0.0
    %2592 = vmatpush1.msra.mxu0 0.0
    %2593 = vmatprep.subr.mxu0 0.0
    %2594 = vmatpush1.msra.mxu0 0.0
    %2595 = vmatprep.subr.mxu0 0.0
    %2596 = vmatpush1.msra.mxu0 0.0
    %2597 = vmatprep.subr.mxu0 0.0
    %2598 = vmatpush1.msra.mxu0 0.0
    %2599 = vmatprep.subr.mxu0 0.0
    %2600 = vmatpush1.msra.mxu0 0.0
    %2601 = vmatprep.subr.mxu0 0.0
    %2602 = vmatpush1.msra.mxu0 0.0
    %2603 = vmatprep.subr.mxu0 0.0
    %2604 = vmatpush1.msra.mxu0 0.0
    %2605 = vmatprep.mubr.f32.mxu0 0.0
    %2606 = vmatmul.mubr.f32.gmra.mrb[0].mxu0 %v720
    %v2607 = vpop.f32.mrb[0].mxu0
    %v2608 = vadd.f32 %v2534, %v2607
    %v2609 = vpop.f32.mrb[0].mxu0
    %2610 = vmatprep.mubr.f32.mxu0 0.0
    %2611 = vmatmul.mubr.f32.gmra.mrb[0].mxu0 %v992
    %v2612 = vpop.f32.mrb[0].mxu0
    %v2613 = vadd.f32 %v2534, %v2612
    %v2614 = vpop.f32.mrb[0].mxu0
    %2615 = vmatprep.mubr.f32.mxu0 0.0
    %2616 = vmatmul.mubr.f32.gmra.mrb[0].mxu0 %v1264
    %v2617 = vpop.f32.mrb[0].mxu0
    %v2618 = vadd.f32 %v2534, %v2617
    %v2619 = vpop.f32.mrb[0].mxu0
    %2620 = vmatprep.mubr.f32.mxu0 0.0
    %2621 = vmatmul.mubr.f32.gmra.mrb[0].mxu0 %v1536
    %v2622 = vpop.f32.mrb[0].mxu0
    %v2623 = vadd.f32 %v2534, %v2622
    %v2624 = vpop.f32.mrb[0].mxu0
    %2625 = vmatprep.mubr.f32.mxu0 0.0
    %2626 = vmatmul.mubr.f32.gmra.mrb[0].mxu0 %v1808
    %v2627 = vpop.f32.mrb[0].mxu0
    %v2628 = vadd.f32 %v2534, %v2627
    %v2629 = vpop.f32.mrb[0].mxu0
    %2630 = vmatprep.mubr.f32.mxu0 0.0
    %2631 = vmatmul.mubr.f32.gmra.mrb[0].mxu0 %v2080
    %v2632 = vpop.f32.mrb[0].mxu0
    %v2633 = vadd.f32 %v2534, %v2632
    %v2634 = vpop.f32.mrb[0].mxu0
    %2635 = vmatprep.mubr.f32.mxu0 0.0
    %2636 = vmatmul.mubr.f32.gmra.mrb[0].mxu0 %v2352
    %v2637 = vpop.f32.mrb[0].mxu0
    %v2638 = vadd.f32 %v2534, %v2637
    %v2639 = vpop.f32.mrb[0].mxu0
    %2640 = vmatprep.mubr.f32.mxu0 0.0
    %2641 = vmatmul.mubr.f32.gmra.mrb[0].mxu0 %v2539
    %v2642 = vpop.f32.mrb[0].mxu0
    %v2643 = vadd.f32 %v2534, %v2642
    %v2644 = vpop.f32.mrb[0].mxu0
    %2645 = vdwg.mxu0
    %2646 = vst [vmem:[#allocation11] sm:$0xff] %v2608
    %2647 = vst [vmem:[#allocation11 + $0x8] sm:$0xff] %v2613
    %2648 = vst [vmem:[#allocation11 + $0x10] sm:$0xff] %v2618
    %2649 = vst [vmem:[#allocation11 + $0x18] sm:$0xff] %v2623
    %2650 = vst [vmem:[#allocation11 + $0x20] sm:$0xff] %v2628
    %2651 = vst [vmem:[#allocation11 + $0x28] sm:$0xff] %v2633
    %2652 = vst [vmem:[#allocation11 + $0x30] sm:$0xff] %v2638
    %2653 = vst [vmem:[#allocation11 + $0x38] sm:$0xff] %v2643
    %2655 = vst.msk [vmem:[#allocation12] sm:$0xff] %vm339, %v2426
    %2657 = vrot.lane.b32.xlu0 %v2342, 96
    %v2658 = vpop.permute.xlu0 %2657
    %2660 = vst.msk [vmem:[#allocation14] sm:$0xff] %vm339, %v2658
    %s2662 = scalar_lea.vmem [#allocation12], 8
    %2663 = vst.msk [vmem:[%s2662] sm:$0xff] %vm339, %v2538
    %2665 = vrot.lane.b32.xlu0 %v2518, 96
    %v2666 = vpop.permute.xlu0 %2665
    %s2668 = scalar_lea.vmem [#allocation14], 8
    %2669 = vst.msk [vmem:[%s2668] sm:$0xff] %vm339, %v2666
    // Predicated region
    $region66: #{tpu_custom_call.1} parent=1 // pred_check
      _
    $region67: #{tpu_custom_call.1} parent=1 // pred_check_branch
      %2671 = sbr.rel (0) target = $region69
    $region68: #{tpu_custom_call.1} parent=1 // pred_region
      %s2673 = ssub.s32 1024, 1024
      %2674 = vsyncadd [#allocation4], %s2673
      %s2675 = sshll.u32 [#allocation11], 4
      %s2676 = int_to_ptr.vmem [resolvable:$true] %s2675
      %2681 = dma.vmem_to_hbm [thread:$0]  %s2676, 1024, %s11, [#allocation4], 128, 128, 8
    $region69: #{tpu_custom_call.1} parent=1 // pred_fallthru
      _
    // Predicated region
    $region70: #{tpu_custom_call.1} parent=1 // pred_check
      _
    $region71: #{tpu_custom_call.1} parent=1 // pred_check_branch
      %2683 = sbr.rel (0) target = $region73
    $region72: #{tpu_custom_call.1} parent=1 // pred_region
      %s2685 = ssub.s32 256, 256
      %2686 = vsyncadd [#allocation13], %s2685
      %s2687 = sshll.u32 [#allocation12], 4
      %s2688 = int_to_ptr.vmem [resolvable:$true] %s2687
      %2693 = dma.vmem_to_hbm [thread:$0]  %s2688, 256, %s12, [#allocation13], 128, 128, 8
    $region73: #{tpu_custom_call.1} parent=1 // pred_fallthru
      _
    // Predicated region
    $region74: #{tpu_custom_call.1} parent=1 // pred_check
      _
    $region75: #{tpu_custom_call.1} parent=1 // pred_check_branch
      %2695 = sbr.rel (0) target = $region77
    $region76: #{tpu_custom_call.1} parent=1 // pred_region
      %s2697 = ssub.s32 256, 256
      %2698 = vsyncadd [#allocation13], %s2697
      %s2699 = sshll.u32 [#allocation14], 4
      %s2700 = int_to_ptr.vmem [resolvable:$true] %s2699
      %2705 = dma.vmem_to_hbm [thread:$0]  %s2700, 256, %s13, [#allocation13], 128, 128, 8
    $region77: #{tpu_custom_call.1} parent=1 // pred_fallthru
      _
    // Predicated region
    $region78: #{tpu_custom_call.1} parent=1 // pred_check
      _
    $region79: #{tpu_custom_call.1} parent=1 // pred_check_branch
      %2707 = sbr.rel (0) target = $region81
    $region80: #{tpu_custom_call.1} parent=1 // pred_region
      %2708 = dma.done [#allocation4], 1024
    $region81: #{tpu_custom_call.1} parent=1 // pred_fallthru
      _
    // Predicated region
    $region82: #{tpu_custom_call.1} parent=1 // pred_check
      _
    $region83: #{tpu_custom_call.1} parent=1 // pred_check_branch
      %2710 = sbr.rel (0) target = $region85
    $region84: #{tpu_custom_call.1} parent=1 // pred_region
      %2711 = dma.done [#allocation13], 256
    $region85: #{tpu_custom_call.1} parent=1 // pred_fallthru
      _
    // Predicated region
    $region86: #{tpu_custom_call.1} parent=1 // pred_check
      _
    $region87: #{tpu_custom_call.1} parent=1 // pred_check_branch
      %2713 = sbr.rel (0) target = $region89
    $region88: #{tpu_custom_call.1} parent=1 // pred_region
      %2714 = dma.done [#allocation13], 256
    $region89: #{tpu_custom_call.1} parent=1 // pred_fallthru
      _
    %2715 = vsyncpa [#allocation3], 1
    %2716 = vsyncpa [#allocation6], 1
    %2717 = vsyncpa [#allocation9], 1
    %2718 = vsyncpa [#allocation4], 1
    %2719 = vsyncpa [#allocation13], 1

</llo_original>
